<compile_context>
chip_gen: v7x
topology: tpu7x:2x2x1
jax: 0.10.0
libtpu: 0.0.40
codegen_flags: <defaults>
</compile_context>

<pallas_src>
import functools

import jax
import jax.numpy as jnp
from jax.experimental import pallas as pl
from jax.experimental.pallas import tpu as pltpu


_VMEM_LIMIT_BYTES = 48 * 1024 * 1024   # > 16/32 MiB scoped defaults, < 64 MiB (v7x)


def _round_up(x, m):
    return ((x + m - 1) // m) * m


def _compiler_params():
    return pltpu.CompilerParams(
        dimension_semantics=("parallel",),
        vmem_limit_bytes=_VMEM_LIMIT_BYTES,
    )


def _silu_f32(acc):
    """SiLU on the f32 accumulator; exp + approx reciprocal both use the EUP
    slot and the form is overflow-safe for any acc."""
    z = jnp.exp(-jnp.abs(acc))
    r = pl.reciprocal(1.0 + z, approx=True)
    sig = jnp.where(acc >= 0.0, r, z * r)
    return acc * sig


# ----------------------------------------------------------------------------
# Pallas kernels
# ----------------------------------------------------------------------------
def _mm_bias_silu_kernel(x_ref, w_ref, b_ref, o_ref):
    acc = jnp.dot(x_ref[...], w_ref[...], preferred_element_type=jnp.float32)
    acc = acc + b_ref[...]
    o_ref[...] = _silu_f32(acc).astype(o_ref.dtype)


def _mm2_bias_silu_kernel(xa_ref, xb_ref, wa_ref, wb_ref, b_ref, o_ref):
    # Fused cat(xa, xb) @ W  ==  xa @ Wa + xb @ Wb  (concat never materialized).
    acc = jnp.dot(xa_ref[...], wa_ref[...], preferred_element_type=jnp.float32)
    acc = acc + jnp.dot(xb_ref[...], wb_ref[...], preferred_element_type=jnp.float32)
    acc = acc + b_ref[...]
    o_ref[...] = _silu_f32(acc).astype(o_ref.dtype)


def _make_conv3x3_kernel(W, HW, with_residual):
    """3x3 conv (stride 1, pad 1): horizontal taps are pre-packed into the
    channel dim; the 3 vertical taps are row-shifted slices of an (H+2)*W halo
    block, accumulated into an f32 register accumulator on the MXU."""
    def _acc(xp_ref, w_ref, b_ref):
        acc = jnp.dot(xp_ref[0, 0:HW, :], w_ref[0],
                      preferred_element_type=jnp.float32)
        acc = acc + jnp.dot(xp_ref[0, W:W + HW, :], w_ref[1],
                            preferred_element_type=jnp.float32)
        acc = acc + jnp.dot(xp_ref[0, 2 * W:2 * W + HW, :], w_ref[2],
                            preferred_element_type=jnp.float32)
        return acc + b_ref[...]

    if with_residual:
        def kernel(xp_ref, w_ref, b_ref, r_ref, o_ref):
            y = _silu_f32(_acc(xp_ref, w_ref, b_ref))
            y = y + r_ref[0].astype(jnp.float32)          # Bottleneck shortcut
            o_ref[0] = y.astype(o_ref.dtype)
    else:
        def kernel(xp_ref, w_ref, b_ref, o_ref):
            y = _silu_f32(_acc(xp_ref, w_ref, b_ref))
            o_ref[0] = y.astype(o_ref.dtype)
    return kernel


# ----------------------------------------------------------------------------
# Kernel wrappers
# ----------------------------------------------------------------------------
def conv_bn_silu(x2d, w2d, b, out_dtype=jnp.bfloat16, tm=256):
    """1x1 conv + BN + SiLU.  x2d: (M, K) rows = spatial positions; w2d: (K, C)."""
    M, K = x2d.shape
    C = w2d.shape[1]
    tm = min(tm, _round_up(M, 8))
    Mp = _round_up(M, tm)

    xb = x2d.astype(jnp.bfloat16)
    if Mp != M:
        xb = jnp.pad(xb, ((0, Mp - M), (0, 0)))
    wb = w2d.astype(jnp.bfloat16)
    b2d = b.reshape(1, C).astype(jnp.float32)

    cost = pl.CostEstimate(
        flops=2 * Mp * K * C,
        transcendentals=Mp * C,
        bytes_accessed=2 * Mp * K + 2 * K * C + 4 * C
        + Mp * C * jnp.dtype(out_dtype).itemsize)

    out = pl.pallas_call(
        _mm_bias_silu_kernel,
        out_shape=jax.ShapeDtypeStruct((Mp, C), out_dtype),
        grid=(Mp // tm,),
        in_specs=[pl.BlockSpec((tm, K), lambda i: (i, 0)),
                  pl.BlockSpec((K, C), lambda i: (0, 0)),
                  pl.BlockSpec((1, C), lambda i: (0, 0))],
        out_specs=pl.BlockSpec((tm, C), lambda i: (i, 0)),
        compiler_params=_compiler_params(),
        cost_estimate=cost,
    )(xb, wb, b2d)
    return out[:M] if Mp != M else out


def concat_conv_bn_silu(xa, xb, wa, wb, b, out_dtype=jnp.float32, tm=256):
    """Fused cat((xa, xb), channel) -> 1x1 conv + BN + SiLU."""
    M, Ka = xa.shape
    Kb = xb.shape[1]
    C = wa.shape[1]
    tm = min(tm, _round_up(M, 8))
    Mp = _round_up(M, tm)

    xa_ = xa.astype(jnp.bfloat16)
    xb_ = xb.astype(jnp.bfloat16)
    if Mp != M:
        pad = ((0, Mp - M), (0, 0))
        xa_ = jnp.pad(xa_, pad)
        xb_ = jnp.pad(xb_, pad)
    wa_ = wa.astype(jnp.bfloat16)
    wb_ = wb.astype(jnp.bfloat16)
    b2d = b.reshape(1, C).astype(jnp.float32)

    cost = pl.CostEstimate(
        flops=2 * Mp * (Ka + Kb) * C,
        transcendentals=Mp * C,
        bytes_accessed=2 * Mp * (Ka + Kb) + 2 * (Ka + Kb) * C + 4 * C
        + Mp * C * jnp.dtype(out_dtype).itemsize)

    out = pl.pallas_call(
        _mm2_bias_silu_kernel,
        out_shape=jax.ShapeDtypeStruct((Mp, C), out_dtype),
        grid=(Mp // tm,),
        in_specs=[pl.BlockSpec((tm, Ka), lambda i: (i, 0)),
                  pl.BlockSpec((tm, Kb), lambda i: (i, 0)),
                  pl.BlockSpec((Ka, C), lambda i: (0, 0)),
                  pl.BlockSpec((Kb, C), lambda i: (0, 0)),
                  pl.BlockSpec((1, C), lambda i: (0, 0))],
        out_specs=pl.BlockSpec((tm, C), lambda i: (i, 0)),
        compiler_params=_compiler_params(),
        cost_estimate=cost,
    )(xa_, xb_, wa_, wb_, b2d)
    return out[:M] if Mp != M else out


def conv3x3_bn_silu(x2d, w9, b, N, H, W, residual=None, out_dtype=jnp.bfloat16):
    """3x3 conv (stride 1, pad 1) + BN + SiLU (+ optional shortcut), no im2col.

    x2d: (N*H*W, Cin); w9: (9*Cin, Cout) folded weight, rows ordered [kh, kw, cin];
    residual: optional (N*H*W, Cout)."""
    M, Cin = x2d.shape
    Cout = w9.shape[1]
    HW = H * W

    # Pack the 3 horizontal taps into the channel dim (3x expansion instead of
    # the 9x im2col blow-up); vertical taps handled in-kernel via the H halo.
    y4 = x2d.astype(jnp.bfloat16).reshape(N, H, W, Cin)
    yw = jnp.pad(y4, ((0, 0), (0, 0), (1, 1), (0, 0)))
    packed = jnp.concatenate([yw[:, :, k:k + W, :] for k in range(3)], axis=-1)
    packed = jnp.pad(packed, ((0, 0), (1, 1), (0, 0), (0, 0)))       # H halo rows
    packed = packed.reshape(N, (H + 2) * W, 3 * Cin)

    w3 = w9.reshape(3, 3 * Cin, Cout).astype(jnp.bfloat16)           # [kh][kw,cin]
    b2d = b.reshape(1, Cout).astype(jnp.float32)

    in_specs = [
        pl.BlockSpec((1, (H + 2) * W, 3 * Cin), lambda n: (n, 0, 0)),
        pl.BlockSpec((3, 3 * Cin, Cout), lambda n: (0, 0, 0)),
        pl.BlockSpec((1, Cout), lambda n: (0, 0)),
    ]
    args = [packed, w3, b2d]
    if residual is not None:
        in_specs.append(pl.BlockSpec((1, HW, Cout), lambda n: (n, 0, 0)))
        args.append(residual.astype(jnp.bfloat16).reshape(N, HW, Cout))

    cost = pl.CostEstimate(
        flops=2 * N * HW * 9 * Cin * Cout,
        transcendentals=N * HW * Cout,
        bytes_accessed=2 * N * (H + 2) * W * 3 * Cin + 2 * 9 * Cin * Cout + 4 * Cout
        + 3 * N * HW * Cout)

    # TODO(synk): for large H*W, tile H with an explicit halo via manual DMA;
    # currently one grid step holds a whole padded image in VMEM.
    out = pl.pallas_call(
        _make_conv3x3_kernel(W, HW, residual is not None),
        out_shape=jax.ShapeDtypeStruct((N, HW, Cout), out_dtype),
        grid=(N,),
        in_specs=in_specs,
        out_specs=pl.BlockSpec((1, HW, Cout), lambda n: (n, 0, 0)),
        compiler_params=_compiler_params(),
        cost_estimate=cost,
    )(*args)
    return out.reshape(M, Cout)


# ----------------------------------------------------------------------------
# Parameter construction (deterministic, BN folded into conv weight/bias)
# ----------------------------------------------------------------------------
def fold_bn(w, gamma, beta, mean, var, eps=1e-5):
    """w: PyTorch layout (Cout, Cin, kh, kw) -> (kh*kw*Cin, Cout) weight + (Cout,) bias."""
    scale = gamma / jnp.sqrt(var + eps)
    w_f = w * scale[:, None, None, None]
    b_f = beta - mean * scale
    cout, cin, kh, kw = w_f.shape
    w2d = jnp.transpose(w_f, (2, 3, 1, 0)).reshape(kh * kw * cin, cout)
    return w2d, b_f


def init_baseconv(key, cin, cout, ksize):
    k1, k2, k3, k4, k5 = jax.random.split(key, 5)
    w = jax.random.normal(k1, (cout, cin, ksize, ksize), jnp.float32) * 0.1
    gamma = jax.random.uniform(k2, (cout,), minval=0.5, maxval=1.5)
    beta = jax.random.normal(k3, (cout,), jnp.float32) * 0.1
    mean = jax.random.normal(k4, (cout,), jnp.float32) * 0.1
    var = jax.random.uniform(k5, (cout,), minval=0.5, maxval=1.5)
    return fold_bn(w, gamma, beta, mean, var)


def init_csp_params(key, in_channels, out_channels, n=1, expansion=0.5):
    hidden = int(out_channels * expansion)
    keys = jax.random.split(key, 3 + 2 * n)
    p = {}
    p["conv1_w"], p["conv1_b"] = init_baseconv(keys[0], in_channels, hidden, 1)
    p["conv2_w"], p["conv2_b"] = init_baseconv(keys[1], in_channels, hidden, 1)
    p["conv3_w"], p["conv3_b"] = init_baseconv(keys[2], 2 * hidden, out_channels, 1)
    bnecks = []
    for i in range(n):
        bp = {}
        # Bottleneck(hidden, hidden, shortcut, expansion=1.0): 1x1 then 3x3
        bp["c1_w"], bp["c1_b"] = init_baseconv(keys[3 + 2 * i], hidden, hidden, 1)
        bp["c2_w"], bp["c2_b"] = init_baseconv(keys[4 + 2 * i], hidden, hidden, 3)
        bnecks.append(bp)
    p["bottlenecks"] = bnecks
    return p


# ----------------------------------------------------------------------------
# CSPLayer forward
# ----------------------------------------------------------------------------
@functools.partial(jax.jit, static_argnames=("shortcut",))
def csp_layer_forward(x_nchw, params, shortcut=True):
    N, Cin, H, W = x_nchw.shape
    M = N * H * W
    x = jnp.transpose(x_nchw, (0, 2, 3, 1)).reshape(M, Cin).astype(jnp.bfloat16)

    hidden = params["conv1_w"].shape[1]

    # conv1 + conv2 fused: one pass over x, lane-dense (M, 2*hidden) output.
    w12 = jnp.concatenate([params["conv1_w"], params["conv2_w"]], axis=1)
    b12 = jnp.concatenate([params["conv1_b"], params["conv2_b"]], axis=0)
    y12 = conv_bn_silu(x, w12, b12)                      # (M, 2*hidden) bf16
    x1, x2 = y12[:, :hidden], y12[:, hidden:]

    for bp in params["bottlenecks"]:
        y = conv_bn_silu(x1, bp["c1_w"], bp["c1_b"])     # Bottleneck 1x1
        res = x1 if shortcut else None                   # use_add: shortcut and cin == cout
        x1 = conv3x3_bn_silu(y, bp["c2_w"], bp["c2_b"], N, H, W, residual=res)

    # cat(x1, x2) + conv3 fused: the concatenated tensor is never materialized.
    out = concat_conv_bn_silu(x1, x2,
                              params["conv3_w"][:hidden],
                              params["conv3_w"][hidden:],
                              params["conv3_b"],
                              out_dtype=jnp.float32)     # (M, Cout) f32
    Cout = out.shape[1]
    return jnp.transpose(out.reshape(N, H, W, Cout), (0, 3, 1, 2))


# ----------------------------------------------------------------------------
if __name__ == "__main__":
    key = jax.random.PRNGKey(0)
    k_x, k_p = jax.random.split(key)

    N, Cin, H, W = 2, 4, 16, 16
    out_channels, n_blocks = 8, 1

    x = jax.random.normal(k_x, (N, Cin, H, W), jnp.float32)
    params = init_csp_params(k_p, Cin, out_channels, n=n_blocks, expansion=0.5)

    out = csp_layer_forward(x, params, shortcut=True)
    out = jax.block_until_ready(out)
    assert out.shape == (N, out_channels, H, W), out.shape
    assert bool(jnp.all(jnp.isfinite(out)))
    print("KERNEL_OK")
</pallas_src>

<mosaic_0001>
module attributes {stable_mosaic.version = 11 : i64} {
  func.func @_mm_bias_silu_kernel(%arg0: i32, %arg1: memref<256x4xbf16, #tpu.memory_space<vmem>>, %arg2: memref<4x4xbf16, #tpu.memory_space<vmem>>, %arg3: memref<1x4xf32, #tpu.memory_space<vmem>>, %arg4: memref<256x4xbf16, #tpu.memory_space<vmem>>) attributes {dimension_semantics = [#tpu.dimension_semantics<parallel>], iteration_bounds = array<i64: 2>, scalar_prefetch = 0 : i64, scratch_operands = 0 : i64, tpu.core_type = #tpu.core_type<tc>, window_params = [{transform_indices = @transform_0, window_bounds = array<i64: 256, 4>}, {pipeline_mode = #tpu.pipeline_mode<synchronous>, transform_indices = @transform_1, window_bounds = array<i64: 4, 4>}, {pipeline_mode = #tpu.pipeline_mode<synchronous>, transform_indices = @transform_2, window_bounds = array<i64: 1, 4>}, {transform_indices = @transform_3, window_bounds = array<i64: 256, 4>}]} {
    %c0 = arith.constant 0 : index
    %c0_0 = arith.constant 0 : index
    %0 = vector.load %arg1[%c0, %c0_0] : memref<256x4xbf16, #tpu.memory_space<vmem>>, vector<256x4xbf16>
    %c0_1 = arith.constant 0 : index
    %c0_2 = arith.constant 0 : index
    %1 = vector.load %arg2[%c0_1, %c0_2] : memref<4x4xbf16, #tpu.memory_space<vmem>>, vector<4x4xbf16>
    %cst = arith.constant dense<0.000000e+00> : vector<256x4xf32>
    %2 = tpu.matmul %0, %1, %cst {dimension_numbers = #tpu.dot_dimension_numbers<[1], [0], [0], [1], [0, 0, 1, 1], [], []>} : vector<256x4xbf16>, vector<4x4xbf16>, vector<256x4xf32> -> vector<256x4xf32>
    %c0_3 = arith.constant 0 : index
    %c0_4 = arith.constant 0 : index
    %3 = vector.load %arg3[%c0_3, %c0_4] : memref<1x4xf32, #tpu.memory_space<vmem>>, vector<1x4xf32>
    %4 = vector.broadcast %3 : vector<1x4xf32> to vector<256x4xf32>
    %5 = arith.addf %2, %4 : vector<256x4xf32>
    %6 = math.absf %5 : vector<256x4xf32>
    %cst_5 = arith.constant 0.000000e+00 : f32
    %7 = vector.broadcast %cst_5 : f32 to vector<256x4xf32>
    %8 = arith.subf %7, %6 : vector<256x4xf32>
    %9 = math.exp %8 : vector<256x4xf32>
    %cst_6 = arith.constant 1.000000e+00 : f32
    %10 = vector.broadcast %cst_6 : f32 to vector<256x4xf32>
    %11 = arith.addf %10, %9 : vector<256x4xf32>
    %12 = tpu.reciprocal %11 {approx = true} : vector<256x4xf32> -> vector<256x4xf32>
    %cst_7 = arith.constant 0.000000e+00 : f32
    %13 = vector.broadcast %cst_7 : f32 to vector<256x4xf32>
    %14 = arith.cmpf oge, %5, %13 : vector<256x4xf32>
    %15 = arith.mulf %9, %12 : vector<256x4xf32>
    %16 = arith.select %14, %12, %15 : vector<256x4xi1>, vector<256x4xf32>
    %17 = arith.mulf %5, %16 : vector<256x4xf32>
    %18 = arith.truncf %17 : vector<256x4xf32> to vector<256x4xbf16>
    %c0_8 = arith.constant 0 : index
    %c0_9 = arith.constant 0 : index
    %19 = vector.load %arg4[%c0_8, %c0_9] : memref<256x4xbf16, #tpu.memory_space<vmem>>, vector<256x4xbf16>
    tpu.vector_store %arg4[%c0_8, %c0_9], %18 {strides = array<i32>} : memref<256x4xbf16, #tpu.memory_space<vmem>>, vector<256x4xbf16>,
    return
  }
  func.func @transform_0(%arg0: i32) -> (i32, i32) {
    %c0_i32 = arith.constant 0 : i32
    %c0_i32_0 = arith.constant 0 : i32
    return %arg0, %c0_i32 : i32, i32
  }
  func.func @transform_1(%arg0: i32) -> (i32, i32) {
    %c0_i32 = arith.constant 0 : i32
    %c0_i32_0 = arith.constant 0 : i32
    %c0_i32_1 = arith.constant 0 : i32
    return %c0_i32, %c0_i32_0 : i32, i32
  }
  func.func @transform_2(%arg0: i32) -> (i32, i32) {
    %c0_i32 = arith.constant 0 : i32
    %c0_i32_0 = arith.constant 0 : i32
    %c0_i32_1 = arith.constant 0 : i32
    return %c0_i32, %c0_i32_0 : i32, i32
  }
  func.func @transform_3(%arg0: i32) -> (i32, i32) {
    %c0_i32 = arith.constant 0 : i32
    %c0_i32_0 = arith.constant 0 : i32
    return %arg0, %c0_i32 : i32, i32
  }
}

module attributes {stable_mosaic.version = 11 : i64} {
  func.func @_mm_bias_silu_kernel(%arg0: i32, %arg1: memref<256x4xbf16, #tpu.memory_space<vmem>>, %arg2: memref<4x8xbf16, #tpu.memory_space<vmem>>, %arg3: memref<1x8xf32, #tpu.memory_space<vmem>>, %arg4: memref<256x8xbf16, #tpu.memory_space<vmem>>) attributes {dimension_semantics = [#tpu.dimension_semantics<parallel>], iteration_bounds = array<i64: 2>, scalar_prefetch = 0 : i64, scratch_operands = 0 : i64, tpu.core_type = #tpu.core_type<tc>, window_params = [{transform_indices = @transform_0, window_bounds = array<i64: 256, 4>}, {pipeline_mode = #tpu.pipeline_mode<synchronous>, transform_indices = @transform_1, window_bounds = array<i64: 4, 8>}, {pipeline_mode = #tpu.pipeline_mode<synchronous>, transform_indices = @transform_2, window_bounds = array<i64: 1, 8>}, {transform_indices = @transform_3, window_bounds = array<i64: 256, 8>}]} {
    %c0 = arith.constant 0 : index
    %c0_0 = arith.constant 0 : index
    %0 = vector.load %arg1[%c0, %c0_0] : memref<256x4xbf16, #tpu.memory_space<vmem>>, vector<256x4xbf16>
    %c0_1 = arith.constant 0 : index
    %c0_2 = arith.constant 0 : index
    %1 = vector.load %arg2[%c0_1, %c0_2] : memref<4x8xbf16, #tpu.memory_space<vmem>>, vector<4x8xbf16>
    %cst = arith.constant dense<0.000000e+00> : vector<256x8xf32>
    %2 = tpu.matmul %0, %1, %cst {dimension_numbers = #tpu.dot_dimension_numbers<[1], [0], [0], [1], [0, 0, 1, 1], [], []>} : vector<256x4xbf16>, vector<4x8xbf16>, vector<256x8xf32> -> vector<256x8xf32>
    %c0_3 = arith.constant 0 : index
    %c0_4 = arith.constant 0 : index
    %3 = vector.load %arg3[%c0_3, %c0_4] : memref<1x8xf32, #tpu.memory_space<vmem>>, vector<1x8xf32>
    %4 = vector.broadcast %3 : vector<1x8xf32> to vector<256x8xf32>
    %5 = arith.addf %2, %4 : vector<256x8xf32>
    %6 = math.absf %5 : vector<256x8xf32>
    %cst_5 = arith.constant 0.000000e+00 : f32
    %7 = vector.broadcast %cst_5 : f32 to vector<256x8xf32>
    %8 = arith.subf %7, %6 : vector<256x8xf32>
    %9 = math.exp %8 : vector<256x8xf32>
    %cst_6 = arith.constant 1.000000e+00 : f32
    %10 = vector.broadcast %cst_6 : f32 to vector<256x8xf32>
    %11 = arith.addf %10, %9 : vector<256x8xf32>
    %12 = tpu.reciprocal %11 {approx = true} : vector<256x8xf32> -> vector<256x8xf32>
    %cst_7 = arith.constant 0.000000e+00 : f32
    %13 = vector.broadcast %cst_7 : f32 to vector<256x8xf32>
    %14 = arith.cmpf oge, %5, %13 : vector<256x8xf32>
    %15 = arith.mulf %9, %12 : vector<256x8xf32>
    %16 = arith.select %14, %12, %15 : vector<256x8xi1>, vector<256x8xf32>
    %17 = arith.mulf %5, %16 : vector<256x8xf32>
    %18 = arith.truncf %17 : vector<256x8xf32> to vector<256x8xbf16>
    %c0_8 = arith.constant 0 : index
    %c0_9 = arith.constant 0 : index
    %19 = vector.load %arg4[%c0_8, %c0_9] : memref<256x8xbf16, #tpu.memory_space<vmem>>, vector<256x8xbf16>
    tpu.vector_store %arg4[%c0_8, %c0_9], %18 {strides = array<i32>} : memref<256x8xbf16, #tpu.memory_space<vmem>>, vector<256x8xbf16>,
    return
  }
  func.func @transform_0(%arg0: i32) -> (i32, i32) {
    %c0_i32 = arith.constant 0 : i32
    %c0_i32_0 = arith.constant 0 : i32
    return %arg0, %c0_i32 : i32, i32
  }
  func.func @transform_1(%arg0: i32) -> (i32, i32) {
    %c0_i32 = arith.constant 0 : i32
    %c0_i32_0 = arith.constant 0 : i32
    %c0_i32_1 = arith.constant 0 : i32
    return %c0_i32, %c0_i32_0 : i32, i32
  }
  func.func @transform_2(%arg0: i32) -> (i32, i32) {
    %c0_i32 = arith.constant 0 : i32
    %c0_i32_0 = arith.constant 0 : i32
    %c0_i32_1 = arith.constant 0 : i32
    return %c0_i32, %c0_i32_0 : i32, i32
  }
  func.func @transform_3(%arg0: i32) -> (i32, i32) {
    %c0_i32 = arith.constant 0 : i32
    %c0_i32_0 = arith.constant 0 : i32
    return %arg0, %c0_i32 : i32, i32
  }
}

module attributes {stable_mosaic.version = 11 : i64} {
  func.func @kernel(%arg0: i32, %arg1: memref<1x288x12xbf16, #tpu.memory_space<vmem>>, %arg2: memref<3x12x4xbf16, #tpu.memory_space<vmem>>, %arg3: memref<1x4xf32, #tpu.memory_space<vmem>>, %arg4: memref<1x256x4xbf16, #tpu.memory_space<vmem>>, %arg5: memref<1x256x4xbf16, #tpu.memory_space<vmem>>) attributes {dimension_semantics = [#tpu.dimension_semantics<parallel>], iteration_bounds = array<i64: 2>, scalar_prefetch = 0 : i64, scratch_operands = 0 : i64, tpu.core_type = #tpu.core_type<tc>, window_params = [{transform_indices = @transform_0, window_bounds = array<i64: 1, 288, 12>}, {pipeline_mode = #tpu.pipeline_mode<synchronous>, transform_indices = @transform_1, window_bounds = array<i64: 3, 12, 4>}, {pipeline_mode = #tpu.pipeline_mode<synchronous>, transform_indices = @transform_2, window_bounds = array<i64: 1, 4>}, {transform_indices = @transform_3, window_bounds = array<i64: 1, 256, 4>}, {transform_indices = @transform_4, window_bounds = array<i64: 1, 256, 4>}]} {
    %c0 = arith.constant 0 : index
    %c0_0 = arith.constant 0 : index
    %c0_1 = arith.constant 0 : index
    %0 = vector.load %arg1[%c0, %c0_0, %c0_1] : memref<1x288x12xbf16, #tpu.memory_space<vmem>>, vector<1x256x12xbf16>
    %1 = vector.shape_cast %0 : vector<1x256x12xbf16> to vector<256x12xbf16>
    %c0_2 = arith.constant 0 : index
    %c0_3 = arith.constant 0 : index
    %c0_4 = arith.constant 0 : index
    %2 = vector.load %arg2[%c0_2, %c0_3, %c0_4] : memref<3x12x4xbf16, #tpu.memory_space<vmem>>, vector<1x12x4xbf16>
    %3 = vector.shape_cast %2 : vector<1x12x4xbf16> to vector<12x4xbf16>
    %cst = arith.constant dense<0.000000e+00> : vector<256x4xf32>
    %4 = tpu.matmul %1, %3, %cst {dimension_numbers = #tpu.dot_dimension_numbers<[1], [0], [0], [1], [0, 0, 1, 1], [], []>} : vector<256x12xbf16>, vector<12x4xbf16>, vector<256x4xf32> -> vector<256x4xf32>
    %c0_5 = arith.constant 0 : index
    %c16 = arith.constant 16 : index
    %c0_6 = arith.constant 0 : index
    %5 = vector.load %arg1[%c0_5, %c16, %c0_6] : memref<1x288x12xbf16, #tpu.memory_space<vmem>>, vector<1x256x12xbf16>
    %6 = vector.shape_cast %5 : vector<1x256x12xbf16> to vector<256x12xbf16>
    %c1 = arith.constant 1 : index
    %c0_7 = arith.constant 0 : index
    %c0_8 = arith.constant 0 : index
    %7 = vector.load %arg2[%c1, %c0_7, %c0_8] : memref<3x12x4xbf16, #tpu.memory_space<vmem>>, vector<1x12x4xbf16>
    %8 = vector.shape_cast %7 : vector<1x12x4xbf16> to vector<12x4xbf16>
    %cst_9 = arith.constant dense<0.000000e+00> : vector<256x4xf32>
    %9 = tpu.matmul %6, %8, %cst_9 {dimension_numbers = #tpu.dot_dimension_numbers<[1], [0], [0], [1], [0, 0, 1, 1], [], []>} : vector<256x12xbf16>, vector<12x4xbf16>, vector<256x4xf32> -> vector<256x4xf32>
    %10 = arith.addf %4, %9 : vector<256x4xf32>
    %c0_10 = arith.constant 0 : index
    %c32 = arith.constant 32 : index
    %c0_11 = arith.constant 0 : index
    %11 = vector.load %arg1[%c0_10, %c32, %c0_11] : memref<1x288x12xbf16, #tpu.memory_space<vmem>>, vector<1x256x12xbf16>
    %12 = vector.shape_cast %11 : vector<1x256x12xbf16> to vector<256x12xbf16>
    %c2 = arith.constant 2 : index
    %c0_12 = arith.constant 0 : index
    %c0_13 = arith.constant 0 : index
    %13 = vector.load %arg2[%c2, %c0_12, %c0_13] : memref<3x12x4xbf16, #tpu.memory_space<vmem>>, vector<1x12x4xbf16>
    %14 = vector.shape_cast %13 : vector<1x12x4xbf16> to vector<12x4xbf16>
    %cst_14 = arith.constant dense<0.000000e+00> : vector<256x4xf32>
    %15 = tpu.matmul %12, %14, %cst_14 {dimension_numbers = #tpu.dot_dimension_numbers<[1], [0], [0], [1], [0, 0, 1, 1], [], []>} : vector<256x12xbf16>, vector<12x4xbf16>, vector<256x4xf32> -> vector<256x4xf32>
    %16 = arith.addf %10, %15 : vector<256x4xf32>
    %c0_15 = arith.constant 0 : index
    %c0_16 = arith.constant 0 : index
    %17 = vector.load %arg3[%c0_15, %c0_16] : memref<1x4xf32, #tpu.memory_space<vmem>>, vector<1x4xf32>
    %18 = vector.broadcast %17 : vector<1x4xf32> to vector<256x4xf32>
    %19 = arith.addf %16, %18 : vector<256x4xf32>
    %20 = math.absf %19 : vector<256x4xf32>
    %cst_17 = arith.constant 0.000000e+00 : f32
    %21 = vector.broadcast %cst_17 : f32 to vector<256x4xf32>
    %22 = arith.subf %21, %20 : vector<256x4xf32>
    %23 = math.exp %22 : vector<256x4xf32>
    %cst_18 = arith.constant 1.000000e+00 : f32
    %24 = vector.broadcast %cst_18 : f32 to vector<256x4xf32>
    %25 = arith.addf %24, %23 : vector<256x4xf32>
    %26 = tpu.reciprocal %25 {approx = true} : vector<256x4xf32> -> vector<256x4xf32>
    %cst_19 = arith.constant 0.000000e+00 : f32
    %27 = vector.broadcast %cst_19 : f32 to vector<256x4xf32>
    %28 = arith.cmpf oge, %19, %27 : vector<256x4xf32>
    %29 = arith.mulf %23, %26 : vector<256x4xf32>
    %30 = arith.select %28, %26, %29 : vector<256x4xi1>, vector<256x4xf32>
    %31 = arith.mulf %19, %30 : vector<256x4xf32>
    %c0_20 = arith.constant 0 : index
    %c0_21 = arith.constant 0 : index
    %c0_22 = arith.constant 0 : index
    %32 = vector.load %arg4[%c0_20, %c0_21, %c0_22] : memref<1x256x4xbf16, #tpu.memory_space<vmem>>, vector<1x256x4xbf16>
    %33 = vector.shape_cast %32 : vector<1x256x4xbf16> to vector<256x4xbf16>
    %34 = arith.extf %33 : vector<256x4xbf16> to vector<256x4xf32>
    %35 = arith.addf %31, %34 : vector<256x4xf32>
    %36 = arith.truncf %35 : vector<256x4xf32> to vector<256x4xbf16>
    %c0_23 = arith.constant 0 : index
    %c0_24 = arith.constant 0 : index
    %c0_25 = arith.constant 0 : index
    %37 = vector.load %arg5[%c0_23, %c0_24, %c0_25] : memref<1x256x4xbf16, #tpu.memory_space<vmem>>, vector<1x256x4xbf16>
    %38 = vector.shape_cast %37 : vector<1x256x4xbf16> to vector<256x4xbf16>
    %39 = vector.shape_cast %36 : vector<256x4xbf16> to vector<1x256x4xbf16>
    tpu.vector_store %arg5[%c0_23, %c0_24, %c0_25], %39 {strides = array<i32>} : memref<1x256x4xbf16, #tpu.memory_space<vmem>>, vector<1x256x4xbf16>,
    return
  }
  func.func @transform_0(%arg0: i32) -> (i32, i32, i32) {
    %c0_i32 = arith.constant 0 : i32
    %c0_i32_0 = arith.constant 0 : i32
    %c0_i32_1 = arith.constant 0 : i32
    return %arg0, %c0_i32, %c0_i32_0 : i32, i32, i32
  }
  func.func @transform_1(%arg0: i32) -> (i32, i32, i32) {
    %c0_i32 = arith.constant 0 : i32
    %c0_i32_0 = arith.constant 0 : i32
    %c0_i32_1 = arith.constant 0 : i32
    %c0_i32_2 = arith.constant 0 : i32
    return %c0_i32, %c0_i32_0, %c0_i32_1 : i32, i32, i32
  }
  func.func @transform_2(%arg0: i32) -> (i32, i32) {
    %c0_i32 = arith.constant 0 : i32
    %c0_i32_0 = arith.constant 0 : i32
    %c0_i32_1 = arith.constant 0 : i32
    return %c0_i32, %c0_i32_0 : i32, i32
  }
  func.func @transform_3(%arg0: i32) -> (i32, i32, i32) {
    %c0_i32 = arith.constant 0 : i32
    %c0_i32_0 = arith.constant 0 : i32
    %c0_i32_1 = arith.constant 0 : i32
    return %arg0, %c0_i32, %c0_i32_0 : i32, i32, i32
  }
  func.func @transform_4(%arg0: i32) -> (i32, i32, i32) {
    %c0_i32 = arith.constant 0 : i32
    %c0_i32_0 = arith.constant 0 : i32
    %c0_i32_1 = arith.constant 0 : i32
    return %arg0, %c0_i32, %c0_i32_0 : i32, i32, i32
  }
}

module attributes {stable_mosaic.version = 11 : i64} {
  func.func @_mm2_bias_silu_kernel(%arg0: i32, %arg1: memref<256x4xbf16, #tpu.memory_space<vmem>>, %arg2: memref<256x4xbf16, #tpu.memory_space<vmem>>, %arg3: memref<4x8xbf16, #tpu.memory_space<vmem>>, %arg4: memref<4x8xbf16, #tpu.memory_space<vmem>>, %arg5: memref<1x8xf32, #tpu.memory_space<vmem>>, %arg6: memref<256x8xf32, #tpu.memory_space<vmem>>) attributes {dimension_semantics = [#tpu.dimension_semantics<parallel>], iteration_bounds = array<i64: 2>, scalar_prefetch = 0 : i64, scratch_operands = 0 : i64, tpu.core_type = #tpu.core_type<tc>, window_params = [{transform_indices = @transform_0, window_bounds = array<i64: 256, 4>}, {transform_indices = @transform_1, window_bounds = array<i64: 256, 4>}, {pipeline_mode = #tpu.pipeline_mode<synchronous>, transform_indices = @transform_2, window_bounds = array<i64: 4, 8>}, {pipeline_mode = #tpu.pipeline_mode<synchronous>, transform_indices = @transform_3, window_bounds = array<i64: 4, 8>}, {pipeline_mode = #tpu.pipeline_mode<synchronous>, transform_indices = @transform_4, window_bounds = array<i64: 1, 8>}, {transform_indices = @transform_5, window_bounds = array<i64: 256, 8>}]} {
    %c0 = arith.constant 0 : index
    %c0_0 = arith.constant 0 : index
    %0 = vector.load %arg1[%c0, %c0_0] : memref<256x4xbf16, #tpu.memory_space<vmem>>, vector<256x4xbf16>
    %c0_1 = arith.constant 0 : index
    %c0_2 = arith.constant 0 : index
    %1 = vector.load %arg3[%c0_1, %c0_2] : memref<4x8xbf16, #tpu.memory_space<vmem>>, vector<4x8xbf16>
    %cst = arith.constant dense<0.000000e+00> : vector<256x8xf32>
    %2 = tpu.matmul %0, %1, %cst {dimension_numbers = #tpu.dot_dimension_numbers<[1], [0], [0], [1], [0, 0, 1, 1], [], []>} : vector<256x4xbf16>, vector<4x8xbf16>, vector<256x8xf32> -> vector<256x8xf32>
    %c0_3 = arith.constant 0 : index
    %c0_4 = arith.constant 0 : index
    %3 = vector.load %arg2[%c0_3, %c0_4] : memref<256x4xbf16, #tpu.memory_space<vmem>>, vector<256x4xbf16>
    %c0_5 = arith.constant 0 : index
    %c0_6 = arith.constant 0 : index
    %4 = vector.load %arg4[%c0_5, %c0_6] : memref<4x8xbf16, #tpu.memory_space<vmem>>, vector<4x8xbf16>
    %cst_7 = arith.constant dense<0.000000e+00> : vector<256x8xf32>
    %5 = tpu.matmul %3, %4, %cst_7 {dimension_numbers = #tpu.dot_dimension_numbers<[1], [0], [0], [1], [0, 0, 1, 1], [], []>} : vector<256x4xbf16>, vector<4x8xbf16>, vector<256x8xf32> -> vector<256x8xf32>
    %6 = arith.addf %2, %5 : vector<256x8xf32>
    %c0_8 = arith.constant 0 : index
    %c0_9 = arith.constant 0 : index
    %7 = vector.load %arg5[%c0_8, %c0_9] : memref<1x8xf32, #tpu.memory_space<vmem>>, vector<1x8xf32>
    %8 = vector.broadcast %7 : vector<1x8xf32> to vector<256x8xf32>
    %9 = arith.addf %6, %8 : vector<256x8xf32>
    %10 = math.absf %9 : vector<256x8xf32>
    %cst_10 = arith.constant 0.000000e+00 : f32
    %11 = vector.broadcast %cst_10 : f32 to vector<256x8xf32>
    %12 = arith.subf %11, %10 : vector<256x8xf32>
    %13 = math.exp %12 : vector<256x8xf32>
    %cst_11 = arith.constant 1.000000e+00 : f32
    %14 = vector.broadcast %cst_11 : f32 to vector<256x8xf32>
    %15 = arith.addf %14, %13 : vector<256x8xf32>
    %16 = tpu.reciprocal %15 {approx = true} : vector<256x8xf32> -> vector<256x8xf32>
    %cst_12 = arith.constant 0.000000e+00 : f32
    %17 = vector.broadcast %cst_12 : f32 to vector<256x8xf32>
    %18 = arith.cmpf oge, %9, %17 : vector<256x8xf32>
    %19 = arith.mulf %13, %16 : vector<256x8xf32>
    %20 = arith.select %18, %16, %19 : vector<256x8xi1>, vector<256x8xf32>
    %21 = arith.mulf %9, %20 : vector<256x8xf32>
    %c0_13 = arith.constant 0 : index
    %c0_14 = arith.constant 0 : index
    %22 = vector.load %arg6[%c0_13, %c0_14] : memref<256x8xf32, #tpu.memory_space<vmem>>, vector<256x8xf32>
    tpu.vector_store %arg6[%c0_13, %c0_14], %21 {strides = array<i32>} : memref<256x8xf32, #tpu.memory_space<vmem>>, vector<256x8xf32>,
    return
  }
  func.func @transform_0(%arg0: i32) -> (i32, i32) {
    %c0_i32 = arith.constant 0 : i32
    %c0_i32_0 = arith.constant 0 : i32
    return %arg0, %c0_i32 : i32, i32
  }
  func.func @transform_1(%arg0: i32) -> (i32, i32) {
    %c0_i32 = arith.constant 0 : i32
    %c0_i32_0 = arith.constant 0 : i32
    return %arg0, %c0_i32 : i32, i32
  }
  func.func @transform_2(%arg0: i32) -> (i32, i32) {
    %c0_i32 = arith.constant 0 : i32
    %c0_i32_0 = arith.constant 0 : i32
    %c0_i32_1 = arith.constant 0 : i32
    return %c0_i32, %c0_i32_0 : i32, i32
  }
  func.func @transform_3(%arg0: i32) -> (i32, i32) {
    %c0_i32 = arith.constant 0 : i32
    %c0_i32_0 = arith.constant 0 : i32
    %c0_i32_1 = arith.constant 0 : i32
    return %c0_i32, %c0_i32_0 : i32, i32
  }
  func.func @transform_4(%arg0: i32) -> (i32, i32) {
    %c0_i32 = arith.constant 0 : i32
    %c0_i32_0 = arith.constant 0 : i32
    %c0_i32_1 = arith.constant 0 : i32
    return %c0_i32, %c0_i32_0 : i32, i32
  }
  func.func @transform_5(%arg0: i32) -> (i32, i32) {
    %c0_i32 = arith.constant 0 : i32
    %c0_i32_0 = arith.constant 0 : i32
    return %arg0, %c0_i32 : i32, i32
  }
}

</mosaic_0001>

<llo_original>
// kernel: csp_layer_forward.4
$region0: #{csp_layer_forward.4}
  #allocation0 [shape = 'u32[]', space=smem, size = 0x4, offset = 0x4, fixed_abs, tag = 'smem constant byte address 0x4 - core index']
  #allocation1 [shape = 'u32[144,128]{1,0:T(1,128)}', space=vmem, size = 0x12000, scoped, tag = 'internal scratch']
  %s0 = inlined_call_operand.vmem [shape: bf16[512,4], index: 0, kind: input, shape index: {}]
  %s1 = inlined_call_operand.vmem [shape: bf16[4,8], index: 1, kind: input, shape index: {}]
  %s2 = inlined_call_operand.vmem [shape: f32[1,8], index: 2, kind: input, shape index: {}]
  %s3 = inlined_call_operand.vmem [shape: bf16[512,8], index: 3, kind: output, shape index: {}]
  %s4 = sld [smem:[#allocation0]]
  $region45: #{csp_layer_forward.4} parent=0
    _
  %s6 = ssub.s32 1, %s4
  %s7 = scalar_select 0, %s6, %s4
  loop: start=0, step=1, limit=4
  $region2: #{csp_layer_forward.4} parent=0 // loop_pre_header
    _
  $region3: #{csp_layer_forward.4} parent=0 // loop_header
    %s9 = sphi 0, %s13
    %p10 = scmp.ge.s32.totalorder %s9, 4
    %s19 = sphi 0, %s21
    %s22 = sphi 0, %s19
    %s23 = sphi 0, %s22
    %s39 = sphi 0, %s23
    %s43 = sphi 0, %s43
    %s45 = sphi 0, %s43
    %s46 = sphi 0, %s45
    %s60 = sphi 0, %s46
    %s64 = sphi 0, %s64
    %s66 = sphi 0, %s64
    %s67 = sphi 0, %s66
    %s81 = sphi 0, %s67
    %s87 = sphi 0, %s89
    %s90 = sphi 0, %s87
    %s91 = sphi 0, %s90
    %s107 = sphi 0, %s91
  $region4: #{csp_layer_forward.4} parent=0 // loop_header_branch
    %12 = sbr.rel (%p10) target = $region8
  $region5: #{csp_layer_forward.4} parent=0 // loop_body
    %s14 = ssub.s32 %s9, 1
    %s15 = ssub.s32 %s9, 2
    %s16 = sadd.s32 %s9, 1
    %s17 = ssub.s32 %s9, %s16
    %p18 = scmp.eq.s32.totalorder %s17, 0
    %s20 = sadd.s32 %s19, 1
    %s21 = scalar_select %p18, %s19, %s20
    %p24 = pneg %p18
    %p25 = scmp.eq.s32.totalorder %s9, 1
    %p26 = por %p24, %p25
    %p27 = scmp.ne.s32.totalorder %s19, %s22
    %p28 = scmp.eq.s32.totalorder %s9, 0
    %p29 = por %p27, %p28
    %p30 = scmp.ne.s32.totalorder %s19, %s22
    %p31 = scmp.eq.s32.totalorder %s14, 1
    %p32 = por %p30, %p31
    %p33 = scmp.ne.s32.totalorder %s22, %s23
    %p34 = scmp.eq.s32.totalorder %s14, 0
    %p35 = por %p33, %p34
    %p36 = scmp.ne.s32.totalorder %s22, %s23
    %p37 = scmp.eq.s32.totalorder %s15, 1
    %p38 = por %p36, %p37
    %p40 = scmp.ne.s32.totalorder %s23, %s39
    %p41 = scmp.eq.s32.totalorder %s15, 0
    %p42 = por %p40, %p41
    %s44 = sadd.s32 %s43, 1
    %p47 = scmp.eq.s32.totalorder %s9, 1
    %p48 = scmp.ne.s32.totalorder %s43, %s45
    %p49 = scmp.eq.s32.totalorder %s9, 0
    %p50 = por %p48, %p49
    %p51 = scmp.ne.s32.totalorder %s43, %s45
    %p52 = scmp.eq.s32.totalorder %s14, 1
    %p53 = por %p51, %p52
    %p54 = scmp.ne.s32.totalorder %s45, %s46
    %p55 = scmp.eq.s32.totalorder %s14, 0
    %p56 = por %p54, %p55
    %p57 = scmp.ne.s32.totalorder %s45, %s46
    %p58 = scmp.eq.s32.totalorder %s15, 1
    %p59 = por %p57, %p58
    %p61 = scmp.ne.s32.totalorder %s46, %s60
    %p62 = scmp.eq.s32.totalorder %s15, 0
    %p63 = por %p61, %p62
    %s65 = sadd.s32 %s64, 1
    %p68 = scmp.eq.s32.totalorder %s9, 1
    %p69 = scmp.ne.s32.totalorder %s64, %s66
    %p70 = scmp.eq.s32.totalorder %s9, 0
    %p71 = por %p69, %p70
    %p72 = scmp.ne.s32.totalorder %s64, %s66
    %p73 = scmp.eq.s32.totalorder %s14, 1
    %p74 = por %p72, %p73
    %p75 = scmp.ne.s32.totalorder %s66, %s67
    %p76 = scmp.eq.s32.totalorder %s14, 0
    %p77 = por %p75, %p76
    %p78 = scmp.ne.s32.totalorder %s66, %s67
    %p79 = scmp.eq.s32.totalorder %s15, 1
    %p80 = por %p78, %p79
    %p82 = scmp.ne.s32.totalorder %s67, %s81
    %p83 = scmp.eq.s32.totalorder %s15, 0
    %p84 = por %p82, %p83
    %s85 = ssub.s32 %s9, %s16
    %p86 = scmp.eq.s32.totalorder %s85, 0
    %s88 = sadd.s32 %s87, 1
    %s89 = scalar_select %p86, %s87, %s88
    %p92 = pneg %p86
    %p93 = scmp.eq.s32.totalorder %s9, 1
    %p94 = por %p92, %p93
    %p95 = scmp.ne.s32.totalorder %s87, %s90
    %p96 = scmp.eq.s32.totalorder %s9, 0
    %p97 = por %p95, %p96
    %p98 = scmp.ne.s32.totalorder %s87, %s90
    %p99 = scmp.eq.s32.totalorder %s14, 1
    %p100 = por %p98, %p99
    %p101 = scmp.ne.s32.totalorder %s90, %s91
    %p102 = scmp.eq.s32.totalorder %s14, 0
    %p103 = por %p101, %p102
    %p104 = scmp.ne.s32.totalorder %s90, %s91
    %p105 = scmp.eq.s32.totalorder %s15, 1
    %p106 = por %p104, %p105
    %p108 = scmp.ne.s32.totalorder %s91, %s107
    %p109 = scmp.eq.s32.totalorder %s15, 0
    %p110 = por %p108, %p109
    %p111 = scmp.le.s32.totalorder 1, %s9
    %p112 = scmp.lt.s32.totalorder %s9, 3
    %p113 = pnand %p111, %p112
    %p114 = pneg %p113
    // Predicated region
    $region9: #{csp_layer_forward.4} parent=5 // pred_check
      _
    $region10: #{csp_layer_forward.4} parent=5 // pred_check_branch
      %116 = sbr.rel (%p113) target = $region12
    $region11: #{csp_layer_forward.4} parent=5 // pred_region
      %s117 = ssub.s32 %s9, 1
      // Predicated region
      $region13: #{csp_layer_forward.4} parent=11 // pred_check
        %p118 = pneg %p56
      $region14: #{csp_layer_forward.4} parent=11 // pred_check_branch
        %120 = sbr.rel (%p118) target = $region16
      $region15: #{csp_layer_forward.4} parent=11 // pred_region
        _
      $region16: #{csp_layer_forward.4} parent=11 // pred_fallthru
        _
      // Predicated region
      $region17: #{csp_layer_forward.4} parent=11 // pred_check
        %p121 = pneg %p77
      $region18: #{csp_layer_forward.4} parent=11 // pred_check_branch
        %123 = sbr.rel (%p121) target = $region20
      $region19: #{csp_layer_forward.4} parent=11 // pred_region
        _
      $region20: #{csp_layer_forward.4} parent=11 // pred_fallthru
        _
    $region12: #{csp_layer_forward.4} parent=5 // pred_fallthru
      _
    %p124 = scmp.lt.s32.totalorder %s9, 2
    // Predicated region
    $region21: #{csp_layer_forward.4} parent=5 // pred_check
      %p125 = pneg %p124
    $region22: #{csp_layer_forward.4} parent=5 // pred_check_branch
      %127 = sbr.rel (%p125) target = $region24
    $region23: #{csp_layer_forward.4} parent=5 // pred_region
      // Predicated region
      $region25: #{csp_layer_forward.4} parent=23 // pred_check
        %p128 = pneg %p29
      $region26: #{csp_layer_forward.4} parent=23 // pred_check_branch
        %130 = sbr.rel (%p128) target = $region28
      $region27: #{csp_layer_forward.4} parent=23 // pred_region
        %s131 = smul.u32 32, %s9
        %p132 = scmp.lt.s32.totalorder %s131, 63
        %s133 = scalar_select %p132, %s131, 63
        %s134 = smul.addr %s133, 4
        %s135 = scalar_lea.vmem %s0, %s134
        %s136 = smul.u32 32, %s9
      $region28: #{csp_layer_forward.4} parent=23 // pred_fallthru
        _
    $region24: #{csp_layer_forward.4} parent=5 // pred_fallthru
      _
    %p137 = scmp.le.s32.totalorder 1, %s9
    %p138 = scmp.lt.s32.totalorder %s9, 3
    %p139 = pnand %p137, %p138
    %p140 = pneg %p139
    // Predicated region
    $region29: #{csp_layer_forward.4} parent=5 // pred_check
      _
    $region30: #{csp_layer_forward.4} parent=5 // pred_check_branch
      %142 = sbr.rel (%p139) target = $region32
    $region31: #{csp_layer_forward.4} parent=5 // pred_region
      %s143 = ssub.s32 %s9, 1
      %s144 = smul.u32 32, %s14
      %p145 = scmp.lt.s32.totalorder %s144, 63
      %s146 = scalar_select %p145, %s144, 63
      %s147 = smul.addr %s146, 4
      %s148 = scalar_lea.vmem %s0, %s147
      %p149 = pneg %p35
      %p150 = pneg %p32
      %p151 = pneg %p56
      %p152 = pneg %p53
      %p153 = pneg %p77
      %p154 = pneg %p74
      %p155 = pneg %p103
      %p156 = pneg %p100
      %s157 = smul.u32 32, %s14
      %p158 = scmp.lt.s32.totalorder %s157, 63
      %s159 = scalar_select %p158, %s157, 63
      %s160 = smul.addr %s159, 4
      %s161 = scalar_lea.vmem %s3, %s160
      %s162 = smul.u32 32, %s14
      %p163 = scmp.lt.s32.totalorder %s162, 63
      %s164 = scalar_select %p163, %s162, 63
      %s165 = smul.addr %s164, 4
      %s166 = scalar_lea.vmem %s0, %s165
      %s167 = smul.u32 32, %s14
      %s168 = smul.u32 32, %s14
      %p169 = scmp.lt.s32.totalorder %s168, 63
      %s170 = scalar_select %p169, %s168, 63
      %s171 = smul.addr %s170, 4
      %s172 = scalar_lea.vmem %s3, %s171
      %s173 = smul.u32 32, %s14
      %v175 = vld [vmem:[%s166] sm:$0xf]
      %v176 = vld [vmem:[%s166 + $0x4] sm:$0xf]
      %v177 = vld [vmem:[%s166 + $0x8] sm:$0xf]
      %v178 = vld [vmem:[%s166 + $0xc] sm:$0xf]
      %v179 = vld [vmem:[%s166 + $0x10] sm:$0xf]
      %v180 = vld [vmem:[%s166 + $0x14] sm:$0xf]
      %v181 = vld [vmem:[%s166 + $0x18] sm:$0xf]
      %v182 = vld [vmem:[%s166 + $0x1c] sm:$0xf]
      %v183 = vld [vmem:[%s166 + $0x20] sm:$0xf]
      %v184 = vld [vmem:[%s166 + $0x24] sm:$0xf]
      %v185 = vld [vmem:[%s166 + $0x28] sm:$0xf]
      %v186 = vld [vmem:[%s166 + $0x2c] sm:$0xf]
      %v187 = vld [vmem:[%s166 + $0x30] sm:$0xf]
      %v188 = vld [vmem:[%s166 + $0x34] sm:$0xf]
      %v189 = vld [vmem:[%s166 + $0x38] sm:$0xf]
      %v190 = vld [vmem:[%s166 + $0x3c] sm:$0xf]
      %v191 = vld [vmem:[%s166 + $0x40] sm:$0xf]
      %v192 = vld [vmem:[%s166 + $0x44] sm:$0xf]
      %v193 = vld [vmem:[%s166 + $0x48] sm:$0xf]
      %v194 = vld [vmem:[%s166 + $0x4c] sm:$0xf]
      %v195 = vld [vmem:[%s166 + $0x50] sm:$0xf]
      %v196 = vld [vmem:[%s166 + $0x54] sm:$0xf]
      %v197 = vld [vmem:[%s166 + $0x58] sm:$0xf]
      %v198 = vld [vmem:[%s166 + $0x5c] sm:$0xf]
      %v199 = vld [vmem:[%s166 + $0x60] sm:$0xf]
      %v200 = vld [vmem:[%s166 + $0x64] sm:$0xf]
      %v201 = vld [vmem:[%s166 + $0x68] sm:$0xf]
      %v202 = vld [vmem:[%s166 + $0x6c] sm:$0xf]
      %v203 = vld [vmem:[%s166 + $0x70] sm:$0xf]
      %v204 = vld [vmem:[%s166 + $0x74] sm:$0xf]
      %v205 = vld [vmem:[%s166 + $0x78] sm:$0xf]
      %v206 = vld [vmem:[%s166 + $0x7c] sm:$0xf]
      %v207 = vld [vmem:[%s1] sm:$0x3]
      %v208 = vld [vmem:[%s2] sm:$0x1]
      %v210 = vlaneseq
      %v211 = vshrl.u32 %v210, 7
      %v212 = vsub.s32 0, %v211
      %v213 = vrot.slane %v208, %v212
      %v247 = vunpack.c.l.b16 %v175
      %v248 = vunpack.c.l.b16 %v176
      %v249 = vunpack.c.l.b16 %v177
      %v250 = vunpack.c.l.b16 %v178
      %v251 = vunpack.c.l.b16 %v179
      %v252 = vunpack.c.l.b16 %v180
      %v253 = vunpack.c.l.b16 %v181
      %v254 = vunpack.c.l.b16 %v182
      %v255 = vunpack.c.l.b16 %v183
      %v256 = vunpack.c.l.b16 %v184
      %v257 = vunpack.c.l.b16 %v185
      %v258 = vunpack.c.l.b16 %v186
      %v259 = vunpack.c.l.b16 %v187
      %v260 = vunpack.c.l.b16 %v188
      %v261 = vunpack.c.l.b16 %v189
      %v262 = vunpack.c.l.b16 %v190
      %v263 = vunpack.c.l.b16 %v191
      %v264 = vunpack.c.l.b16 %v192
      %v265 = vunpack.c.l.b16 %v193
      %v266 = vunpack.c.l.b16 %v194
      %v267 = vunpack.c.l.b16 %v195
      %v268 = vunpack.c.l.b16 %v196
      %v269 = vunpack.c.l.b16 %v197
      %v270 = vunpack.c.l.b16 %v198
      %v271 = vunpack.c.l.b16 %v199
      %v272 = vunpack.c.l.b16 %v200
      %v273 = vunpack.c.l.b16 %v201
      %v274 = vunpack.c.l.b16 %v202
      %v275 = vunpack.c.l.b16 %v203
      %v276 = vunpack.c.l.b16 %v204
      %v277 = vunpack.c.l.b16 %v205
      %v278 = vunpack.c.l.b16 %v206
      %v279 = vpack.c.b16 %v248, %v247
      %v280 = vpack.c.b16 %v250, %v249
      %v281 = vpack.c.b16 %v252, %v251
      %v282 = vpack.c.b16 %v254, %v253
      %v283 = vpack.c.b16 %v256, %v255
      %v284 = vpack.c.b16 %v258, %v257
      %v285 = vpack.c.b16 %v260, %v259
      %v286 = vpack.c.b16 %v262, %v261
      %v287 = vpack.c.b16 %v264, %v263
      %v288 = vpack.c.b16 %v266, %v265
      %v289 = vpack.c.b16 %v268, %v267
      %v290 = vpack.c.b16 %v270, %v269
      %v291 = vpack.c.b16 %v272, %v271
      %v292 = vpack.c.b16 %v274, %v273
      %v293 = vpack.c.b16 %v276, %v275
      %v294 = vpack.c.b16 %v278, %v277
      %vm295 = vcmask 31744
      %v297 = vsel %vm295, %v279, 0
      %v300 = vsel %vm295, %v280, 0
      %v303 = vsel %vm295, %v281, 0
      %v306 = vsel %vm295, %v282, 0
      %v309 = vsel %vm295, %v283, 0
      %v312 = vsel %vm295, %v284, 0
      %v315 = vsel %vm295, %v285, 0
      %v318 = vsel %vm295, %v286, 0
      %v321 = vsel %vm295, %v287, 0
      %v324 = vsel %vm295, %v288, 0
      %v327 = vsel %vm295, %v289, 0
      %v330 = vsel %vm295, %v290, 0
      %v333 = vsel %vm295, %v291, 0
      %v336 = vsel %vm295, %v292, 0
      %v339 = vsel %vm295, %v293, 0
      %v342 = vsel %vm295, %v294, 0
      %vm344 = vcmask 1041408
      %v346 = vsel %vm344, %v207, 0
      %348 = vmatprep.subr.bf16.mxu0 0
      %349 = vmatpush1.bf16.msra.mxu0 %v346
      %350 = vmatprep.subr.bf16.mxu0 0
      %351 = vmatpush1.bf16.msra.mxu0 0
      %352 = vmatprep.subr.bf16.mxu0 0
      %353 = vmatpush1.bf16.msra.mxu0 0
      %354 = vmatprep.subr.bf16.mxu0 0
      %355 = vmatpush1.bf16.msra.mxu0 0
      %356 = vmatprep.subr.bf16.mxu0 0
      %357 = vmatpush1.bf16.msra.mxu0 0
      %358 = vmatprep.subr.bf16.mxu0 0
      %359 = vmatpush1.bf16.msra.mxu0 0
      %360 = vmatprep.subr.bf16.mxu0 0
      %361 = vmatpush1.bf16.msra.mxu0 0
      %362 = vmatprep.subr.bf16.mxu0 0
      %363 = vmatpush1.bf16.msra.mxu0 0
      %364 = vmatprep.subr.bf16.mxu0 0
      %365 = vmatpush1.bf16.msra.mxu0 0
      %366 = vmatprep.subr.bf16.mxu0 0
      %367 = vmatpush1.bf16.msra.mxu0 0
      %368 = vmatprep.subr.bf16.mxu0 0
      %369 = vmatpush1.bf16.msra.mxu0 0
      %370 = vmatprep.subr.bf16.mxu0 0
      %371 = vmatpush1.bf16.msra.mxu0 0
      %372 = vmatprep.subr.bf16.mxu0 0
      %373 = vmatpush1.bf16.msra.mxu0 0
      %374 = vmatprep.subr.bf16.mxu0 0
      %375 = vmatpush1.bf16.msra.mxu0 0
      %376 = vmatprep.subr.bf16.mxu0 0
      %377 = vmatpush1.bf16.msra.mxu0 0
      %378 = vmatprep.subr.bf16.mxu0 0
      %379 = vmatpush1.bf16.msra.mxu0 0
      %380 = vmatprep.mubr.bf16.mxu0 0
      %381 = vmatmul.mubr.bf16.gmra.mrb[0].mxu0 %v297
      %v382 = vpop.f32.mrb[0].mxu0
      %v383 = vadd.f32 %v213, %v382
      %v384 = vpop.f32.mrb[0].mxu0
      %v385 = vpop.f32.mrb[0].mxu0
      %v386 = vadd.f32 %v213, %v385
      %v387 = vpop.f32.mrb[0].mxu0
      %388 = vmatprep.mubr.bf16.mxu0 0
      %389 = vmatmul.mubr.bf16.gmra.mrb[0].mxu0 %v300
      %v390 = vpop.f32.mrb[0].mxu0
      %v391 = vadd.f32 %v213, %v390
      %v392 = vpop.f32.mrb[0].mxu0
      %v393 = vpop.f32.mrb[0].mxu0
      %v394 = vadd.f32 %v213, %v393
      %v395 = vpop.f32.mrb[0].mxu0
      %396 = vmatprep.mubr.bf16.mxu0 0
      %397 = vmatmul.mubr.bf16.gmra.mrb[0].mxu0 %v303
      %v398 = vpop.f32.mrb[0].mxu0
      %v399 = vadd.f32 %v213, %v398
      %v400 = vpop.f32.mrb[0].mxu0
      %v401 = vpop.f32.mrb[0].mxu0
      %v402 = vadd.f32 %v213, %v401
      %v403 = vpop.f32.mrb[0].mxu0
      %404 = vmatprep.mubr.bf16.mxu0 0
      %405 = vmatmul.mubr.bf16.gmra.mrb[0].mxu0 %v306
      %v406 = vpop.f32.mrb[0].mxu0
      %v407 = vadd.f32 %v213, %v406
      %v408 = vpop.f32.mrb[0].mxu0
      %v409 = vpop.f32.mrb[0].mxu0
      %v410 = vadd.f32 %v213, %v409
      %v411 = vpop.f32.mrb[0].mxu0
      %412 = vmatprep.mubr.bf16.mxu0 0
      %413 = vmatmul.mubr.bf16.gmra.mrb[0].mxu0 %v309
      %v414 = vpop.f32.mrb[0].mxu0
      %v415 = vadd.f32 %v213, %v414
      %v416 = vpop.f32.mrb[0].mxu0
      %v417 = vpop.f32.mrb[0].mxu0
      %v418 = vadd.f32 %v213, %v417
      %v419 = vpop.f32.mrb[0].mxu0
      %420 = vmatprep.mubr.bf16.mxu0 0
      %421 = vmatmul.mubr.bf16.gmra.mrb[0].mxu0 %v312
      %v422 = vpop.f32.mrb[0].mxu0
      %v423 = vadd.f32 %v213, %v422
      %v424 = vpop.f32.mrb[0].mxu0
      %v425 = vpop.f32.mrb[0].mxu0
      %v426 = vadd.f32 %v213, %v425
      %v427 = vpop.f32.mrb[0].mxu0
      %428 = vmatprep.mubr.bf16.mxu0 0
      %429 = vmatmul.mubr.bf16.gmra.mrb[0].mxu0 %v315
      %v430 = vpop.f32.mrb[0].mxu0
      %v431 = vadd.f32 %v213, %v430
      %v432 = vpop.f32.mrb[0].mxu0
      %v433 = vpop.f32.mrb[0].mxu0
      %v434 = vadd.f32 %v213, %v433
      %v435 = vpop.f32.mrb[0].mxu0
      %436 = vmatprep.mubr.bf16.mxu0 0
      %437 = vmatmul.mubr.bf16.gmra.mrb[0].mxu0 %v318
      %v438 = vpop.f32.mrb[0].mxu0
      %v439 = vadd.f32 %v213, %v438
      %v440 = vpop.f32.mrb[0].mxu0
      %v441 = vpop.f32.mrb[0].mxu0
      %v442 = vadd.f32 %v213, %v441
      %v443 = vpop.f32.mrb[0].mxu0
      %444 = vmatprep.mubr.bf16.mxu0 0
      %445 = vmatmul.mubr.bf16.gmra.mrb[0].mxu0 %v321
      %v446 = vpop.f32.mrb[0].mxu0
      %v447 = vadd.f32 %v213, %v446
      %v448 = vpop.f32.mrb[0].mxu0
      %v449 = vpop.f32.mrb[0].mxu0
      %v450 = vadd.f32 %v213, %v449
      %v451 = vpop.f32.mrb[0].mxu0
      %452 = vmatprep.mubr.bf16.mxu0 0
      %453 = vmatmul.mubr.bf16.gmra.mrb[0].mxu0 %v324
      %v454 = vpop.f32.mrb[0].mxu0
      %v455 = vadd.f32 %v213, %v454
      %v456 = vpop.f32.mrb[0].mxu0
      %v457 = vpop.f32.mrb[0].mxu0
      %v458 = vadd.f32 %v213, %v457
      %v459 = vpop.f32.mrb[0].mxu0
      %460 = vmatprep.mubr.bf16.mxu0 0
      %461 = vmatmul.mubr.bf16.gmra.mrb[0].mxu0 %v327
      %v462 = vpop.f32.mrb[0].mxu0
      %v463 = vadd.f32 %v213, %v462
      %v464 = vpop.f32.mrb[0].mxu0
      %v465 = vpop.f32.mrb[0].mxu0
      %v466 = vadd.f32 %v213, %v465
      %v467 = vpop.f32.mrb[0].mxu0
      %468 = vmatprep.mubr.bf16.mxu0 0
      %469 = vmatmul.mubr.bf16.gmra.mrb[0].mxu0 %v330
      %v470 = vpop.f32.mrb[0].mxu0
      %v471 = vadd.f32 %v213, %v470
      %v472 = vpop.f32.mrb[0].mxu0
      %v473 = vpop.f32.mrb[0].mxu0
      %v474 = vadd.f32 %v213, %v473
      %v475 = vpop.f32.mrb[0].mxu0
      %476 = vmatprep.mubr.bf16.mxu0 0
      %477 = vmatmul.mubr.bf16.gmra.mrb[0].mxu0 %v333
      %v478 = vpop.f32.mrb[0].mxu0
      %v479 = vadd.f32 %v213, %v478
      %v480 = vpop.f32.mrb[0].mxu0
      %v481 = vpop.f32.mrb[0].mxu0
      %v482 = vadd.f32 %v213, %v481
      %v483 = vpop.f32.mrb[0].mxu0
      %484 = vmatprep.mubr.bf16.mxu0 0
      %485 = vmatmul.mubr.bf16.gmra.mrb[0].mxu0 %v336
      %v486 = vpop.f32.mrb[0].mxu0
      %v487 = vadd.f32 %v213, %v486
      %v488 = vpop.f32.mrb[0].mxu0
      %v489 = vpop.f32.mrb[0].mxu0
      %v490 = vadd.f32 %v213, %v489
      %v491 = vpop.f32.mrb[0].mxu0
      %492 = vmatprep.mubr.bf16.mxu0 0
      %493 = vmatmul.mubr.bf16.gmra.mrb[0].mxu0 %v339
      %v494 = vpop.f32.mrb[0].mxu0
      %v495 = vadd.f32 %v213, %v494
      %v496 = vpop.f32.mrb[0].mxu0
      %v497 = vpop.f32.mrb[0].mxu0
      %v498 = vadd.f32 %v213, %v497
      %v499 = vpop.f32.mrb[0].mxu0
      %500 = vmatprep.mubr.bf16.mxu0 0
      %501 = vmatmul.mubr.bf16.gmra.mrb[0].mxu0 %v342
      %v502 = vpop.f32.mrb[0].mxu0
      %v503 = vadd.f32 %v213, %v502
      %v504 = vpop.f32.mrb[0].mxu0
      %v505 = vpop.f32.mrb[0].mxu0
      %v506 = vadd.f32 %v213, %v505
      %v507 = vpop.f32.mrb[0].mxu0
      %508 = vdwg.mxu0
      %v509 = vand.u32 2147483647, %v383
      %v510 = vand.u32 2147483647, %v386
      %v511 = vand.u32 2147483647, %v391
      %v512 = vand.u32 2147483647, %v394
      %v513 = vand.u32 2147483647, %v399
      %v514 = vand.u32 2147483647, %v402
      %v515 = vand.u32 2147483647, %v407
      %v516 = vand.u32 2147483647, %v410
      %v517 = vand.u32 2147483647, %v415
      %v518 = vand.u32 2147483647, %v418
      %v519 = vand.u32 2147483647, %v423
      %v520 = vand.u32 2147483647, %v426
      %v521 = vand.u32 2147483647, %v431
      %v522 = vand.u32 2147483647, %v434
      %v523 = vand.u32 2147483647, %v439
      %v524 = vand.u32 2147483647, %v442
      %v525 = vand.u32 2147483647, %v447
      %v526 = vand.u32 2147483647, %v450
      %v527 = vand.u32 2147483647, %v455
      %v528 = vand.u32 2147483647, %v458
      %v529 = vand.u32 2147483647, %v463
      %v530 = vand.u32 2147483647, %v466
      %v531 = vand.u32 2147483647, %v471
      %v532 = vand.u32 2147483647, %v474
      %v533 = vand.u32 2147483647, %v479
      %v534 = vand.u32 2147483647, %v482
      %v535 = vand.u32 2147483647, %v487
      %v536 = vand.u32 2147483647, %v490
      %v537 = vand.u32 2147483647, %v495
      %v538 = vand.u32 2147483647, %v498
      %v539 = vand.u32 2147483647, %v503
      %v540 = vand.u32 2147483647, %v506
      %v541 = vsub.f32 0.0, %v509
      %v542 = vsub.f32 0.0, %v510
      %v543 = vsub.f32 0.0, %v511
      %v544 = vsub.f32 0.0, %v512
      %v545 = vsub.f32 0.0, %v513
      %v546 = vsub.f32 0.0, %v514
      %v547 = vsub.f32 0.0, %v515
      %v548 = vsub.f32 0.0, %v516
      %v549 = vsub.f32 0.0, %v517
      %v550 = vsub.f32 0.0, %v518
      %v551 = vsub.f32 0.0, %v519
      %v552 = vsub.f32 0.0, %v520
      %v553 = vsub.f32 0.0, %v521
      %v554 = vsub.f32 0.0, %v522
      %v555 = vsub.f32 0.0, %v523
      %v556 = vsub.f32 0.0, %v524
      %v557 = vsub.f32 0.0, %v525
      %v558 = vsub.f32 0.0, %v526
      %v559 = vsub.f32 0.0, %v527
      %v560 = vsub.f32 0.0, %v528
      %v561 = vsub.f32 0.0, %v529
      %v562 = vsub.f32 0.0, %v530
      %v563 = vsub.f32 0.0, %v531
      %v564 = vsub.f32 0.0, %v532
      %v565 = vsub.f32 0.0, %v533
      %v566 = vsub.f32 0.0, %v534
      %v567 = vsub.f32 0.0, %v535
      %v568 = vsub.f32 0.0, %v536
      %v569 = vsub.f32 0.0, %v537
      %v570 = vsub.f32 0.0, %v538
      %v571 = vsub.f32 0.0, %v539
      %v572 = vsub.f32 0.0, %v540
      %v573 = vmul.f32 %v541, 1.442695
      %v574 = vpow.pop %v573
      %v575 = vmul.f32 %v542, 1.442695
      %v576 = vpow.pop %v575
      %v577 = vmul.f32 %v543, 1.442695
      %v578 = vpow.pop %v577
      %v579 = vmul.f32 %v544, 1.442695
      %v580 = vpow.pop %v579
      %v581 = vmul.f32 %v545, 1.442695
      %v582 = vpow.pop %v581
      %v583 = vmul.f32 %v546, 1.442695
      %v584 = vpow.pop %v583
      %v585 = vmul.f32 %v547, 1.442695
      %v586 = vpow.pop %v585
      %v587 = vmul.f32 %v548, 1.442695
      %v588 = vpow.pop %v587
      %v589 = vmul.f32 %v549, 1.442695
      %v590 = vpow.pop %v589
      %v591 = vmul.f32 %v550, 1.442695
      %v592 = vpow.pop %v591
      %v593 = vmul.f32 %v551, 1.442695
      %v594 = vpow.pop %v593
      %v595 = vmul.f32 %v552, 1.442695
      %v596 = vpow.pop %v595
      %v597 = vmul.f32 %v553, 1.442695
      %v598 = vpow.pop %v597
      %v599 = vmul.f32 %v554, 1.442695
      %v600 = vpow.pop %v599
      %v601 = vmul.f32 %v555, 1.442695
      %v602 = vpow.pop %v601
      %v603 = vmul.f32 %v556, 1.442695
      %v604 = vpow.pop %v603
      %v605 = vmul.f32 %v557, 1.442695
      %v606 = vpow.pop %v605
      %v607 = vmul.f32 %v558, 1.442695
      %v608 = vpow.pop %v607
      %v609 = vmul.f32 %v559, 1.442695
      %v610 = vpow.pop %v609
      %v611 = vmul.f32 %v560, 1.442695
      %v612 = vpow.pop %v611
      %v613 = vmul.f32 %v561, 1.442695
      %v614 = vpow.pop %v613
      %v615 = vmul.f32 %v562, 1.442695
      %v616 = vpow.pop %v615
      %v617 = vmul.f32 %v563, 1.442695
      %v618 = vpow.pop %v617
      %v619 = vmul.f32 %v564, 1.442695
      %v620 = vpow.pop %v619
      %v621 = vmul.f32 %v565, 1.442695
      %v622 = vpow.pop %v621
      %v623 = vmul.f32 %v566, 1.442695
      %v624 = vpow.pop %v623
      %v625 = vmul.f32 %v567, 1.442695
      %v626 = vpow.pop %v625
      %v627 = vmul.f32 %v568, 1.442695
      %v628 = vpow.pop %v627
      %v629 = vmul.f32 %v569, 1.442695
      %v630 = vpow.pop %v629
      %v631 = vmul.f32 %v570, 1.442695
      %v632 = vpow.pop %v631
      %v633 = vmul.f32 %v571, 1.442695
      %v634 = vpow.pop %v633
      %v635 = vmul.f32 %v572, 1.442695
      %v636 = vpow.pop %v635
      %v637 = vadd.f32 %v574, 1.0
      %v638 = vadd.f32 %v576, 1.0
      %v639 = vadd.f32 %v578, 1.0
      %v640 = vadd.f32 %v580, 1.0
      %v641 = vadd.f32 %v582, 1.0
      %v642 = vadd.f32 %v584, 1.0
      %v643 = vadd.f32 %v586, 1.0
      %v644 = vadd.f32 %v588, 1.0
      %v645 = vadd.f32 %v590, 1.0
      %v646 = vadd.f32 %v592, 1.0
      %v647 = vadd.f32 %v594, 1.0
      %v648 = vadd.f32 %v596, 1.0
      %v649 = vadd.f32 %v598, 1.0
      %v650 = vadd.f32 %v600, 1.0
      %v651 = vadd.f32 %v602, 1.0
      %v652 = vadd.f32 %v604, 1.0
      %v653 = vadd.f32 %v606, 1.0
      %v654 = vadd.f32 %v608, 1.0
      %v655 = vadd.f32 %v610, 1.0
      %v656 = vadd.f32 %v612, 1.0
      %v657 = vadd.f32 %v614, 1.0
      %v658 = vadd.f32 %v616, 1.0
      %v659 = vadd.f32 %v618, 1.0
      %v660 = vadd.f32 %v620, 1.0
      %v661 = vadd.f32 %v622, 1.0
      %v662 = vadd.f32 %v624, 1.0
      %v663 = vadd.f32 %v626, 1.0
      %v664 = vadd.f32 %v628, 1.0
      %v665 = vadd.f32 %v630, 1.0
      %v666 = vadd.f32 %v632, 1.0
      %v667 = vadd.f32 %v634, 1.0
      %v668 = vadd.f32 %v636, 1.0
      %v669 = vrcp.pop %v637
      %v670 = vrcp.pop %v638
      %v671 = vrcp.pop %v639
      %v672 = vrcp.pop %v640
      %v673 = vrcp.pop %v641
      %v674 = vrcp.pop %v642
      %v675 = vrcp.pop %v643
      %v676 = vrcp.pop %v644
      %v677 = vrcp.pop %v645
      %v678 = vrcp.pop %v646
      %v679 = vrcp.pop %v647
      %v680 = vrcp.pop %v648
      %v681 = vrcp.pop %v649
      %v682 = vrcp.pop %v650
      %v683 = vrcp.pop %v651
      %v684 = vrcp.pop %v652
      %v685 = vrcp.pop %v653
      %v686 = vrcp.pop %v654
      %v687 = vrcp.pop %v655
      %v688 = vrcp.pop %v656
      %v689 = vrcp.pop %v657
      %v690 = vrcp.pop %v658
      %v691 = vrcp.pop %v659
      %v692 = vrcp.pop %v660
      %v693 = vrcp.pop %v661
      %v694 = vrcp.pop %v662
      %v695 = vrcp.pop %v663
      %v696 = vrcp.pop %v664
      %v697 = vrcp.pop %v665
      %v698 = vrcp.pop %v666
      %v699 = vrcp.pop %v667
      %v700 = vrcp.pop %v668
      %vm701 = vcmp.ge.f32.partialorder %v383, 0.0
      %vm702 = vcmp.ge.f32.partialorder %v386, 0.0
      %vm703 = vcmp.ge.f32.partialorder %v391, 0.0
      %vm704 = vcmp.ge.f32.partialorder %v394, 0.0
      %vm705 = vcmp.ge.f32.partialorder %v399, 0.0
      %vm706 = vcmp.ge.f32.partialorder %v402, 0.0
      %vm707 = vcmp.ge.f32.partialorder %v407, 0.0
      %vm708 = vcmp.ge.f32.partialorder %v410, 0.0
      %vm709 = vcmp.ge.f32.partialorder %v415, 0.0
      %vm710 = vcmp.ge.f32.partialorder %v418, 0.0
      %vm711 = vcmp.ge.f32.partialorder %v423, 0.0
      %vm712 = vcmp.ge.f32.partialorder %v426, 0.0
      %vm713 = vcmp.ge.f32.partialorder %v431, 0.0
      %vm714 = vcmp.ge.f32.partialorder %v434, 0.0
      %vm715 = vcmp.ge.f32.partialorder %v439, 0.0
      %vm716 = vcmp.ge.f32.partialorder %v442, 0.0
      %vm717 = vcmp.ge.f32.partialorder %v447, 0.0
      %vm718 = vcmp.ge.f32.partialorder %v450, 0.0
      %vm719 = vcmp.ge.f32.partialorder %v455, 0.0
      %vm720 = vcmp.ge.f32.partialorder %v458, 0.0
      %vm721 = vcmp.ge.f32.partialorder %v463, 0.0
      %vm722 = vcmp.ge.f32.partialorder %v466, 0.0
      %vm723 = vcmp.ge.f32.partialorder %v471, 0.0
      %vm724 = vcmp.ge.f32.partialorder %v474, 0.0
      %vm725 = vcmp.ge.f32.partialorder %v479, 0.0
      %vm726 = vcmp.ge.f32.partialorder %v482, 0.0
      %vm727 = vcmp.ge.f32.partialorder %v487, 0.0
      %vm728 = vcmp.ge.f32.partialorder %v490, 0.0
      %vm729 = vcmp.ge.f32.partialorder %v495, 0.0
      %vm730 = vcmp.ge.f32.partialorder %v498, 0.0
      %vm731 = vcmp.ge.f32.partialorder %v503, 0.0
      %vm732 = vcmp.ge.f32.partialorder %v506, 0.0
      %v733 = vmul.f32 %v574, %v669
      %v734 = vmul.f32 %v576, %v670
      %v735 = vmul.f32 %v578, %v671
      %v736 = vmul.f32 %v580, %v672
      %v737 = vmul.f32 %v582, %v673
      %v738 = vmul.f32 %v584, %v674
      %v739 = vmul.f32 %v586, %v675
      %v740 = vmul.f32 %v588, %v676
      %v741 = vmul.f32 %v590, %v677
      %v742 = vmul.f32 %v592, %v678
      %v743 = vmul.f32 %v594, %v679
      %v744 = vmul.f32 %v596, %v680
      %v745 = vmul.f32 %v598, %v681
      %v746 = vmul.f32 %v600, %v682
      %v747 = vmul.f32 %v602, %v683
      %v748 = vmul.f32 %v604, %v684
      %v749 = vmul.f32 %v606, %v685
      %v750 = vmul.f32 %v608, %v686
      %v751 = vmul.f32 %v610, %v687
      %v752 = vmul.f32 %v612, %v688
      %v753 = vmul.f32 %v614, %v689
      %v754 = vmul.f32 %v616, %v690
      %v755 = vmul.f32 %v618, %v691
      %v756 = vmul.f32 %v620, %v692
      %v757 = vmul.f32 %v622, %v693
      %v758 = vmul.f32 %v624, %v694
      %v759 = vmul.f32 %v626, %v695
      %v760 = vmul.f32 %v628, %v696
      %v761 = vmul.f32 %v630, %v697
      %v762 = vmul.f32 %v632, %v698
      %v763 = vmul.f32 %v634, %v699
      %v764 = vmul.f32 %v636, %v700
      %v765 = vsel %vm701, %v669, %v733
      %v766 = vsel %vm702, %v670, %v734
      %v767 = vsel %vm703, %v671, %v735
      %v768 = vsel %vm704, %v672, %v736
      %v769 = vsel %vm705, %v673, %v737
      %v770 = vsel %vm706, %v674, %v738
      %v771 = vsel %vm707, %v675, %v739
      %v772 = vsel %vm708, %v676, %v740
      %v773 = vsel %vm709, %v677, %v741
      %v774 = vsel %vm710, %v678, %v742
      %v775 = vsel %vm711, %v679, %v743
      %v776 = vsel %vm712, %v680, %v744
      %v777 = vsel %vm713, %v681, %v745
      %v778 = vsel %vm714, %v682, %v746
      %v779 = vsel %vm715, %v683, %v747
      %v780 = vsel %vm716, %v684, %v748
      %v781 = vsel %vm717, %v685, %v749
      %v782 = vsel %vm718, %v686, %v750
      %v783 = vsel %vm719, %v687, %v751
      %v784 = vsel %vm720, %v688, %v752
      %v785 = vsel %vm721, %v689, %v753
      %v786 = vsel %vm722, %v690, %v754
      %v787 = vsel %vm723, %v691, %v755
      %v788 = vsel %vm724, %v692, %v756
      %v789 = vsel %vm725, %v693, %v757
      %v790 = vsel %vm726, %v694, %v758
      %v791 = vsel %vm727, %v695, %v759
      %v792 = vsel %vm728, %v696, %v760
      %v793 = vsel %vm729, %v697, %v761
      %v794 = vsel %vm730, %v698, %v762
      %v795 = vsel %vm731, %v699, %v763
      %v796 = vsel %vm732, %v700, %v764
      %v797 = vmul.f32 %v383, %v765
      %v798 = vmul.f32 %v386, %v766
      %v799 = vmul.f32 %v391, %v767
      %v800 = vmul.f32 %v394, %v768
      %v801 = vmul.f32 %v399, %v769
      %v802 = vmul.f32 %v402, %v770
      %v803 = vmul.f32 %v407, %v771
      %v804 = vmul.f32 %v410, %v772
      %v805 = vmul.f32 %v415, %v773
      %v806 = vmul.f32 %v418, %v774
      %v807 = vmul.f32 %v423, %v775
      %v808 = vmul.f32 %v426, %v776
      %v809 = vmul.f32 %v431, %v777
      %v810 = vmul.f32 %v434, %v778
      %v811 = vmul.f32 %v439, %v779
      %v812 = vmul.f32 %v442, %v780
      %v813 = vmul.f32 %v447, %v781
      %v814 = vmul.f32 %v450, %v782
      %v815 = vmul.f32 %v455, %v783
      %v816 = vmul.f32 %v458, %v784
      %v817 = vmul.f32 %v463, %v785
      %v818 = vmul.f32 %v466, %v786
      %v819 = vmul.f32 %v471, %v787
      %v820 = vmul.f32 %v474, %v788
      %v821 = vmul.f32 %v479, %v789
      %v822 = vmul.f32 %v482, %v790
      %v823 = vmul.f32 %v487, %v791
      %v824 = vmul.f32 %v490, %v792
      %v825 = vmul.f32 %v495, %v793
      %v826 = vmul.f32 %v498, %v794
      %v827 = vmul.f32 %v503, %v795
      %v828 = vmul.f32 %v506, %v796
      %v829 = vpack.c.bf16 %v798, %v797
      %v830 = vpack.c.bf16 %v800, %v799
      %v831 = vpack.c.bf16 %v802, %v801
      %v832 = vpack.c.bf16 %v804, %v803
      %v833 = vpack.c.bf16 %v806, %v805
      %v834 = vpack.c.bf16 %v808, %v807
      %v835 = vpack.c.bf16 %v810, %v809
      %v836 = vpack.c.bf16 %v812, %v811
      %v837 = vpack.c.bf16 %v814, %v813
      %v838 = vpack.c.bf16 %v816, %v815
      %v839 = vpack.c.bf16 %v818, %v817
      %v840 = vpack.c.bf16 %v820, %v819
      %v841 = vpack.c.bf16 %v822, %v821
      %v842 = vpack.c.bf16 %v824, %v823
      %v843 = vpack.c.bf16 %v826, %v825
      %v844 = vpack.c.bf16 %v828, %v827
      %v861 = vunpack.c.l.b16 %v829
      %v862 = vunpack.c.h.b16 %v829
      %v863 = vunpack.c.l.b16 %v830
      %v864 = vunpack.c.h.b16 %v830
      %v865 = vunpack.c.l.b16 %v831
      %v866 = vunpack.c.h.b16 %v831
      %v867 = vunpack.c.l.b16 %v832
      %v868 = vunpack.c.h.b16 %v832
      %v869 = vunpack.c.l.b16 %v833
      %v870 = vunpack.c.h.b16 %v833
      %v871 = vunpack.c.l.b16 %v834
      %v872 = vunpack.c.h.b16 %v834
      %v873 = vunpack.c.l.b16 %v835
      %v874 = vunpack.c.h.b16 %v835
      %v875 = vunpack.c.l.b16 %v836
      %v876 = vunpack.c.h.b16 %v836
      %v877 = vunpack.c.l.b16 %v837
      %v878 = vunpack.c.h.b16 %v837
      %v879 = vunpack.c.l.b16 %v838
      %v880 = vunpack.c.h.b16 %v838
      %v881 = vunpack.c.l.b16 %v839
      %v882 = vunpack.c.h.b16 %v839
      %v883 = vunpack.c.l.b16 %v840
      %v884 = vunpack.c.h.b16 %v840
      %v885 = vunpack.c.l.b16 %v841
      %v886 = vunpack.c.h.b16 %v841
      %v887 = vunpack.c.l.b16 %v842
      %v888 = vunpack.c.h.b16 %v842
      %v889 = vunpack.c.l.b16 %v843
      %v890 = vunpack.c.h.b16 %v843
      %v891 = vunpack.c.l.b16 %v844
      %v892 = vunpack.c.h.b16 %v844
      %v893 = vpack.c.b16 %v861, %v861
      %v894 = vpack.c.b16 %v862, %v862
      %v895 = vpack.c.b16 %v863, %v863
      %v896 = vpack.c.b16 %v864, %v864
      %v897 = vpack.c.b16 %v865, %v865
      %v898 = vpack.c.b16 %v866, %v866
      %v899 = vpack.c.b16 %v867, %v867
      %v900 = vpack.c.b16 %v868, %v868
      %v901 = vpack.c.b16 %v869, %v869
      %v902 = vpack.c.b16 %v870, %v870
      %v903 = vpack.c.b16 %v871, %v871
      %v904 = vpack.c.b16 %v872, %v872
      %v905 = vpack.c.b16 %v873, %v873
      %v906 = vpack.c.b16 %v874, %v874
      %v907 = vpack.c.b16 %v875, %v875
      %v908 = vpack.c.b16 %v876, %v876
      %v909 = vpack.c.b16 %v877, %v877
      %v910 = vpack.c.b16 %v878, %v878
      %v911 = vpack.c.b16 %v879, %v879
      %v912 = vpack.c.b16 %v880, %v880
      %v913 = vpack.c.b16 %v881, %v881
      %v914 = vpack.c.b16 %v882, %v882
      %v915 = vpack.c.b16 %v883, %v883
      %v916 = vpack.c.b16 %v884, %v884
      %v917 = vpack.c.b16 %v885, %v885
      %v918 = vpack.c.b16 %v886, %v886
      %v919 = vpack.c.b16 %v887, %v887
      %v920 = vpack.c.b16 %v888, %v888
      %v921 = vpack.c.b16 %v889, %v889
      %v922 = vpack.c.b16 %v890, %v890
      %v923 = vpack.c.b16 %v891, %v891
      %v924 = vpack.c.b16 %v892, %v892
      %vm957 = vcmask 60416
      %958 = vst.msk [vmem:[%s172] sm:$0xf] %vm957, %v893
      %959 = vst.msk [vmem:[%s172 + $0x4] sm:$0xf] %vm957, %v894
      %960 = vst.msk [vmem:[%s172 + $0x8] sm:$0xf] %vm957, %v895
      %961 = vst.msk [vmem:[%s172 + $0xc] sm:$0xf] %vm957, %v896
      %962 = vst.msk [vmem:[%s172 + $0x10] sm:$0xf] %vm957, %v897
      %963 = vst.msk [vmem:[%s172 + $0x14] sm:$0xf] %vm957, %v898
      %964 = vst.msk [vmem:[%s172 + $0x18] sm:$0xf] %vm957, %v899
      %965 = vst.msk [vmem:[%s172 + $0x1c] sm:$0xf] %vm957, %v900
      %966 = vst.msk [vmem:[%s172 + $0x20] sm:$0xf] %vm957, %v901
      %967 = vst.msk [vmem:[%s172 + $0x24] sm:$0xf] %vm957, %v902
      %968 = vst.msk [vmem:[%s172 + $0x28] sm:$0xf] %vm957, %v903
      %969 = vst.msk [vmem:[%s172 + $0x2c] sm:$0xf] %vm957, %v904
      %970 = vst.msk [vmem:[%s172 + $0x30] sm:$0xf] %vm957, %v905
      %971 = vst.msk [vmem:[%s172 + $0x34] sm:$0xf] %vm957, %v906
      %972 = vst.msk [vmem:[%s172 + $0x38] sm:$0xf] %vm957, %v907
      %973 = vst.msk [vmem:[%s172 + $0x3c] sm:$0xf] %vm957, %v908
      %974 = vst.msk [vmem:[%s172 + $0x40] sm:$0xf] %vm957, %v909
      %975 = vst.msk [vmem:[%s172 + $0x44] sm:$0xf] %vm957, %v910
      %976 = vst.msk [vmem:[%s172 + $0x48] sm:$0xf] %vm957, %v911
      %977 = vst.msk [vmem:[%s172 + $0x4c] sm:$0xf] %vm957, %v912
      %978 = vst.msk [vmem:[%s172 + $0x50] sm:$0xf] %vm957, %v913
      %979 = vst.msk [vmem:[%s172 + $0x54] sm:$0xf] %vm957, %v914
      %980 = vst.msk [vmem:[%s172 + $0x58] sm:$0xf] %vm957, %v915
      %981 = vst.msk [vmem:[%s172 + $0x5c] sm:$0xf] %vm957, %v916
      %982 = vst.msk [vmem:[%s172 + $0x60] sm:$0xf] %vm957, %v917
      %983 = vst.msk [vmem:[%s172 + $0x64] sm:$0xf] %vm957, %v918
      %984 = vst.msk [vmem:[%s172 + $0x68] sm:$0xf] %vm957, %v919
      %985 = vst.msk [vmem:[%s172 + $0x6c] sm:$0xf] %vm957, %v920
      %986 = vst.msk [vmem:[%s172 + $0x70] sm:$0xf] %vm957, %v921
      %987 = vst.msk [vmem:[%s172 + $0x74] sm:$0xf] %vm957, %v922
      %988 = vst.msk [vmem:[%s172 + $0x78] sm:$0xf] %vm957, %v923
      %989 = vst.msk [vmem:[%s172 + $0x7c] sm:$0xf] %vm957, %v924
      %s990 = smul.u32 32, %s14
      %p991 = scmp.lt.s32.totalorder %s990, 63
      %s992 = scalar_select %p991, %s990, 63
      %s993 = smul.addr %s992, 4
      %s994 = scalar_lea.vmem %s3, %s993
      // Predicated region
      $region33: #{csp_layer_forward.4} parent=31 // pred_check
        %p995 = pneg %p100
      $region34: #{csp_layer_forward.4} parent=31 // pred_check_branch
        %997 = sbr.rel (%p995) target = $region36
      $region35: #{csp_layer_forward.4} parent=31 // pred_region
        %s998 = smul.u32 32, %s14
      $region36: #{csp_layer_forward.4} parent=31 // pred_fallthru
        _
    $region32: #{csp_layer_forward.4} parent=5 // pred_fallthru
      _
    %p999 = scmp.le.s32.totalorder 2, %s9
    // Predicated region
    $region37: #{csp_layer_forward.4} parent=5 // pred_check
      %p1000 = pneg %p999
    $region38: #{csp_layer_forward.4} parent=5 // pred_check_branch
      %1002 = sbr.rel (%p1000) target = $region40
    $region39: #{csp_layer_forward.4} parent=5 // pred_region
      %s1003 = ssub.s32 %s9, 2
      // Predicated region
      $region41: #{csp_layer_forward.4} parent=39 // pred_check
        %p1004 = pneg %p106
      $region42: #{csp_layer_forward.4} parent=39 // pred_check_branch
        %1006 = sbr.rel (%p1004) target = $region44
      $region43: #{csp_layer_forward.4} parent=39 // pred_region
        %s1007 = smul.u32 32, %s15
        %p1008 = scmp.lt.s32.totalorder %s1007, 63
        %s1009 = scalar_select %p1008, %s1007, 63
        %s1010 = smul.addr %s1009, 4
        %s1011 = scalar_lea.vmem %s3, %s1010
      $region44: #{csp_layer_forward.4} parent=39 // pred_fallthru
        _
    $region40: #{csp_layer_forward.4} parent=5 // pred_fallthru
      _
  $region6: #{csp_layer_forward.4} parent=0 // loop_footer
    %s13 = sadd.s32 1, %s9
  $region7: #{csp_layer_forward.4} parent=0 // loop_footer_branch
    %8 = sbr.rel target = $region3
  $region8: #{csp_layer_forward.4} parent=0 // loop_exit
    _

// kernel: csp_layer_forward.5
$region0: #{csp_layer_forward.5}
  #allocation0 [shape = 'u32[]', space=smem, size = 0x4, offset = 0x4, fixed_abs, tag = 'smem constant byte address 0x4 - core index']
  #allocation1 [shape = 'u32[144,128]{1,0:T(1,128)}', space=vmem, size = 0x12000, scoped, tag = 'internal scratch']
  %s0 = inlined_call_operand.vmem [shape: bf16[512,4], index: 0, kind: input, shape index: {}]
  %s1 = inlined_call_operand.vmem [shape: bf16[4,4], index: 1, kind: input, shape index: {}]
  %s2 = inlined_call_operand.vmem [shape: f32[1,4], index: 2, kind: input, shape index: {}]
  %s3 = inlined_call_operand.vmem [shape: bf16[512,4], index: 3, kind: output, shape index: {}]
  %s4 = sld [smem:[#allocation0]]
  $region45: #{csp_layer_forward.5} parent=0
    _
  %s6 = ssub.s32 1, %s4
  %s7 = scalar_select 0, %s6, %s4
  loop: start=0, step=1, limit=4
  $region2: #{csp_layer_forward.5} parent=0 // loop_pre_header
    _
  $region3: #{csp_layer_forward.5} parent=0 // loop_header
    %s9 = sphi 0, %s13
    %p10 = scmp.ge.s32.totalorder %s9, 4
    %s19 = sphi 0, %s21
    %s22 = sphi 0, %s19
    %s23 = sphi 0, %s22
    %s39 = sphi 0, %s23
    %s43 = sphi 0, %s43
    %s45 = sphi 0, %s43
    %s46 = sphi 0, %s45
    %s60 = sphi 0, %s46
    %s64 = sphi 0, %s64
    %s66 = sphi 0, %s64
    %s67 = sphi 0, %s66
    %s81 = sphi 0, %s67
    %s87 = sphi 0, %s89
    %s90 = sphi 0, %s87
    %s91 = sphi 0, %s90
    %s107 = sphi 0, %s91
  $region4: #{csp_layer_forward.5} parent=0 // loop_header_branch
    %12 = sbr.rel (%p10) target = $region8
  $region5: #{csp_layer_forward.5} parent=0 // loop_body
    %s14 = ssub.s32 %s9, 1
    %s15 = ssub.s32 %s9, 2
    %s16 = sadd.s32 %s9, 1
    %s17 = ssub.s32 %s9, %s16
    %p18 = scmp.eq.s32.totalorder %s17, 0
    %s20 = sadd.s32 %s19, 1
    %s21 = scalar_select %p18, %s19, %s20
    %p24 = pneg %p18
    %p25 = scmp.eq.s32.totalorder %s9, 1
    %p26 = por %p24, %p25
    %p27 = scmp.ne.s32.totalorder %s19, %s22
    %p28 = scmp.eq.s32.totalorder %s9, 0
    %p29 = por %p27, %p28
    %p30 = scmp.ne.s32.totalorder %s19, %s22
    %p31 = scmp.eq.s32.totalorder %s14, 1
    %p32 = por %p30, %p31
    %p33 = scmp.ne.s32.totalorder %s22, %s23
    %p34 = scmp.eq.s32.totalorder %s14, 0
    %p35 = por %p33, %p34
    %p36 = scmp.ne.s32.totalorder %s22, %s23
    %p37 = scmp.eq.s32.totalorder %s15, 1
    %p38 = por %p36, %p37
    %p40 = scmp.ne.s32.totalorder %s23, %s39
    %p41 = scmp.eq.s32.totalorder %s15, 0
    %p42 = por %p40, %p41
    %s44 = sadd.s32 %s43, 1
    %p47 = scmp.eq.s32.totalorder %s9, 1
    %p48 = scmp.ne.s32.totalorder %s43, %s45
    %p49 = scmp.eq.s32.totalorder %s9, 0
    %p50 = por %p48, %p49
    %p51 = scmp.ne.s32.totalorder %s43, %s45
    %p52 = scmp.eq.s32.totalorder %s14, 1
    %p53 = por %p51, %p52
    %p54 = scmp.ne.s32.totalorder %s45, %s46
    %p55 = scmp.eq.s32.totalorder %s14, 0
    %p56 = por %p54, %p55
    %p57 = scmp.ne.s32.totalorder %s45, %s46
    %p58 = scmp.eq.s32.totalorder %s15, 1
    %p59 = por %p57, %p58
    %p61 = scmp.ne.s32.totalorder %s46, %s60
    %p62 = scmp.eq.s32.totalorder %s15, 0
    %p63 = por %p61, %p62
    %s65 = sadd.s32 %s64, 1
    %p68 = scmp.eq.s32.totalorder %s9, 1
    %p69 = scmp.ne.s32.totalorder %s64, %s66
    %p70 = scmp.eq.s32.totalorder %s9, 0
    %p71 = por %p69, %p70
    %p72 = scmp.ne.s32.totalorder %s64, %s66
    %p73 = scmp.eq.s32.totalorder %s14, 1
    %p74 = por %p72, %p73
    %p75 = scmp.ne.s32.totalorder %s66, %s67
    %p76 = scmp.eq.s32.totalorder %s14, 0
    %p77 = por %p75, %p76
    %p78 = scmp.ne.s32.totalorder %s66, %s67
    %p79 = scmp.eq.s32.totalorder %s15, 1
    %p80 = por %p78, %p79
    %p82 = scmp.ne.s32.totalorder %s67, %s81
    %p83 = scmp.eq.s32.totalorder %s15, 0
    %p84 = por %p82, %p83
    %s85 = ssub.s32 %s9, %s16
    %p86 = scmp.eq.s32.totalorder %s85, 0
    %s88 = sadd.s32 %s87, 1
    %s89 = scalar_select %p86, %s87, %s88
    %p92 = pneg %p86
    %p93 = scmp.eq.s32.totalorder %s9, 1
    %p94 = por %p92, %p93
    %p95 = scmp.ne.s32.totalorder %s87, %s90
    %p96 = scmp.eq.s32.totalorder %s9, 0
    %p97 = por %p95, %p96
    %p98 = scmp.ne.s32.totalorder %s87, %s90
    %p99 = scmp.eq.s32.totalorder %s14, 1
    %p100 = por %p98, %p99
    %p101 = scmp.ne.s32.totalorder %s90, %s91
    %p102 = scmp.eq.s32.totalorder %s14, 0
    %p103 = por %p101, %p102
    %p104 = scmp.ne.s32.totalorder %s90, %s91
    %p105 = scmp.eq.s32.totalorder %s15, 1
    %p106 = por %p104, %p105
    %p108 = scmp.ne.s32.totalorder %s91, %s107
    %p109 = scmp.eq.s32.totalorder %s15, 0
    %p110 = por %p108, %p109
    %p111 = scmp.le.s32.totalorder 1, %s9
    %p112 = scmp.lt.s32.totalorder %s9, 3
    %p113 = pnand %p111, %p112
    %p114 = pneg %p113
    // Predicated region
    $region9: #{csp_layer_forward.5} parent=5 // pred_check
      _
    $region10: #{csp_layer_forward.5} parent=5 // pred_check_branch
      %116 = sbr.rel (%p113) target = $region12
    $region11: #{csp_layer_forward.5} parent=5 // pred_region
      %s117 = ssub.s32 %s9, 1
      // Predicated region
      $region13: #{csp_layer_forward.5} parent=11 // pred_check
        %p118 = pneg %p56
      $region14: #{csp_layer_forward.5} parent=11 // pred_check_branch
        %120 = sbr.rel (%p118) target = $region16
      $region15: #{csp_layer_forward.5} parent=11 // pred_region
        _
      $region16: #{csp_layer_forward.5} parent=11 // pred_fallthru
        _
      // Predicated region
      $region17: #{csp_layer_forward.5} parent=11 // pred_check
        %p121 = pneg %p77
      $region18: #{csp_layer_forward.5} parent=11 // pred_check_branch
        %123 = sbr.rel (%p121) target = $region20
      $region19: #{csp_layer_forward.5} parent=11 // pred_region
        _
      $region20: #{csp_layer_forward.5} parent=11 // pred_fallthru
        _
    $region12: #{csp_layer_forward.5} parent=5 // pred_fallthru
      _
    %p124 = scmp.lt.s32.totalorder %s9, 2
    // Predicated region
    $region21: #{csp_layer_forward.5} parent=5 // pred_check
      %p125 = pneg %p124
    $region22: #{csp_layer_forward.5} parent=5 // pred_check_branch
      %127 = sbr.rel (%p125) target = $region24
    $region23: #{csp_layer_forward.5} parent=5 // pred_region
      // Predicated region
      $region25: #{csp_layer_forward.5} parent=23 // pred_check
        %p128 = pneg %p29
      $region26: #{csp_layer_forward.5} parent=23 // pred_check_branch
        %130 = sbr.rel (%p128) target = $region28
      $region27: #{csp_layer_forward.5} parent=23 // pred_region
        %s131 = smul.u32 32, %s9
        %p132 = scmp.lt.s32.totalorder %s131, 63
        %s133 = scalar_select %p132, %s131, 63
        %s134 = smul.addr %s133, 4
        %s135 = scalar_lea.vmem %s0, %s134
        %s136 = smul.u32 32, %s9
      $region28: #{csp_layer_forward.5} parent=23 // pred_fallthru
        _
    $region24: #{csp_layer_forward.5} parent=5 // pred_fallthru
      _
    %p137 = scmp.le.s32.totalorder 1, %s9
    %p138 = scmp.lt.s32.totalorder %s9, 3
    %p139 = pnand %p137, %p138
    %p140 = pneg %p139
    // Predicated region
    $region29: #{csp_layer_forward.5} parent=5 // pred_check
      _
    $region30: #{csp_layer_forward.5} parent=5 // pred_check_branch
      %142 = sbr.rel (%p139) target = $region32
    $region31: #{csp_layer_forward.5} parent=5 // pred_region
      %s143 = ssub.s32 %s9, 1
      %s144 = smul.u32 32, %s14
      %p145 = scmp.lt.s32.totalorder %s144, 63
      %s146 = scalar_select %p145, %s144, 63
      %s147 = smul.addr %s146, 4
      %s148 = scalar_lea.vmem %s0, %s147
      %p149 = pneg %p35
      %p150 = pneg %p32
      %p151 = pneg %p56
      %p152 = pneg %p53
      %p153 = pneg %p77
      %p154 = pneg %p74
      %p155 = pneg %p103
      %p156 = pneg %p100
      %s157 = smul.u32 32, %s14
      %p158 = scmp.lt.s32.totalorder %s157, 63
      %s159 = scalar_select %p158, %s157, 63
      %s160 = smul.addr %s159, 4
      %s161 = scalar_lea.vmem %s3, %s160
      %s162 = smul.u32 32, %s14
      %p163 = scmp.lt.s32.totalorder %s162, 63
      %s164 = scalar_select %p163, %s162, 63
      %s165 = smul.addr %s164, 4
      %s166 = scalar_lea.vmem %s0, %s165
      %s167 = smul.u32 32, %s14
      %s168 = smul.u32 32, %s14
      %p169 = scmp.lt.s32.totalorder %s168, 63
      %s170 = scalar_select %p169, %s168, 63
      %s171 = smul.addr %s170, 4
      %s172 = scalar_lea.vmem %s3, %s171
      %s173 = smul.u32 32, %s14
      %v175 = vld [vmem:[%s166] sm:$0xf]
      %v176 = vld [vmem:[%s166 + $0x4] sm:$0xf]
      %v177 = vld [vmem:[%s166 + $0x8] sm:$0xf]
      %v178 = vld [vmem:[%s166 + $0xc] sm:$0xf]
      %v179 = vld [vmem:[%s166 + $0x10] sm:$0xf]
      %v180 = vld [vmem:[%s166 + $0x14] sm:$0xf]
      %v181 = vld [vmem:[%s166 + $0x18] sm:$0xf]
      %v182 = vld [vmem:[%s166 + $0x1c] sm:$0xf]
      %v183 = vld [vmem:[%s166 + $0x20] sm:$0xf]
      %v184 = vld [vmem:[%s166 + $0x24] sm:$0xf]
      %v185 = vld [vmem:[%s166 + $0x28] sm:$0xf]
      %v186 = vld [vmem:[%s166 + $0x2c] sm:$0xf]
      %v187 = vld [vmem:[%s166 + $0x30] sm:$0xf]
      %v188 = vld [vmem:[%s166 + $0x34] sm:$0xf]
      %v189 = vld [vmem:[%s166 + $0x38] sm:$0xf]
      %v190 = vld [vmem:[%s166 + $0x3c] sm:$0xf]
      %v191 = vld [vmem:[%s166 + $0x40] sm:$0xf]
      %v192 = vld [vmem:[%s166 + $0x44] sm:$0xf]
      %v193 = vld [vmem:[%s166 + $0x48] sm:$0xf]
      %v194 = vld [vmem:[%s166 + $0x4c] sm:$0xf]
      %v195 = vld [vmem:[%s166 + $0x50] sm:$0xf]
      %v196 = vld [vmem:[%s166 + $0x54] sm:$0xf]
      %v197 = vld [vmem:[%s166 + $0x58] sm:$0xf]
      %v198 = vld [vmem:[%s166 + $0x5c] sm:$0xf]
      %v199 = vld [vmem:[%s166 + $0x60] sm:$0xf]
      %v200 = vld [vmem:[%s166 + $0x64] sm:$0xf]
      %v201 = vld [vmem:[%s166 + $0x68] sm:$0xf]
      %v202 = vld [vmem:[%s166 + $0x6c] sm:$0xf]
      %v203 = vld [vmem:[%s166 + $0x70] sm:$0xf]
      %v204 = vld [vmem:[%s166 + $0x74] sm:$0xf]
      %v205 = vld [vmem:[%s166 + $0x78] sm:$0xf]
      %v206 = vld [vmem:[%s166 + $0x7c] sm:$0xf]
      %v207 = vld [vmem:[%s1] sm:$0x3]
      %v208 = vld [vmem:[%s2] sm:$0x1]
      %v210 = vlaneseq
      %v211 = vshrl.u32 %v210, 7
      %v212 = vsub.s32 0, %v211
      %v213 = vrot.slane %v208, %v212
      %v247 = vunpack.c.l.b16 %v175
      %v248 = vunpack.c.l.b16 %v176
      %v249 = vunpack.c.l.b16 %v177
      %v250 = vunpack.c.l.b16 %v178
      %v251 = vunpack.c.l.b16 %v179
      %v252 = vunpack.c.l.b16 %v180
      %v253 = vunpack.c.l.b16 %v181
      %v254 = vunpack.c.l.b16 %v182
      %v255 = vunpack.c.l.b16 %v183
      %v256 = vunpack.c.l.b16 %v184
      %v257 = vunpack.c.l.b16 %v185
      %v258 = vunpack.c.l.b16 %v186
      %v259 = vunpack.c.l.b16 %v187
      %v260 = vunpack.c.l.b16 %v188
      %v261 = vunpack.c.l.b16 %v189
      %v262 = vunpack.c.l.b16 %v190
      %v263 = vunpack.c.l.b16 %v191
      %v264 = vunpack.c.l.b16 %v192
      %v265 = vunpack.c.l.b16 %v193
      %v266 = vunpack.c.l.b16 %v194
      %v267 = vunpack.c.l.b16 %v195
      %v268 = vunpack.c.l.b16 %v196
      %v269 = vunpack.c.l.b16 %v197
      %v270 = vunpack.c.l.b16 %v198
      %v271 = vunpack.c.l.b16 %v199
      %v272 = vunpack.c.l.b16 %v200
      %v273 = vunpack.c.l.b16 %v201
      %v274 = vunpack.c.l.b16 %v202
      %v275 = vunpack.c.l.b16 %v203
      %v276 = vunpack.c.l.b16 %v204
      %v277 = vunpack.c.l.b16 %v205
      %v278 = vunpack.c.l.b16 %v206
      %v279 = vpack.c.b16 %v248, %v247
      %v280 = vpack.c.b16 %v250, %v249
      %v281 = vpack.c.b16 %v252, %v251
      %v282 = vpack.c.b16 %v254, %v253
      %v283 = vpack.c.b16 %v256, %v255
      %v284 = vpack.c.b16 %v258, %v257
      %v285 = vpack.c.b16 %v260, %v259
      %v286 = vpack.c.b16 %v262, %v261
      %v287 = vpack.c.b16 %v264, %v263
      %v288 = vpack.c.b16 %v266, %v265
      %v289 = vpack.c.b16 %v268, %v267
      %v290 = vpack.c.b16 %v270, %v269
      %v291 = vpack.c.b16 %v272, %v271
      %v292 = vpack.c.b16 %v274, %v273
      %v293 = vpack.c.b16 %v276, %v275
      %v294 = vpack.c.b16 %v278, %v277
      %vm295 = vcmask 31744
      %v297 = vsel %vm295, %v279, 0
      %v300 = vsel %vm295, %v280, 0
      %v303 = vsel %vm295, %v281, 0
      %v306 = vsel %vm295, %v282, 0
      %v309 = vsel %vm295, %v283, 0
      %v312 = vsel %vm295, %v284, 0
      %v315 = vsel %vm295, %v285, 0
      %v318 = vsel %vm295, %v286, 0
      %v321 = vsel %vm295, %v287, 0
      %v324 = vsel %vm295, %v288, 0
      %v327 = vsel %vm295, %v289, 0
      %v330 = vsel %vm295, %v290, 0
      %v333 = vsel %vm295, %v291, 0
      %v336 = vsel %vm295, %v292, 0
      %v339 = vsel %vm295, %v293, 0
      %v342 = vsel %vm295, %v294, 0
      %vm344 = vcmask 1041408
      %v346 = vsel %vm344, %v207, 0
      %348 = vmatprep.subr.bf16.mxu0 0
      %349 = vmatpush1.bf16.msra.mxu0 %v346
      %350 = vmatprep.subr.bf16.mxu0 0
      %351 = vmatpush1.bf16.msra.mxu0 0
      %352 = vmatprep.subr.bf16.mxu0 0
      %353 = vmatpush1.bf16.msra.mxu0 0
      %354 = vmatprep.subr.bf16.mxu0 0
      %355 = vmatpush1.bf16.msra.mxu0 0
      %356 = vmatprep.subr.bf16.mxu0 0
      %357 = vmatpush1.bf16.msra.mxu0 0
      %358 = vmatprep.subr.bf16.mxu0 0
      %359 = vmatpush1.bf16.msra.mxu0 0
      %360 = vmatprep.subr.bf16.mxu0 0
      %361 = vmatpush1.bf16.msra.mxu0 0
      %362 = vmatprep.subr.bf16.mxu0 0
      %363 = vmatpush1.bf16.msra.mxu0 0
      %364 = vmatprep.subr.bf16.mxu0 0
      %365 = vmatpush1.bf16.msra.mxu0 0
      %366 = vmatprep.subr.bf16.mxu0 0
      %367 = vmatpush1.bf16.msra.mxu0 0
      %368 = vmatprep.subr.bf16.mxu0 0
      %369 = vmatpush1.bf16.msra.mxu0 0
      %370 = vmatprep.subr.bf16.mxu0 0
      %371 = vmatpush1.bf16.msra.mxu0 0
      %372 = vmatprep.subr.bf16.mxu0 0
      %373 = vmatpush1.bf16.msra.mxu0 0
      %374 = vmatprep.subr.bf16.mxu0 0
      %375 = vmatpush1.bf16.msra.mxu0 0
      %376 = vmatprep.subr.bf16.mxu0 0
      %377 = vmatpush1.bf16.msra.mxu0 0
      %378 = vmatprep.subr.bf16.mxu0 0
      %379 = vmatpush1.bf16.msra.mxu0 0
      %380 = vmatprep.mubr.bf16.mxu0 0
      %381 = vmatmul.mubr.bf16.gmra.mrb[0].mxu0 %v297
      %v382 = vpop.f32.mrb[0].mxu0
      %v383 = vadd.f32 %v213, %v382
      %v384 = vpop.f32.mrb[0].mxu0
      %v385 = vpop.f32.mrb[0].mxu0
      %v386 = vadd.f32 %v213, %v385
      %v387 = vpop.f32.mrb[0].mxu0
      %388 = vmatprep.mubr.bf16.mxu0 0
      %389 = vmatmul.mubr.bf16.gmra.mrb[0].mxu0 %v300
      %v390 = vpop.f32.mrb[0].mxu0
      %v391 = vadd.f32 %v213, %v390
      %v392 = vpop.f32.mrb[0].mxu0
      %v393 = vpop.f32.mrb[0].mxu0
      %v394 = vadd.f32 %v213, %v393
      %v395 = vpop.f32.mrb[0].mxu0
      %396 = vmatprep.mubr.bf16.mxu0 0
      %397 = vmatmul.mubr.bf16.gmra.mrb[0].mxu0 %v303
      %v398 = vpop.f32.mrb[0].mxu0
      %v399 = vadd.f32 %v213, %v398
      %v400 = vpop.f32.mrb[0].mxu0
      %v401 = vpop.f32.mrb[0].mxu0
      %v402 = vadd.f32 %v213, %v401
      %v403 = vpop.f32.mrb[0].mxu0
      %404 = vmatprep.mubr.bf16.mxu0 0
      %405 = vmatmul.mubr.bf16.gmra.mrb[0].mxu0 %v306
      %v406 = vpop.f32.mrb[0].mxu0
      %v407 = vadd.f32 %v213, %v406
      %v408 = vpop.f32.mrb[0].mxu0
      %v409 = vpop.f32.mrb[0].mxu0
      %v410 = vadd.f32 %v213, %v409
      %v411 = vpop.f32.mrb[0].mxu0
      %412 = vmatprep.mubr.bf16.mxu0 0
      %413 = vmatmul.mubr.bf16.gmra.mrb[0].mxu0 %v309
      %v414 = vpop.f32.mrb[0].mxu0
      %v415 = vadd.f32 %v213, %v414
      %v416 = vpop.f32.mrb[0].mxu0
      %v417 = vpop.f32.mrb[0].mxu0
      %v418 = vadd.f32 %v213, %v417
      %v419 = vpop.f32.mrb[0].mxu0
      %420 = vmatprep.mubr.bf16.mxu0 0
      %421 = vmatmul.mubr.bf16.gmra.mrb[0].mxu0 %v312
      %v422 = vpop.f32.mrb[0].mxu0
      %v423 = vadd.f32 %v213, %v422
      %v424 = vpop.f32.mrb[0].mxu0
      %v425 = vpop.f32.mrb[0].mxu0
      %v426 = vadd.f32 %v213, %v425
      %v427 = vpop.f32.mrb[0].mxu0
      %428 = vmatprep.mubr.bf16.mxu0 0
      %429 = vmatmul.mubr.bf16.gmra.mrb[0].mxu0 %v315
      %v430 = vpop.f32.mrb[0].mxu0
      %v431 = vadd.f32 %v213, %v430
      %v432 = vpop.f32.mrb[0].mxu0
      %v433 = vpop.f32.mrb[0].mxu0
      %v434 = vadd.f32 %v213, %v433
      %v435 = vpop.f32.mrb[0].mxu0
      %436 = vmatprep.mubr.bf16.mxu0 0
      %437 = vmatmul.mubr.bf16.gmra.mrb[0].mxu0 %v318
      %v438 = vpop.f32.mrb[0].mxu0
      %v439 = vadd.f32 %v213, %v438
      %v440 = vpop.f32.mrb[0].mxu0
      %v441 = vpop.f32.mrb[0].mxu0
      %v442 = vadd.f32 %v213, %v441
      %v443 = vpop.f32.mrb[0].mxu0
      %444 = vmatprep.mubr.bf16.mxu0 0
      %445 = vmatmul.mubr.bf16.gmra.mrb[0].mxu0 %v321
      %v446 = vpop.f32.mrb[0].mxu0
      %v447 = vadd.f32 %v213, %v446
      %v448 = vpop.f32.mrb[0].mxu0
      %v449 = vpop.f32.mrb[0].mxu0
      %v450 = vadd.f32 %v213, %v449
      %v451 = vpop.f32.mrb[0].mxu0
      %452 = vmatprep.mubr.bf16.mxu0 0
      %453 = vmatmul.mubr.bf16.gmra.mrb[0].mxu0 %v324
      %v454 = vpop.f32.mrb[0].mxu0
      %v455 = vadd.f32 %v213, %v454
      %v456 = vpop.f32.mrb[0].mxu0
      %v457 = vpop.f32.mrb[0].mxu0
      %v458 = vadd.f32 %v213, %v457
      %v459 = vpop.f32.mrb[0].mxu0
      %460 = vmatprep.mubr.bf16.mxu0 0
      %461 = vmatmul.mubr.bf16.gmra.mrb[0].mxu0 %v327
      %v462 = vpop.f32.mrb[0].mxu0
      %v463 = vadd.f32 %v213, %v462
      %v464 = vpop.f32.mrb[0].mxu0
      %v465 = vpop.f32.mrb[0].mxu0
      %v466 = vadd.f32 %v213, %v465
      %v467 = vpop.f32.mrb[0].mxu0
      %468 = vmatprep.mubr.bf16.mxu0 0
      %469 = vmatmul.mubr.bf16.gmra.mrb[0].mxu0 %v330
      %v470 = vpop.f32.mrb[0].mxu0
      %v471 = vadd.f32 %v213, %v470
      %v472 = vpop.f32.mrb[0].mxu0
      %v473 = vpop.f32.mrb[0].mxu0
      %v474 = vadd.f32 %v213, %v473
      %v475 = vpop.f32.mrb[0].mxu0
      %476 = vmatprep.mubr.bf16.mxu0 0
      %477 = vmatmul.mubr.bf16.gmra.mrb[0].mxu0 %v333
      %v478 = vpop.f32.mrb[0].mxu0
      %v479 = vadd.f32 %v213, %v478
      %v480 = vpop.f32.mrb[0].mxu0
      %v481 = vpop.f32.mrb[0].mxu0
      %v482 = vadd.f32 %v213, %v481
      %v483 = vpop.f32.mrb[0].mxu0
      %484 = vmatprep.mubr.bf16.mxu0 0
      %485 = vmatmul.mubr.bf16.gmra.mrb[0].mxu0 %v336
      %v486 = vpop.f32.mrb[0].mxu0
      %v487 = vadd.f32 %v213, %v486
      %v488 = vpop.f32.mrb[0].mxu0
      %v489 = vpop.f32.mrb[0].mxu0
      %v490 = vadd.f32 %v213, %v489
      %v491 = vpop.f32.mrb[0].mxu0
      %492 = vmatprep.mubr.bf16.mxu0 0
      %493 = vmatmul.mubr.bf16.gmra.mrb[0].mxu0 %v339
      %v494 = vpop.f32.mrb[0].mxu0
      %v495 = vadd.f32 %v213, %v494
      %v496 = vpop.f32.mrb[0].mxu0
      %v497 = vpop.f32.mrb[0].mxu0
      %v498 = vadd.f32 %v213, %v497
      %v499 = vpop.f32.mrb[0].mxu0
      %500 = vmatprep.mubr.bf16.mxu0 0
      %501 = vmatmul.mubr.bf16.gmra.mrb[0].mxu0 %v342
      %v502 = vpop.f32.mrb[0].mxu0
      %v503 = vadd.f32 %v213, %v502
      %v504 = vpop.f32.mrb[0].mxu0
      %v505 = vpop.f32.mrb[0].mxu0
      %v506 = vadd.f32 %v213, %v505
      %v507 = vpop.f32.mrb[0].mxu0
      %508 = vdwg.mxu0
      %v509 = vand.u32 2147483647, %v383
      %v510 = vand.u32 2147483647, %v386
      %v511 = vand.u32 2147483647, %v391
      %v512 = vand.u32 2147483647, %v394
      %v513 = vand.u32 2147483647, %v399
      %v514 = vand.u32 2147483647, %v402
      %v515 = vand.u32 2147483647, %v407
      %v516 = vand.u32 2147483647, %v410
      %v517 = vand.u32 2147483647, %v415
      %v518 = vand.u32 2147483647, %v418
      %v519 = vand.u32 2147483647, %v423
      %v520 = vand.u32 2147483647, %v426
      %v521 = vand.u32 2147483647, %v431
      %v522 = vand.u32 2147483647, %v434
      %v523 = vand.u32 2147483647, %v439
      %v524 = vand.u32 2147483647, %v442
      %v525 = vand.u32 2147483647, %v447
      %v526 = vand.u32 2147483647, %v450
      %v527 = vand.u32 2147483647, %v455
      %v528 = vand.u32 2147483647, %v458
      %v529 = vand.u32 2147483647, %v463
      %v530 = vand.u32 2147483647, %v466
      %v531 = vand.u32 2147483647, %v471
      %v532 = vand.u32 2147483647, %v474
      %v533 = vand.u32 2147483647, %v479
      %v534 = vand.u32 2147483647, %v482
      %v535 = vand.u32 2147483647, %v487
      %v536 = vand.u32 2147483647, %v490
      %v537 = vand.u32 2147483647, %v495
      %v538 = vand.u32 2147483647, %v498
      %v539 = vand.u32 2147483647, %v503
      %v540 = vand.u32 2147483647, %v506
      %v541 = vsub.f32 0.0, %v509
      %v542 = vsub.f32 0.0, %v510
      %v543 = vsub.f32 0.0, %v511
      %v544 = vsub.f32 0.0, %v512
      %v545 = vsub.f32 0.0, %v513
      %v546 = vsub.f32 0.0, %v514
      %v547 = vsub.f32 0.0, %v515
      %v548 = vsub.f32 0.0, %v516
      %v549 = vsub.f32 0.0, %v517
      %v550 = vsub.f32 0.0, %v518
      %v551 = vsub.f32 0.0, %v519
      %v552 = vsub.f32 0.0, %v520
      %v553 = vsub.f32 0.0, %v521
      %v554 = vsub.f32 0.0, %v522
      %v555 = vsub.f32 0.0, %v523
      %v556 = vsub.f32 0.0, %v524
      %v557 = vsub.f32 0.0, %v525
      %v558 = vsub.f32 0.0, %v526
      %v559 = vsub.f32 0.0, %v527
      %v560 = vsub.f32 0.0, %v528
      %v561 = vsub.f32 0.0, %v529
      %v562 = vsub.f32 0.0, %v530
      %v563 = vsub.f32 0.0, %v531
      %v564 = vsub.f32 0.0, %v532
      %v565 = vsub.f32 0.0, %v533
      %v566 = vsub.f32 0.0, %v534
      %v567 = vsub.f32 0.0, %v535
      %v568 = vsub.f32 0.0, %v536
      %v569 = vsub.f32 0.0, %v537
      %v570 = vsub.f32 0.0, %v538
      %v571 = vsub.f32 0.0, %v539
      %v572 = vsub.f32 0.0, %v540
      %v573 = vmul.f32 %v541, 1.442695
      %v574 = vpow.pop %v573
      %v575 = vmul.f32 %v542, 1.442695
      %v576 = vpow.pop %v575
      %v577 = vmul.f32 %v543, 1.442695
      %v578 = vpow.pop %v577
      %v579 = vmul.f32 %v544, 1.442695
      %v580 = vpow.pop %v579
      %v581 = vmul.f32 %v545, 1.442695
      %v582 = vpow.pop %v581
      %v583 = vmul.f32 %v546, 1.442695
      %v584 = vpow.pop %v583
      %v585 = vmul.f32 %v547, 1.442695
      %v586 = vpow.pop %v585
      %v587 = vmul.f32 %v548, 1.442695
      %v588 = vpow.pop %v587
      %v589 = vmul.f32 %v549, 1.442695
      %v590 = vpow.pop %v589
      %v591 = vmul.f32 %v550, 1.442695
      %v592 = vpow.pop %v591
      %v593 = vmul.f32 %v551, 1.442695
      %v594 = vpow.pop %v593
      %v595 = vmul.f32 %v552, 1.442695
      %v596 = vpow.pop %v595
      %v597 = vmul.f32 %v553, 1.442695
      %v598 = vpow.pop %v597
      %v599 = vmul.f32 %v554, 1.442695
      %v600 = vpow.pop %v599
      %v601 = vmul.f32 %v555, 1.442695
      %v602 = vpow.pop %v601
      %v603 = vmul.f32 %v556, 1.442695
      %v604 = vpow.pop %v603
      %v605 = vmul.f32 %v557, 1.442695
      %v606 = vpow.pop %v605
      %v607 = vmul.f32 %v558, 1.442695
      %v608 = vpow.pop %v607
      %v609 = vmul.f32 %v559, 1.442695
      %v610 = vpow.pop %v609
      %v611 = vmul.f32 %v560, 1.442695
      %v612 = vpow.pop %v611
      %v613 = vmul.f32 %v561, 1.442695
      %v614 = vpow.pop %v613
      %v615 = vmul.f32 %v562, 1.442695
      %v616 = vpow.pop %v615
      %v617 = vmul.f32 %v563, 1.442695
      %v618 = vpow.pop %v617
      %v619 = vmul.f32 %v564, 1.442695
      %v620 = vpow.pop %v619
      %v621 = vmul.f32 %v565, 1.442695
      %v622 = vpow.pop %v621
      %v623 = vmul.f32 %v566, 1.442695
      %v624 = vpow.pop %v623
      %v625 = vmul.f32 %v567, 1.442695
      %v626 = vpow.pop %v625
      %v627 = vmul.f32 %v568, 1.442695
      %v628 = vpow.pop %v627
      %v629 = vmul.f32 %v569, 1.442695
      %v630 = vpow.pop %v629
      %v631 = vmul.f32 %v570, 1.442695
      %v632 = vpow.pop %v631
      %v633 = vmul.f32 %v571, 1.442695
      %v634 = vpow.pop %v633
      %v635 = vmul.f32 %v572, 1.442695
      %v636 = vpow.pop %v635
      %v637 = vadd.f32 %v574, 1.0
      %v638 = vadd.f32 %v576, 1.0
      %v639 = vadd.f32 %v578, 1.0
      %v640 = vadd.f32 %v580, 1.0
      %v641 = vadd.f32 %v582, 1.0
      %v642 = vadd.f32 %v584, 1.0
      %v643 = vadd.f32 %v586, 1.0
      %v644 = vadd.f32 %v588, 1.0
      %v645 = vadd.f32 %v590, 1.0
      %v646 = vadd.f32 %v592, 1.0
      %v647 = vadd.f32 %v594, 1.0
      %v648 = vadd.f32 %v596, 1.0
      %v649 = vadd.f32 %v598, 1.0
      %v650 = vadd.f32 %v600, 1.0
      %v651 = vadd.f32 %v602, 1.0
      %v652 = vadd.f32 %v604, 1.0
      %v653 = vadd.f32 %v606, 1.0
      %v654 = vadd.f32 %v608, 1.0
      %v655 = vadd.f32 %v610, 1.0
      %v656 = vadd.f32 %v612, 1.0
      %v657 = vadd.f32 %v614, 1.0
      %v658 = vadd.f32 %v616, 1.0
      %v659 = vadd.f32 %v618, 1.0
      %v660 = vadd.f32 %v620, 1.0
      %v661 = vadd.f32 %v622, 1.0
      %v662 = vadd.f32 %v624, 1.0
      %v663 = vadd.f32 %v626, 1.0
      %v664 = vadd.f32 %v628, 1.0
      %v665 = vadd.f32 %v630, 1.0
      %v666 = vadd.f32 %v632, 1.0
      %v667 = vadd.f32 %v634, 1.0
      %v668 = vadd.f32 %v636, 1.0
      %v669 = vrcp.pop %v637
      %v670 = vrcp.pop %v638
      %v671 = vrcp.pop %v639
      %v672 = vrcp.pop %v640
      %v673 = vrcp.pop %v641
      %v674 = vrcp.pop %v642
      %v675 = vrcp.pop %v643
      %v676 = vrcp.pop %v644
      %v677 = vrcp.pop %v645
      %v678 = vrcp.pop %v646
      %v679 = vrcp.pop %v647
      %v680 = vrcp.pop %v648
      %v681 = vrcp.pop %v649
      %v682 = vrcp.pop %v650
      %v683 = vrcp.pop %v651
      %v684 = vrcp.pop %v652
      %v685 = vrcp.pop %v653
      %v686 = vrcp.pop %v654
      %v687 = vrcp.pop %v655
      %v688 = vrcp.pop %v656
      %v689 = vrcp.pop %v657
      %v690 = vrcp.pop %v658
      %v691 = vrcp.pop %v659
      %v692 = vrcp.pop %v660
      %v693 = vrcp.pop %v661
      %v694 = vrcp.pop %v662
      %v695 = vrcp.pop %v663
      %v696 = vrcp.pop %v664
      %v697 = vrcp.pop %v665
      %v698 = vrcp.pop %v666
      %v699 = vrcp.pop %v667
      %v700 = vrcp.pop %v668
      %vm701 = vcmp.ge.f32.partialorder %v383, 0.0
      %vm702 = vcmp.ge.f32.partialorder %v386, 0.0
      %vm703 = vcmp.ge.f32.partialorder %v391, 0.0
      %vm704 = vcmp.ge.f32.partialorder %v394, 0.0
      %vm705 = vcmp.ge.f32.partialorder %v399, 0.0
      %vm706 = vcmp.ge.f32.partialorder %v402, 0.0
      %vm707 = vcmp.ge.f32.partialorder %v407, 0.0
      %vm708 = vcmp.ge.f32.partialorder %v410, 0.0
      %vm709 = vcmp.ge.f32.partialorder %v415, 0.0
      %vm710 = vcmp.ge.f32.partialorder %v418, 0.0
      %vm711 = vcmp.ge.f32.partialorder %v423, 0.0
      %vm712 = vcmp.ge.f32.partialorder %v426, 0.0
      %vm713 = vcmp.ge.f32.partialorder %v431, 0.0
      %vm714 = vcmp.ge.f32.partialorder %v434, 0.0
      %vm715 = vcmp.ge.f32.partialorder %v439, 0.0
      %vm716 = vcmp.ge.f32.partialorder %v442, 0.0
      %vm717 = vcmp.ge.f32.partialorder %v447, 0.0
      %vm718 = vcmp.ge.f32.partialorder %v450, 0.0
      %vm719 = vcmp.ge.f32.partialorder %v455, 0.0
      %vm720 = vcmp.ge.f32.partialorder %v458, 0.0
      %vm721 = vcmp.ge.f32.partialorder %v463, 0.0
      %vm722 = vcmp.ge.f32.partialorder %v466, 0.0
      %vm723 = vcmp.ge.f32.partialorder %v471, 0.0
      %vm724 = vcmp.ge.f32.partialorder %v474, 0.0
      %vm725 = vcmp.ge.f32.partialorder %v479, 0.0
      %vm726 = vcmp.ge.f32.partialorder %v482, 0.0
      %vm727 = vcmp.ge.f32.partialorder %v487, 0.0
      %vm728 = vcmp.ge.f32.partialorder %v490, 0.0
      %vm729 = vcmp.ge.f32.partialorder %v495, 0.0
      %vm730 = vcmp.ge.f32.partialorder %v498, 0.0
      %vm731 = vcmp.ge.f32.partialorder %v503, 0.0
      %vm732 = vcmp.ge.f32.partialorder %v506, 0.0
      %v733 = vmul.f32 %v574, %v669
      %v734 = vmul.f32 %v576, %v670
      %v735 = vmul.f32 %v578, %v671
      %v736 = vmul.f32 %v580, %v672
      %v737 = vmul.f32 %v582, %v673
      %v738 = vmul.f32 %v584, %v674
      %v739 = vmul.f32 %v586, %v675
      %v740 = vmul.f32 %v588, %v676
      %v741 = vmul.f32 %v590, %v677
      %v742 = vmul.f32 %v592, %v678
      %v743 = vmul.f32 %v594, %v679
      %v744 = vmul.f32 %v596, %v680
      %v745 = vmul.f32 %v598, %v681
      %v746 = vmul.f32 %v600, %v682
      %v747 = vmul.f32 %v602, %v683
      %v748 = vmul.f32 %v604, %v684
      %v749 = vmul.f32 %v606, %v685
      %v750 = vmul.f32 %v608, %v686
      %v751 = vmul.f32 %v610, %v687
      %v752 = vmul.f32 %v612, %v688
      %v753 = vmul.f32 %v614, %v689
      %v754 = vmul.f32 %v616, %v690
      %v755 = vmul.f32 %v618, %v691
      %v756 = vmul.f32 %v620, %v692
      %v757 = vmul.f32 %v622, %v693
      %v758 = vmul.f32 %v624, %v694
      %v759 = vmul.f32 %v626, %v695
      %v760 = vmul.f32 %v628, %v696
      %v761 = vmul.f32 %v630, %v697
      %v762 = vmul.f32 %v632, %v698
      %v763 = vmul.f32 %v634, %v699
      %v764 = vmul.f32 %v636, %v700
      %v765 = vsel %vm701, %v669, %v733
      %v766 = vsel %vm702, %v670, %v734
      %v767 = vsel %vm703, %v671, %v735
      %v768 = vsel %vm704, %v672, %v736
      %v769 = vsel %vm705, %v673, %v737
      %v770 = vsel %vm706, %v674, %v738
      %v771 = vsel %vm707, %v675, %v739
      %v772 = vsel %vm708, %v676, %v740
      %v773 = vsel %vm709, %v677, %v741
      %v774 = vsel %vm710, %v678, %v742
      %v775 = vsel %vm711, %v679, %v743
      %v776 = vsel %vm712, %v680, %v744
      %v777 = vsel %vm713, %v681, %v745
      %v778 = vsel %vm714, %v682, %v746
      %v779 = vsel %vm715, %v683, %v747
      %v780 = vsel %vm716, %v684, %v748
      %v781 = vsel %vm717, %v685, %v749
      %v782 = vsel %vm718, %v686, %v750
      %v783 = vsel %vm719, %v687, %v751
      %v784 = vsel %vm720, %v688, %v752
      %v785 = vsel %vm721, %v689, %v753
      %v786 = vsel %vm722, %v690, %v754
      %v787 = vsel %vm723, %v691, %v755
      %v788 = vsel %vm724, %v692, %v756
      %v789 = vsel %vm725, %v693, %v757
      %v790 = vsel %vm726, %v694, %v758
      %v791 = vsel %vm727, %v695, %v759
      %v792 = vsel %vm728, %v696, %v760
      %v793 = vsel %vm729, %v697, %v761
      %v794 = vsel %vm730, %v698, %v762
      %v795 = vsel %vm731, %v699, %v763
      %v796 = vsel %vm732, %v700, %v764
      %v797 = vmul.f32 %v383, %v765
      %v798 = vmul.f32 %v386, %v766
      %v799 = vmul.f32 %v391, %v767
      %v800 = vmul.f32 %v394, %v768
      %v801 = vmul.f32 %v399, %v769
      %v802 = vmul.f32 %v402, %v770
      %v803 = vmul.f32 %v407, %v771
      %v804 = vmul.f32 %v410, %v772
      %v805 = vmul.f32 %v415, %v773
      %v806 = vmul.f32 %v418, %v774
      %v807 = vmul.f32 %v423, %v775
      %v808 = vmul.f32 %v426, %v776
      %v809 = vmul.f32 %v431, %v777
      %v810 = vmul.f32 %v434, %v778
      %v811 = vmul.f32 %v439, %v779
      %v812 = vmul.f32 %v442, %v780
      %v813 = vmul.f32 %v447, %v781
      %v814 = vmul.f32 %v450, %v782
      %v815 = vmul.f32 %v455, %v783
      %v816 = vmul.f32 %v458, %v784
      %v817 = vmul.f32 %v463, %v785
      %v818 = vmul.f32 %v466, %v786
      %v819 = vmul.f32 %v471, %v787
      %v820 = vmul.f32 %v474, %v788
      %v821 = vmul.f32 %v479, %v789
      %v822 = vmul.f32 %v482, %v790
      %v823 = vmul.f32 %v487, %v791
      %v824 = vmul.f32 %v490, %v792
      %v825 = vmul.f32 %v495, %v793
      %v826 = vmul.f32 %v498, %v794
      %v827 = vmul.f32 %v503, %v795
      %v828 = vmul.f32 %v506, %v796
      %v829 = vpack.c.bf16 %v798, %v797
      %v830 = vpack.c.bf16 %v800, %v799
      %v831 = vpack.c.bf16 %v802, %v801
      %v832 = vpack.c.bf16 %v804, %v803
      %v833 = vpack.c.bf16 %v806, %v805
      %v834 = vpack.c.bf16 %v808, %v807
      %v835 = vpack.c.bf16 %v810, %v809
      %v836 = vpack.c.bf16 %v812, %v811
      %v837 = vpack.c.bf16 %v814, %v813
      %v838 = vpack.c.bf16 %v816, %v815
      %v839 = vpack.c.bf16 %v818, %v817
      %v840 = vpack.c.bf16 %v820, %v819
      %v841 = vpack.c.bf16 %v822, %v821
      %v842 = vpack.c.bf16 %v824, %v823
      %v843 = vpack.c.bf16 %v826, %v825
      %v844 = vpack.c.bf16 %v828, %v827
      %v861 = vunpack.c.l.b16 %v829
      %v862 = vunpack.c.h.b16 %v829
      %v863 = vunpack.c.l.b16 %v830
      %v864 = vunpack.c.h.b16 %v830
      %v865 = vunpack.c.l.b16 %v831
      %v866 = vunpack.c.h.b16 %v831
      %v867 = vunpack.c.l.b16 %v832
      %v868 = vunpack.c.h.b16 %v832
      %v869 = vunpack.c.l.b16 %v833
      %v870 = vunpack.c.h.b16 %v833
      %v871 = vunpack.c.l.b16 %v834
      %v872 = vunpack.c.h.b16 %v834
      %v873 = vunpack.c.l.b16 %v835
      %v874 = vunpack.c.h.b16 %v835
      %v875 = vunpack.c.l.b16 %v836
      %v876 = vunpack.c.h.b16 %v836
      %v877 = vunpack.c.l.b16 %v837
      %v878 = vunpack.c.h.b16 %v837
      %v879 = vunpack.c.l.b16 %v838
      %v880 = vunpack.c.h.b16 %v838
      %v881 = vunpack.c.l.b16 %v839
      %v882 = vunpack.c.h.b16 %v839
      %v883 = vunpack.c.l.b16 %v840
      %v884 = vunpack.c.h.b16 %v840
      %v885 = vunpack.c.l.b16 %v841
      %v886 = vunpack.c.h.b16 %v841
      %v887 = vunpack.c.l.b16 %v842
      %v888 = vunpack.c.h.b16 %v842
      %v889 = vunpack.c.l.b16 %v843
      %v890 = vunpack.c.h.b16 %v843
      %v891 = vunpack.c.l.b16 %v844
      %v892 = vunpack.c.h.b16 %v844
      %v893 = vpack.c.b16 %v861, %v861
      %v894 = vpack.c.b16 %v862, %v862
      %v895 = vpack.c.b16 %v863, %v863
      %v896 = vpack.c.b16 %v864, %v864
      %v897 = vpack.c.b16 %v865, %v865
      %v898 = vpack.c.b16 %v866, %v866
      %v899 = vpack.c.b16 %v867, %v867
      %v900 = vpack.c.b16 %v868, %v868
      %v901 = vpack.c.b16 %v869, %v869
      %v902 = vpack.c.b16 %v870, %v870
      %v903 = vpack.c.b16 %v871, %v871
      %v904 = vpack.c.b16 %v872, %v872
      %v905 = vpack.c.b16 %v873, %v873
      %v906 = vpack.c.b16 %v874, %v874
      %v907 = vpack.c.b16 %v875, %v875
      %v908 = vpack.c.b16 %v876, %v876
      %v909 = vpack.c.b16 %v877, %v877
      %v910 = vpack.c.b16 %v878, %v878
      %v911 = vpack.c.b16 %v879, %v879
      %v912 = vpack.c.b16 %v880, %v880
      %v913 = vpack.c.b16 %v881, %v881
      %v914 = vpack.c.b16 %v882, %v882
      %v915 = vpack.c.b16 %v883, %v883
      %v916 = vpack.c.b16 %v884, %v884
      %v917 = vpack.c.b16 %v885, %v885
      %v918 = vpack.c.b16 %v886, %v886
      %v919 = vpack.c.b16 %v887, %v887
      %v920 = vpack.c.b16 %v888, %v888
      %v921 = vpack.c.b16 %v889, %v889
      %v922 = vpack.c.b16 %v890, %v890
      %v923 = vpack.c.b16 %v891, %v891
      %v924 = vpack.c.b16 %v892, %v892
      %vm957 = vcmask 27648
      %958 = vst.msk [vmem:[%s172] sm:$0xf] %vm957, %v893
      %959 = vst.msk [vmem:[%s172 + $0x4] sm:$0xf] %vm957, %v894
      %960 = vst.msk [vmem:[%s172 + $0x8] sm:$0xf] %vm957, %v895
      %961 = vst.msk [vmem:[%s172 + $0xc] sm:$0xf] %vm957, %v896
      %962 = vst.msk [vmem:[%s172 + $0x10] sm:$0xf] %vm957, %v897
      %963 = vst.msk [vmem:[%s172 + $0x14] sm:$0xf] %vm957, %v898
      %964 = vst.msk [vmem:[%s172 + $0x18] sm:$0xf] %vm957, %v899
      %965 = vst.msk [vmem:[%s172 + $0x1c] sm:$0xf] %vm957, %v900
      %966 = vst.msk [vmem:[%s172 + $0x20] sm:$0xf] %vm957, %v901
      %967 = vst.msk [vmem:[%s172 + $0x24] sm:$0xf] %vm957, %v902
      %968 = vst.msk [vmem:[%s172 + $0x28] sm:$0xf] %vm957, %v903
      %969 = vst.msk [vmem:[%s172 + $0x2c] sm:$0xf] %vm957, %v904
      %970 = vst.msk [vmem:[%s172 + $0x30] sm:$0xf] %vm957, %v905
      %971 = vst.msk [vmem:[%s172 + $0x34] sm:$0xf] %vm957, %v906
      %972 = vst.msk [vmem:[%s172 + $0x38] sm:$0xf] %vm957, %v907
      %973 = vst.msk [vmem:[%s172 + $0x3c] sm:$0xf] %vm957, %v908
      %974 = vst.msk [vmem:[%s172 + $0x40] sm:$0xf] %vm957, %v909
      %975 = vst.msk [vmem:[%s172 + $0x44] sm:$0xf] %vm957, %v910
      %976 = vst.msk [vmem:[%s172 + $0x48] sm:$0xf] %vm957, %v911
      %977 = vst.msk [vmem:[%s172 + $0x4c] sm:$0xf] %vm957, %v912
      %978 = vst.msk [vmem:[%s172 + $0x50] sm:$0xf] %vm957, %v913
      %979 = vst.msk [vmem:[%s172 + $0x54] sm:$0xf] %vm957, %v914
      %980 = vst.msk [vmem:[%s172 + $0x58] sm:$0xf] %vm957, %v915
      %981 = vst.msk [vmem:[%s172 + $0x5c] sm:$0xf] %vm957, %v916
      %982 = vst.msk [vmem:[%s172 + $0x60] sm:$0xf] %vm957, %v917
      %983 = vst.msk [vmem:[%s172 + $0x64] sm:$0xf] %vm957, %v918
      %984 = vst.msk [vmem:[%s172 + $0x68] sm:$0xf] %vm957, %v919
      %985 = vst.msk [vmem:[%s172 + $0x6c] sm:$0xf] %vm957, %v920
      %986 = vst.msk [vmem:[%s172 + $0x70] sm:$0xf] %vm957, %v921
      %987 = vst.msk [vmem:[%s172 + $0x74] sm:$0xf] %vm957, %v922
      %988 = vst.msk [vmem:[%s172 + $0x78] sm:$0xf] %vm957, %v923
      %989 = vst.msk [vmem:[%s172 + $0x7c] sm:$0xf] %vm957, %v924
      %s990 = smul.u32 32, %s14
      %p991 = scmp.lt.s32.totalorder %s990, 63
      %s992 = scalar_select %p991, %s990, 63
      %s993 = smul.addr %s992, 4
      %s994 = scalar_lea.vmem %s3, %s993
      // Predicated region
      $region33: #{csp_layer_forward.5} parent=31 // pred_check
        %p995 = pneg %p100
      $region34: #{csp_layer_forward.5} parent=31 // pred_check_branch
        %997 = sbr.rel (%p995) target = $region36
      $region35: #{csp_layer_forward.5} parent=31 // pred_region
        %s998 = smul.u32 32, %s14
      $region36: #{csp_layer_forward.5} parent=31 // pred_fallthru
        _
    $region32: #{csp_layer_forward.5} parent=5 // pred_fallthru
      _
    %p999 = scmp.le.s32.totalorder 2, %s9
    // Predicated region
    $region37: #{csp_layer_forward.5} parent=5 // pred_check
      %p1000 = pneg %p999
    $region38: #{csp_layer_forward.5} parent=5 // pred_check_branch
      %1002 = sbr.rel (%p1000) target = $region40
    $region39: #{csp_layer_forward.5} parent=5 // pred_region
      %s1003 = ssub.s32 %s9, 2
      // Predicated region
      $region41: #{csp_layer_forward.5} parent=39 // pred_check
        %p1004 = pneg %p106
      $region42: #{csp_layer_forward.5} parent=39 // pred_check_branch
        %1006 = sbr.rel (%p1004) target = $region44
      $region43: #{csp_layer_forward.5} parent=39 // pred_region
        %s1007 = smul.u32 32, %s15
        %p1008 = scmp.lt.s32.totalorder %s1007, 63
        %s1009 = scalar_select %p1008, %s1007, 63
        %s1010 = smul.addr %s1009, 4
        %s1011 = scalar_lea.vmem %s3, %s1010
      $region44: #{csp_layer_forward.5} parent=39 // pred_fallthru
        _
    $region40: #{csp_layer_forward.5} parent=5 // pred_fallthru
      _
  $region6: #{csp_layer_forward.5} parent=0 // loop_footer
    %s13 = sadd.s32 1, %s9
  $region7: #{csp_layer_forward.5} parent=0 // loop_footer_branch
    %8 = sbr.rel target = $region3
  $region8: #{csp_layer_forward.5} parent=0 // loop_exit
    _

// kernel: csp_layer_forward.7
$region0: #{csp_layer_forward.7}
  #allocation0 [shape = 'u32[]', space=smem, size = 0x4, offset = 0x4, fixed_abs, tag = 'smem constant byte address 0x4 - core index']
  #allocation1 [shape = 'u32[144,128]{1,0:T(1,128)}', space=vmem, size = 0x12000, scoped, tag = 'internal scratch']
  %s0 = inlined_call_operand.vmem [shape: bf16[512,4], index: 0, kind: input, shape index: {}]
  %s1 = inlined_call_operand.vmem [shape: bf16[512,4], index: 1, kind: input, shape index: {}]
  %s2 = inlined_call_operand.vmem [shape: bf16[4,8], index: 2, kind: input, shape index: {}]
  %s3 = inlined_call_operand.vmem [shape: bf16[4,8], index: 3, kind: input, shape index: {}]
  %s4 = inlined_call_operand.vmem [shape: f32[1,8], index: 4, kind: input, shape index: {}]
  %s5 = inlined_call_operand.vmem [shape: f32[512,8], index: 5, kind: output, shape index: {}]
  %s6 = sld [smem:[#allocation0]]
  $region53: #{csp_layer_forward.7} parent=0
    _
  %s8 = ssub.s32 1, %s6
  %s9 = scalar_select 0, %s8, %s6
  loop: start=0, step=1, limit=4
  $region2: #{csp_layer_forward.7} parent=0 // loop_pre_header
    _
  $region3: #{csp_layer_forward.7} parent=0 // loop_header
    %s11 = sphi 0, %s15
    %p12 = scmp.ge.s32.totalorder %s11, 4
    %s21 = sphi 0, %s23
    %s24 = sphi 0, %s21
    %s25 = sphi 0, %s24
    %s41 = sphi 0, %s25
    %s47 = sphi 0, %s49
    %s50 = sphi 0, %s47
    %s51 = sphi 0, %s50
    %s67 = sphi 0, %s51
    %s71 = sphi 0, %s71
    %s73 = sphi 0, %s71
    %s74 = sphi 0, %s73
    %s88 = sphi 0, %s74
    %s92 = sphi 0, %s92
    %s94 = sphi 0, %s92
    %s95 = sphi 0, %s94
    %s109 = sphi 0, %s95
    %s113 = sphi 0, %s113
    %s115 = sphi 0, %s113
    %s116 = sphi 0, %s115
    %s130 = sphi 0, %s116
    %s136 = sphi 0, %s138
    %s139 = sphi 0, %s136
    %s140 = sphi 0, %s139
    %s156 = sphi 0, %s140
  $region4: #{csp_layer_forward.7} parent=0 // loop_header_branch
    %14 = sbr.rel (%p12) target = $region8
  $region5: #{csp_layer_forward.7} parent=0 // loop_body
    %s16 = ssub.s32 %s11, 1
    %s17 = ssub.s32 %s11, 2
    %s18 = sadd.s32 %s11, 1
    %s19 = ssub.s32 %s11, %s18
    %p20 = scmp.eq.s32.totalorder %s19, 0
    %s22 = sadd.s32 %s21, 1
    %s23 = scalar_select %p20, %s21, %s22
    %p26 = pneg %p20
    %p27 = scmp.eq.s32.totalorder %s11, 1
    %p28 = por %p26, %p27
    %p29 = scmp.ne.s32.totalorder %s21, %s24
    %p30 = scmp.eq.s32.totalorder %s11, 0
    %p31 = por %p29, %p30
    %p32 = scmp.ne.s32.totalorder %s21, %s24
    %p33 = scmp.eq.s32.totalorder %s16, 1
    %p34 = por %p32, %p33
    %p35 = scmp.ne.s32.totalorder %s24, %s25
    %p36 = scmp.eq.s32.totalorder %s16, 0
    %p37 = por %p35, %p36
    %p38 = scmp.ne.s32.totalorder %s24, %s25
    %p39 = scmp.eq.s32.totalorder %s17, 1
    %p40 = por %p38, %p39
    %p42 = scmp.ne.s32.totalorder %s25, %s41
    %p43 = scmp.eq.s32.totalorder %s17, 0
    %p44 = por %p42, %p43
    %s45 = ssub.s32 %s11, %s18
    %p46 = scmp.eq.s32.totalorder %s45, 0
    %s48 = sadd.s32 %s47, 1
    %s49 = scalar_select %p46, %s47, %s48
    %p52 = pneg %p46
    %p53 = scmp.eq.s32.totalorder %s11, 1
    %p54 = por %p52, %p53
    %p55 = scmp.ne.s32.totalorder %s47, %s50
    %p56 = scmp.eq.s32.totalorder %s11, 0
    %p57 = por %p55, %p56
    %p58 = scmp.ne.s32.totalorder %s47, %s50
    %p59 = scmp.eq.s32.totalorder %s16, 1
    %p60 = por %p58, %p59
    %p61 = scmp.ne.s32.totalorder %s50, %s51
    %p62 = scmp.eq.s32.totalorder %s16, 0
    %p63 = por %p61, %p62
    %p64 = scmp.ne.s32.totalorder %s50, %s51
    %p65 = scmp.eq.s32.totalorder %s17, 1
    %p66 = por %p64, %p65
    %p68 = scmp.ne.s32.totalorder %s51, %s67
    %p69 = scmp.eq.s32.totalorder %s17, 0
    %p70 = por %p68, %p69
    %s72 = sadd.s32 %s71, 1
    %p75 = scmp.eq.s32.totalorder %s11, 1
    %p76 = scmp.ne.s32.totalorder %s71, %s73
    %p77 = scmp.eq.s32.totalorder %s11, 0
    %p78 = por %p76, %p77
    %p79 = scmp.ne.s32.totalorder %s71, %s73
    %p80 = scmp.eq.s32.totalorder %s16, 1
    %p81 = por %p79, %p80
    %p82 = scmp.ne.s32.totalorder %s73, %s74
    %p83 = scmp.eq.s32.totalorder %s16, 0
    %p84 = por %p82, %p83
    %p85 = scmp.ne.s32.totalorder %s73, %s74
    %p86 = scmp.eq.s32.totalorder %s17, 1
    %p87 = por %p85, %p86
    %p89 = scmp.ne.s32.totalorder %s74, %s88
    %p90 = scmp.eq.s32.totalorder %s17, 0
    %p91 = por %p89, %p90
    %s93 = sadd.s32 %s92, 1
    %p96 = scmp.eq.s32.totalorder %s11, 1
    %p97 = scmp.ne.s32.totalorder %s92, %s94
    %p98 = scmp.eq.s32.totalorder %s11, 0
    %p99 = por %p97, %p98
    %p100 = scmp.ne.s32.totalorder %s92, %s94
    %p101 = scmp.eq.s32.totalorder %s16, 1
    %p102 = por %p100, %p101
    %p103 = scmp.ne.s32.totalorder %s94, %s95
    %p104 = scmp.eq.s32.totalorder %s16, 0
    %p105 = por %p103, %p104
    %p106 = scmp.ne.s32.totalorder %s94, %s95
    %p107 = scmp.eq.s32.totalorder %s17, 1
    %p108 = por %p106, %p107
    %p110 = scmp.ne.s32.totalorder %s95, %s109
    %p111 = scmp.eq.s32.totalorder %s17, 0
    %p112 = por %p110, %p111
    %s114 = sadd.s32 %s113, 1
    %p117 = scmp.eq.s32.totalorder %s11, 1
    %p118 = scmp.ne.s32.totalorder %s113, %s115
    %p119 = scmp.eq.s32.totalorder %s11, 0
    %p120 = por %p118, %p119
    %p121 = scmp.ne.s32.totalorder %s113, %s115
    %p122 = scmp.eq.s32.totalorder %s16, 1
    %p123 = por %p121, %p122
    %p124 = scmp.ne.s32.totalorder %s115, %s116
    %p125 = scmp.eq.s32.totalorder %s16, 0
    %p126 = por %p124, %p125
    %p127 = scmp.ne.s32.totalorder %s115, %s116
    %p128 = scmp.eq.s32.totalorder %s17, 1
    %p129 = por %p127, %p128
    %p131 = scmp.ne.s32.totalorder %s116, %s130
    %p132 = scmp.eq.s32.totalorder %s17, 0
    %p133 = por %p131, %p132
    %s134 = ssub.s32 %s11, %s18
    %p135 = scmp.eq.s32.totalorder %s134, 0
    %s137 = sadd.s32 %s136, 1
    %s138 = scalar_select %p135, %s136, %s137
    %p141 = pneg %p135
    %p142 = scmp.eq.s32.totalorder %s11, 1
    %p143 = por %p141, %p142
    %p144 = scmp.ne.s32.totalorder %s136, %s139
    %p145 = scmp.eq.s32.totalorder %s11, 0
    %p146 = por %p144, %p145
    %p147 = scmp.ne.s32.totalorder %s136, %s139
    %p148 = scmp.eq.s32.totalorder %s16, 1
    %p149 = por %p147, %p148
    %p150 = scmp.ne.s32.totalorder %s139, %s140
    %p151 = scmp.eq.s32.totalorder %s16, 0
    %p152 = por %p150, %p151
    %p153 = scmp.ne.s32.totalorder %s139, %s140
    %p154 = scmp.eq.s32.totalorder %s17, 1
    %p155 = por %p153, %p154
    %p157 = scmp.ne.s32.totalorder %s140, %s156
    %p158 = scmp.eq.s32.totalorder %s17, 0
    %p159 = por %p157, %p158
    %p160 = scmp.le.s32.totalorder 1, %s11
    %p161 = scmp.lt.s32.totalorder %s11, 3
    %p162 = pnand %p160, %p161
    %p163 = pneg %p162
    // Predicated region
    $region9: #{csp_layer_forward.7} parent=5 // pred_check
      _
    $region10: #{csp_layer_forward.7} parent=5 // pred_check_branch
      %165 = sbr.rel (%p162) target = $region12
    $region11: #{csp_layer_forward.7} parent=5 // pred_region
      %s166 = ssub.s32 %s11, 1
      // Predicated region
      $region13: #{csp_layer_forward.7} parent=11 // pred_check
        %p167 = pneg %p84
      $region14: #{csp_layer_forward.7} parent=11 // pred_check_branch
        %169 = sbr.rel (%p167) target = $region16
      $region15: #{csp_layer_forward.7} parent=11 // pred_region
        _
      $region16: #{csp_layer_forward.7} parent=11 // pred_fallthru
        _
      // Predicated region
      $region17: #{csp_layer_forward.7} parent=11 // pred_check
        %p170 = pneg %p105
      $region18: #{csp_layer_forward.7} parent=11 // pred_check_branch
        %172 = sbr.rel (%p170) target = $region20
      $region19: #{csp_layer_forward.7} parent=11 // pred_region
        _
      $region20: #{csp_layer_forward.7} parent=11 // pred_fallthru
        _
      // Predicated region
      $region21: #{csp_layer_forward.7} parent=11 // pred_check
        %p173 = pneg %p126
      $region22: #{csp_layer_forward.7} parent=11 // pred_check_branch
        %175 = sbr.rel (%p173) target = $region24
      $region23: #{csp_layer_forward.7} parent=11 // pred_region
        _
      $region24: #{csp_layer_forward.7} parent=11 // pred_fallthru
        _
    $region12: #{csp_layer_forward.7} parent=5 // pred_fallthru
      _
    %p176 = scmp.lt.s32.totalorder %s11, 2
    // Predicated region
    $region25: #{csp_layer_forward.7} parent=5 // pred_check
      %p177 = pneg %p176
    $region26: #{csp_layer_forward.7} parent=5 // pred_check_branch
      %179 = sbr.rel (%p177) target = $region28
    $region27: #{csp_layer_forward.7} parent=5 // pred_region
      // Predicated region
      $region29: #{csp_layer_forward.7} parent=27 // pred_check
        %p180 = pneg %p31
      $region30: #{csp_layer_forward.7} parent=27 // pred_check_branch
        %182 = sbr.rel (%p180) target = $region32
      $region31: #{csp_layer_forward.7} parent=27 // pred_region
        %s183 = smul.u32 32, %s11
        %p184 = scmp.lt.s32.totalorder %s183, 63
        %s185 = scalar_select %p184, %s183, 63
        %s186 = smul.addr %s185, 4
        %s187 = scalar_lea.vmem %s0, %s186
        %s188 = smul.u32 32, %s11
      $region32: #{csp_layer_forward.7} parent=27 // pred_fallthru
        _
      // Predicated region
      $region33: #{csp_layer_forward.7} parent=27 // pred_check
        %p189 = pneg %p57
      $region34: #{csp_layer_forward.7} parent=27 // pred_check_branch
        %191 = sbr.rel (%p189) target = $region36
      $region35: #{csp_layer_forward.7} parent=27 // pred_region
        %s192 = smul.u32 32, %s11
        %p193 = scmp.lt.s32.totalorder %s192, 63
        %s194 = scalar_select %p193, %s192, 63
        %s195 = smul.addr %s194, 4
        %s196 = scalar_lea.vmem %s1, %s195
        %s197 = smul.u32 32, %s11
      $region36: #{csp_layer_forward.7} parent=27 // pred_fallthru
        _
    $region28: #{csp_layer_forward.7} parent=5 // pred_fallthru
      _
    %p198 = scmp.le.s32.totalorder 1, %s11
    %p199 = scmp.lt.s32.totalorder %s11, 3
    %p200 = pnand %p198, %p199
    %p201 = pneg %p200
    // Predicated region
    $region37: #{csp_layer_forward.7} parent=5 // pred_check
      _
    $region38: #{csp_layer_forward.7} parent=5 // pred_check_branch
      %203 = sbr.rel (%p200) target = $region40
    $region39: #{csp_layer_forward.7} parent=5 // pred_region
      %s204 = ssub.s32 %s11, 1
      %s205 = smul.u32 32, %s16
      %p206 = scmp.lt.s32.totalorder %s205, 63
      %s207 = scalar_select %p206, %s205, 63
      %s208 = smul.addr %s207, 4
      %s209 = scalar_lea.vmem %s0, %s208
      %p210 = pneg %p37
      %p211 = pneg %p34
      %s212 = smul.u32 32, %s16
      %p213 = scmp.lt.s32.totalorder %s212, 63
      %s214 = scalar_select %p213, %s212, 63
      %s215 = smul.addr %s214, 4
      %s216 = scalar_lea.vmem %s1, %s215
      %p217 = pneg %p63
      %p218 = pneg %p60
      %p219 = pneg %p84
      %p220 = pneg %p81
      %p221 = pneg %p105
      %p222 = pneg %p102
      %p223 = pneg %p126
      %p224 = pneg %p123
      %p225 = pneg %p152
      %p226 = pneg %p149
      %s227 = smul.u32 32, %s16
      %p228 = scmp.lt.s32.totalorder %s227, 63
      %s229 = scalar_select %p228, %s227, 63
      %s230 = smul.addr %s229, 8
      %s231 = scalar_lea.vmem %s5, %s230
      %s232 = smul.u32 32, %s16
      %p233 = scmp.lt.s32.totalorder %s232, 63
      %s234 = scalar_select %p233, %s232, 63
      %s235 = smul.addr %s234, 4
      %s236 = scalar_lea.vmem %s0, %s235
      %s237 = smul.u32 32, %s16
      %s238 = smul.u32 32, %s16
      %p239 = scmp.lt.s32.totalorder %s238, 63
      %s240 = scalar_select %p239, %s238, 63
      %s241 = smul.addr %s240, 4
      %s242 = scalar_lea.vmem %s1, %s241
      %s243 = smul.u32 32, %s16
      %s244 = smul.u32 32, %s16
      %p245 = scmp.lt.s32.totalorder %s244, 63
      %s246 = scalar_select %p245, %s244, 63
      %s247 = smul.addr %s246, 8
      %s248 = scalar_lea.vmem %s5, %s247
      %s249 = smul.u32 32, %s16
      %v251 = vld [vmem:[%s236] sm:$0xf]
      %v252 = vld [vmem:[%s236 + $0x4] sm:$0xf]
      %v253 = vld [vmem:[%s236 + $0x8] sm:$0xf]
      %v254 = vld [vmem:[%s236 + $0xc] sm:$0xf]
      %v255 = vld [vmem:[%s236 + $0x10] sm:$0xf]
      %v256 = vld [vmem:[%s236 + $0x14] sm:$0xf]
      %v257 = vld [vmem:[%s236 + $0x18] sm:$0xf]
      %v258 = vld [vmem:[%s236 + $0x1c] sm:$0xf]
      %v259 = vld [vmem:[%s236 + $0x20] sm:$0xf]
      %v260 = vld [vmem:[%s236 + $0x24] sm:$0xf]
      %v261 = vld [vmem:[%s236 + $0x28] sm:$0xf]
      %v262 = vld [vmem:[%s236 + $0x2c] sm:$0xf]
      %v263 = vld [vmem:[%s236 + $0x30] sm:$0xf]
      %v264 = vld [vmem:[%s236 + $0x34] sm:$0xf]
      %v265 = vld [vmem:[%s236 + $0x38] sm:$0xf]
      %v266 = vld [vmem:[%s236 + $0x3c] sm:$0xf]
      %v267 = vld [vmem:[%s236 + $0x40] sm:$0xf]
      %v268 = vld [vmem:[%s236 + $0x44] sm:$0xf]
      %v269 = vld [vmem:[%s236 + $0x48] sm:$0xf]
      %v270 = vld [vmem:[%s236 + $0x4c] sm:$0xf]
      %v271 = vld [vmem:[%s236 + $0x50] sm:$0xf]
      %v272 = vld [vmem:[%s236 + $0x54] sm:$0xf]
      %v273 = vld [vmem:[%s236 + $0x58] sm:$0xf]
      %v274 = vld [vmem:[%s236 + $0x5c] sm:$0xf]
      %v275 = vld [vmem:[%s236 + $0x60] sm:$0xf]
      %v276 = vld [vmem:[%s236 + $0x64] sm:$0xf]
      %v277 = vld [vmem:[%s236 + $0x68] sm:$0xf]
      %v278 = vld [vmem:[%s236 + $0x6c] sm:$0xf]
      %v279 = vld [vmem:[%s236 + $0x70] sm:$0xf]
      %v280 = vld [vmem:[%s236 + $0x74] sm:$0xf]
      %v281 = vld [vmem:[%s236 + $0x78] sm:$0xf]
      %v282 = vld [vmem:[%s236 + $0x7c] sm:$0xf]
      %v283 = vld [vmem:[%s2] sm:$0x3]
      %v284 = vld [vmem:[%s242] sm:$0xf]
      %v285 = vld [vmem:[%s242 + $0x4] sm:$0xf]
      %v286 = vld [vmem:[%s242 + $0x8] sm:$0xf]
      %v287 = vld [vmem:[%s242 + $0xc] sm:$0xf]
      %v288 = vld [vmem:[%s242 + $0x10] sm:$0xf]
      %v289 = vld [vmem:[%s242 + $0x14] sm:$0xf]
      %v290 = vld [vmem:[%s242 + $0x18] sm:$0xf]
      %v291 = vld [vmem:[%s242 + $0x1c] sm:$0xf]
      %v292 = vld [vmem:[%s242 + $0x20] sm:$0xf]
      %v293 = vld [vmem:[%s242 + $0x24] sm:$0xf]
      %v294 = vld [vmem:[%s242 + $0x28] sm:$0xf]
      %v295 = vld [vmem:[%s242 + $0x2c] sm:$0xf]
      %v296 = vld [vmem:[%s242 + $0x30] sm:$0xf]
      %v297 = vld [vmem:[%s242 + $0x34] sm:$0xf]
      %v298 = vld [vmem:[%s242 + $0x38] sm:$0xf]
      %v299 = vld [vmem:[%s242 + $0x3c] sm:$0xf]
      %v300 = vld [vmem:[%s242 + $0x40] sm:$0xf]
      %v301 = vld [vmem:[%s242 + $0x44] sm:$0xf]
      %v302 = vld [vmem:[%s242 + $0x48] sm:$0xf]
      %v303 = vld [vmem:[%s242 + $0x4c] sm:$0xf]
      %v304 = vld [vmem:[%s242 + $0x50] sm:$0xf]
      %v305 = vld [vmem:[%s242 + $0x54] sm:$0xf]
      %v306 = vld [vmem:[%s242 + $0x58] sm:$0xf]
      %v307 = vld [vmem:[%s242 + $0x5c] sm:$0xf]
      %v308 = vld [vmem:[%s242 + $0x60] sm:$0xf]
      %v309 = vld [vmem:[%s242 + $0x64] sm:$0xf]
      %v310 = vld [vmem:[%s242 + $0x68] sm:$0xf]
      %v311 = vld [vmem:[%s242 + $0x6c] sm:$0xf]
      %v312 = vld [vmem:[%s242 + $0x70] sm:$0xf]
      %v313 = vld [vmem:[%s242 + $0x74] sm:$0xf]
      %v314 = vld [vmem:[%s242 + $0x78] sm:$0xf]
      %v315 = vld [vmem:[%s242 + $0x7c] sm:$0xf]
      %v316 = vld [vmem:[%s3] sm:$0x3]
      %v349 = vunpack.c.l.b16 %v284
      %v350 = vunpack.c.l.b16 %v285
      %v351 = vunpack.c.l.b16 %v286
      %v352 = vunpack.c.l.b16 %v287
      %v353 = vunpack.c.l.b16 %v288
      %v354 = vunpack.c.l.b16 %v289
      %v355 = vunpack.c.l.b16 %v290
      %v356 = vunpack.c.l.b16 %v291
      %v357 = vunpack.c.l.b16 %v292
      %v358 = vunpack.c.l.b16 %v293
      %v359 = vunpack.c.l.b16 %v294
      %v360 = vunpack.c.l.b16 %v295
      %v361 = vunpack.c.l.b16 %v296
      %v362 = vunpack.c.l.b16 %v297
      %v363 = vunpack.c.l.b16 %v298
      %v364 = vunpack.c.l.b16 %v299
      %v365 = vunpack.c.l.b16 %v300
      %v366 = vunpack.c.l.b16 %v301
      %v367 = vunpack.c.l.b16 %v302
      %v368 = vunpack.c.l.b16 %v303
      %v369 = vunpack.c.l.b16 %v304
      %v370 = vunpack.c.l.b16 %v305
      %v371 = vunpack.c.l.b16 %v306
      %v372 = vunpack.c.l.b16 %v307
      %v373 = vunpack.c.l.b16 %v308
      %v374 = vunpack.c.l.b16 %v309
      %v375 = vunpack.c.l.b16 %v310
      %v376 = vunpack.c.l.b16 %v311
      %v377 = vunpack.c.l.b16 %v312
      %v378 = vunpack.c.l.b16 %v313
      %v379 = vunpack.c.l.b16 %v314
      %v380 = vunpack.c.l.b16 %v315
      %v381 = vpack.c.b16 %v350, %v349
      %v382 = vpack.c.b16 %v352, %v351
      %v383 = vpack.c.b16 %v354, %v353
      %v384 = vpack.c.b16 %v356, %v355
      %v385 = vpack.c.b16 %v358, %v357
      %v386 = vpack.c.b16 %v360, %v359
      %v387 = vpack.c.b16 %v362, %v361
      %v388 = vpack.c.b16 %v364, %v363
      %v389 = vpack.c.b16 %v366, %v365
      %v390 = vpack.c.b16 %v368, %v367
      %v391 = vpack.c.b16 %v370, %v369
      %v392 = vpack.c.b16 %v372, %v371
      %v393 = vpack.c.b16 %v374, %v373
      %v394 = vpack.c.b16 %v376, %v375
      %v395 = vpack.c.b16 %v378, %v377
      %v396 = vpack.c.b16 %v380, %v379
      %vm397 = vcmask 31744
      %v399 = vsel %vm397, %v381, 0
      %v402 = vsel %vm397, %v382, 0
      %v405 = vsel %vm397, %v383, 0
      %v408 = vsel %vm397, %v384, 0
      %v411 = vsel %vm397, %v385, 0
      %v414 = vsel %vm397, %v386, 0
      %v417 = vsel %vm397, %v387, 0
      %v420 = vsel %vm397, %v388, 0
      %v423 = vsel %vm397, %v389, 0
      %v426 = vsel %vm397, %v390, 0
      %v429 = vsel %vm397, %v391, 0
      %v432 = vsel %vm397, %v392, 0
      %v435 = vsel %vm397, %v393, 0
      %v438 = vsel %vm397, %v394, 0
      %v441 = vsel %vm397, %v395, 0
      %v444 = vsel %vm397, %v396, 0
      %vm446 = vcmask 1041408
      %v448 = vsel %vm446, %v316, 0
      %450 = vmatprep.subr.bf16.mxu0 0
      %451 = vmatpush1.bf16.msra.mxu0 %v448
      %452 = vmatprep.subr.bf16.mxu0 0
      %453 = vmatpush1.bf16.msra.mxu0 0
      %454 = vmatprep.subr.bf16.mxu0 0
      %455 = vmatpush1.bf16.msra.mxu0 0
      %456 = vmatprep.subr.bf16.mxu0 0
      %457 = vmatpush1.bf16.msra.mxu0 0
      %458 = vmatprep.subr.bf16.mxu0 0
      %459 = vmatpush1.bf16.msra.mxu0 0
      %460 = vmatprep.subr.bf16.mxu0 0
      %461 = vmatpush1.bf16.msra.mxu0 0
      %462 = vmatprep.subr.bf16.mxu0 0
      %463 = vmatpush1.bf16.msra.mxu0 0
      %464 = vmatprep.subr.bf16.mxu0 0
      %465 = vmatpush1.bf16.msra.mxu0 0
      %466 = vmatprep.subr.bf16.mxu0 0
      %467 = vmatpush1.bf16.msra.mxu0 0
      %468 = vmatprep.subr.bf16.mxu0 0
      %469 = vmatpush1.bf16.msra.mxu0 0
      %470 = vmatprep.subr.bf16.mxu0 0
      %471 = vmatpush1.bf16.msra.mxu0 0
      %472 = vmatprep.subr.bf16.mxu0 0
      %473 = vmatpush1.bf16.msra.mxu0 0
      %474 = vmatprep.subr.bf16.mxu0 0
      %475 = vmatpush1.bf16.msra.mxu0 0
      %476 = vmatprep.subr.bf16.mxu0 0
      %477 = vmatpush1.bf16.msra.mxu0 0
      %478 = vmatprep.subr.bf16.mxu0 0
      %479 = vmatpush1.bf16.msra.mxu0 0
      %480 = vmatprep.subr.bf16.mxu0 0
      %481 = vmatpush1.bf16.msra.mxu0 0
      %482 = vmatprep.mubr.bf16.mxu0 0
      %483 = vmatmul.mubr.bf16.gmra.mrb[0].mxu0 %v399
      %v484 = vpop.f32.mrb[0].mxu0
      %v485 = vadd.f32 0.0, %v484
      %v486 = vpop.f32.mrb[0].mxu0
      %v487 = vpop.f32.mrb[0].mxu0
      %v488 = vadd.f32 0.0, %v487
      %v489 = vpop.f32.mrb[0].mxu0
      %490 = vmatprep.mubr.bf16.mxu0 0
      %491 = vmatmul.mubr.bf16.gmra.mrb[0].mxu0 %v402
      %v492 = vpop.f32.mrb[0].mxu0
      %v493 = vadd.f32 0.0, %v492
      %v494 = vpop.f32.mrb[0].mxu0
      %v495 = vpop.f32.mrb[0].mxu0
      %v496 = vadd.f32 0.0, %v495
      %v497 = vpop.f32.mrb[0].mxu0
      %498 = vmatprep.mubr.bf16.mxu0 0
      %499 = vmatmul.mubr.bf16.gmra.mrb[0].mxu0 %v405
      %v500 = vpop.f32.mrb[0].mxu0
      %v501 = vadd.f32 0.0, %v500
      %v502 = vpop.f32.mrb[0].mxu0
      %v503 = vpop.f32.mrb[0].mxu0
      %v504 = vadd.f32 0.0, %v503
      %v505 = vpop.f32.mrb[0].mxu0
      %506 = vmatprep.mubr.bf16.mxu0 0
      %507 = vmatmul.mubr.bf16.gmra.mrb[0].mxu0 %v408
      %v508 = vpop.f32.mrb[0].mxu0
      %v509 = vadd.f32 0.0, %v508
      %v510 = vpop.f32.mrb[0].mxu0
      %v511 = vpop.f32.mrb[0].mxu0
      %v512 = vadd.f32 0.0, %v511
      %v513 = vpop.f32.mrb[0].mxu0
      %514 = vmatprep.mubr.bf16.mxu0 0
      %515 = vmatmul.mubr.bf16.gmra.mrb[0].mxu0 %v411
      %v516 = vpop.f32.mrb[0].mxu0
      %v517 = vadd.f32 0.0, %v516
      %v518 = vpop.f32.mrb[0].mxu0
      %v519 = vpop.f32.mrb[0].mxu0
      %v520 = vadd.f32 0.0, %v519
      %v521 = vpop.f32.mrb[0].mxu0
      %522 = vmatprep.mubr.bf16.mxu0 0
      %523 = vmatmul.mubr.bf16.gmra.mrb[0].mxu0 %v414
      %v524 = vpop.f32.mrb[0].mxu0
      %v525 = vadd.f32 0.0, %v524
      %v526 = vpop.f32.mrb[0].mxu0
      %v527 = vpop.f32.mrb[0].mxu0
      %v528 = vadd.f32 0.0, %v527
      %v529 = vpop.f32.mrb[0].mxu0
      %530 = vmatprep.mubr.bf16.mxu0 0
      %531 = vmatmul.mubr.bf16.gmra.mrb[0].mxu0 %v417
      %v532 = vpop.f32.mrb[0].mxu0
      %v533 = vadd.f32 0.0, %v532
      %v534 = vpop.f32.mrb[0].mxu0
      %v535 = vpop.f32.mrb[0].mxu0
      %v536 = vadd.f32 0.0, %v535
      %v537 = vpop.f32.mrb[0].mxu0
      %538 = vmatprep.mubr.bf16.mxu0 0
      %539 = vmatmul.mubr.bf16.gmra.mrb[0].mxu0 %v420
      %v540 = vpop.f32.mrb[0].mxu0
      %v541 = vadd.f32 0.0, %v540
      %v542 = vpop.f32.mrb[0].mxu0
      %v543 = vpop.f32.mrb[0].mxu0
      %v544 = vadd.f32 0.0, %v543
      %v545 = vpop.f32.mrb[0].mxu0
      %546 = vmatprep.mubr.bf16.mxu0 0
      %547 = vmatmul.mubr.bf16.gmra.mrb[0].mxu0 %v423
      %v548 = vpop.f32.mrb[0].mxu0
      %v549 = vadd.f32 0.0, %v548
      %v550 = vpop.f32.mrb[0].mxu0
      %v551 = vpop.f32.mrb[0].mxu0
      %v552 = vadd.f32 0.0, %v551
      %v553 = vpop.f32.mrb[0].mxu0
      %554 = vmatprep.mubr.bf16.mxu0 0
      %555 = vmatmul.mubr.bf16.gmra.mrb[0].mxu0 %v426
      %v556 = vpop.f32.mrb[0].mxu0
      %v557 = vadd.f32 0.0, %v556
      %v558 = vpop.f32.mrb[0].mxu0
      %v559 = vpop.f32.mrb[0].mxu0
      %v560 = vadd.f32 0.0, %v559
      %v561 = vpop.f32.mrb[0].mxu0
      %562 = vmatprep.mubr.bf16.mxu0 0
      %563 = vmatmul.mubr.bf16.gmra.mrb[0].mxu0 %v429
      %v564 = vpop.f32.mrb[0].mxu0
      %v565 = vadd.f32 0.0, %v564
      %v566 = vpop.f32.mrb[0].mxu0
      %v567 = vpop.f32.mrb[0].mxu0
      %v568 = vadd.f32 0.0, %v567
      %v569 = vpop.f32.mrb[0].mxu0
      %570 = vmatprep.mubr.bf16.mxu0 0
      %571 = vmatmul.mubr.bf16.gmra.mrb[0].mxu0 %v432
      %v572 = vpop.f32.mrb[0].mxu0
      %v573 = vadd.f32 0.0, %v572
      %v574 = vpop.f32.mrb[0].mxu0
      %v575 = vpop.f32.mrb[0].mxu0
      %v576 = vadd.f32 0.0, %v575
      %v577 = vpop.f32.mrb[0].mxu0
      %578 = vmatprep.mubr.bf16.mxu0 0
      %579 = vmatmul.mubr.bf16.gmra.mrb[0].mxu0 %v435
      %v580 = vpop.f32.mrb[0].mxu0
      %v581 = vadd.f32 0.0, %v580
      %v582 = vpop.f32.mrb[0].mxu0
      %v583 = vpop.f32.mrb[0].mxu0
      %v584 = vadd.f32 0.0, %v583
      %v585 = vpop.f32.mrb[0].mxu0
      %586 = vmatprep.mubr.bf16.mxu0 0
      %587 = vmatmul.mubr.bf16.gmra.mrb[0].mxu0 %v438
      %v588 = vpop.f32.mrb[0].mxu0
      %v589 = vadd.f32 0.0, %v588
      %v590 = vpop.f32.mrb[0].mxu0
      %v591 = vpop.f32.mrb[0].mxu0
      %v592 = vadd.f32 0.0, %v591
      %v593 = vpop.f32.mrb[0].mxu0
      %594 = vmatprep.mubr.bf16.mxu0 0
      %595 = vmatmul.mubr.bf16.gmra.mrb[0].mxu0 %v441
      %v596 = vpop.f32.mrb[0].mxu0
      %v597 = vadd.f32 0.0, %v596
      %v598 = vpop.f32.mrb[0].mxu0
      %v599 = vpop.f32.mrb[0].mxu0
      %v600 = vadd.f32 0.0, %v599
      %v601 = vpop.f32.mrb[0].mxu0
      %602 = vmatprep.mubr.bf16.mxu0 0
      %603 = vmatmul.mubr.bf16.gmra.mrb[0].mxu0 %v444
      %v604 = vpop.f32.mrb[0].mxu0
      %v605 = vadd.f32 0.0, %v604
      %v606 = vpop.f32.mrb[0].mxu0
      %v607 = vpop.f32.mrb[0].mxu0
      %v608 = vadd.f32 0.0, %v607
      %v609 = vpop.f32.mrb[0].mxu0
      %610 = vdwg.mxu0
      %v643 = vunpack.c.l.b16 %v251
      %v644 = vunpack.c.l.b16 %v252
      %v645 = vunpack.c.l.b16 %v253
      %v646 = vunpack.c.l.b16 %v254
      %v647 = vunpack.c.l.b16 %v255
      %v648 = vunpack.c.l.b16 %v256
      %v649 = vunpack.c.l.b16 %v257
      %v650 = vunpack.c.l.b16 %v258
      %v651 = vunpack.c.l.b16 %v259
      %v652 = vunpack.c.l.b16 %v260
      %v653 = vunpack.c.l.b16 %v261
      %v654 = vunpack.c.l.b16 %v262
      %v655 = vunpack.c.l.b16 %v263
      %v656 = vunpack.c.l.b16 %v264
      %v657 = vunpack.c.l.b16 %v265
      %v658 = vunpack.c.l.b16 %v266
      %v659 = vunpack.c.l.b16 %v267
      %v660 = vunpack.c.l.b16 %v268
      %v661 = vunpack.c.l.b16 %v269
      %v662 = vunpack.c.l.b16 %v270
      %v663 = vunpack.c.l.b16 %v271
      %v664 = vunpack.c.l.b16 %v272
      %v665 = vunpack.c.l.b16 %v273
      %v666 = vunpack.c.l.b16 %v274
      %v667 = vunpack.c.l.b16 %v275
      %v668 = vunpack.c.l.b16 %v276
      %v669 = vunpack.c.l.b16 %v277
      %v670 = vunpack.c.l.b16 %v278
      %v671 = vunpack.c.l.b16 %v279
      %v672 = vunpack.c.l.b16 %v280
      %v673 = vunpack.c.l.b16 %v281
      %v674 = vunpack.c.l.b16 %v282
      %v675 = vpack.c.b16 %v644, %v643
      %v676 = vpack.c.b16 %v646, %v645
      %v677 = vpack.c.b16 %v648, %v647
      %v678 = vpack.c.b16 %v650, %v649
      %v679 = vpack.c.b16 %v652, %v651
      %v680 = vpack.c.b16 %v654, %v653
      %v681 = vpack.c.b16 %v656, %v655
      %v682 = vpack.c.b16 %v658, %v657
      %v683 = vpack.c.b16 %v660, %v659
      %v684 = vpack.c.b16 %v662, %v661
      %v685 = vpack.c.b16 %v664, %v663
      %v686 = vpack.c.b16 %v666, %v665
      %v687 = vpack.c.b16 %v668, %v667
      %v688 = vpack.c.b16 %v670, %v669
      %v689 = vpack.c.b16 %v672, %v671
      %v690 = vpack.c.b16 %v674, %v673
      %v692 = vsel %vm397, %v675, 0
      %v695 = vsel %vm397, %v676, 0
      %v698 = vsel %vm397, %v677, 0
      %v701 = vsel %vm397, %v678, 0
      %v704 = vsel %vm397, %v679, 0
      %v707 = vsel %vm397, %v680, 0
      %v710 = vsel %vm397, %v681, 0
      %v713 = vsel %vm397, %v682, 0
      %v716 = vsel %vm397, %v683, 0
      %v719 = vsel %vm397, %v684, 0
      %v722 = vsel %vm397, %v685, 0
      %v725 = vsel %vm397, %v686, 0
      %v728 = vsel %vm397, %v687, 0
      %v731 = vsel %vm397, %v688, 0
      %v734 = vsel %vm397, %v689, 0
      %v737 = vsel %vm397, %v690, 0
      %v740 = vsel %vm446, %v283, 0
      %742 = vmatprep.subr.bf16.mxu0 0
      %743 = vmatpush1.bf16.msra.mxu0 %v740
      %744 = vmatprep.subr.bf16.mxu0 0
      %745 = vmatpush1.bf16.msra.mxu0 0
      %746 = vmatprep.subr.bf16.mxu0 0
      %747 = vmatpush1.bf16.msra.mxu0 0
      %748 = vmatprep.subr.bf16.mxu0 0
      %749 = vmatpush1.bf16.msra.mxu0 0
      %750 = vmatprep.subr.bf16.mxu0 0
      %751 = vmatpush1.bf16.msra.mxu0 0
      %752 = vmatprep.subr.bf16.mxu0 0
      %753 = vmatpush1.bf16.msra.mxu0 0
      %754 = vmatprep.subr.bf16.mxu0 0
      %755 = vmatpush1.bf16.msra.mxu0 0
      %756 = vmatprep.subr.bf16.mxu0 0
      %757 = vmatpush1.bf16.msra.mxu0 0
      %758 = vmatprep.subr.bf16.mxu0 0
      %759 = vmatpush1.bf16.msra.mxu0 0
      %760 = vmatprep.subr.bf16.mxu0 0
      %761 = vmatpush1.bf16.msra.mxu0 0
      %762 = vmatprep.subr.bf16.mxu0 0
      %763 = vmatpush1.bf16.msra.mxu0 0
      %764 = vmatprep.subr.bf16.mxu0 0
      %765 = vmatpush1.bf16.msra.mxu0 0
      %766 = vmatprep.subr.bf16.mxu0 0
      %767 = vmatpush1.bf16.msra.mxu0 0
      %768 = vmatprep.subr.bf16.mxu0 0
      %769 = vmatpush1.bf16.msra.mxu0 0
      %770 = vmatprep.subr.bf16.mxu0 0
      %771 = vmatpush1.bf16.msra.mxu0 0
      %772 = vmatprep.subr.bf16.mxu0 0
      %773 = vmatpush1.bf16.msra.mxu0 0
      %774 = vmatprep.mubr.bf16.mxu0 0
      %775 = vmatmul.mubr.bf16.gmra.mrb[0].mxu0 %v692
      %v776 = vpop.f32.mrb[0].mxu0
      %v777 = vadd.f32 %v485, %v776
      %v778 = vpop.f32.mrb[0].mxu0
      %v779 = vpop.f32.mrb[0].mxu0
      %v780 = vadd.f32 %v488, %v779
      %v781 = vpop.f32.mrb[0].mxu0
      %782 = vmatprep.mubr.bf16.mxu0 0
      %783 = vmatmul.mubr.bf16.gmra.mrb[0].mxu0 %v695
      %v784 = vpop.f32.mrb[0].mxu0
      %v785 = vadd.f32 %v493, %v784
      %v786 = vpop.f32.mrb[0].mxu0
      %v787 = vpop.f32.mrb[0].mxu0
      %v788 = vadd.f32 %v496, %v787
      %v789 = vpop.f32.mrb[0].mxu0
      %790 = vmatprep.mubr.bf16.mxu0 0
      %791 = vmatmul.mubr.bf16.gmra.mrb[0].mxu0 %v698
      %v792 = vpop.f32.mrb[0].mxu0
      %v793 = vadd.f32 %v501, %v792
      %v794 = vpop.f32.mrb[0].mxu0
      %v795 = vpop.f32.mrb[0].mxu0
      %v796 = vadd.f32 %v504, %v795
      %v797 = vpop.f32.mrb[0].mxu0
      %798 = vmatprep.mubr.bf16.mxu0 0
      %799 = vmatmul.mubr.bf16.gmra.mrb[0].mxu0 %v701
      %v800 = vpop.f32.mrb[0].mxu0
      %v801 = vadd.f32 %v509, %v800
      %v802 = vpop.f32.mrb[0].mxu0
      %v803 = vpop.f32.mrb[0].mxu0
      %v804 = vadd.f32 %v512, %v803
      %v805 = vpop.f32.mrb[0].mxu0
      %806 = vmatprep.mubr.bf16.mxu0 0
      %807 = vmatmul.mubr.bf16.gmra.mrb[0].mxu0 %v704
      %v808 = vpop.f32.mrb[0].mxu0
      %v809 = vadd.f32 %v517, %v808
      %v810 = vpop.f32.mrb[0].mxu0
      %v811 = vpop.f32.mrb[0].mxu0
      %v812 = vadd.f32 %v520, %v811
      %v813 = vpop.f32.mrb[0].mxu0
      %814 = vmatprep.mubr.bf16.mxu0 0
      %815 = vmatmul.mubr.bf16.gmra.mrb[0].mxu0 %v707
      %v816 = vpop.f32.mrb[0].mxu0
      %v817 = vadd.f32 %v525, %v816
      %v818 = vpop.f32.mrb[0].mxu0
      %v819 = vpop.f32.mrb[0].mxu0
      %v820 = vadd.f32 %v528, %v819
      %v821 = vpop.f32.mrb[0].mxu0
      %822 = vmatprep.mubr.bf16.mxu0 0
      %823 = vmatmul.mubr.bf16.gmra.mrb[0].mxu0 %v710
      %v824 = vpop.f32.mrb[0].mxu0
      %v825 = vadd.f32 %v533, %v824
      %v826 = vpop.f32.mrb[0].mxu0
      %v827 = vpop.f32.mrb[0].mxu0
      %v828 = vadd.f32 %v536, %v827
      %v829 = vpop.f32.mrb[0].mxu0
      %830 = vmatprep.mubr.bf16.mxu0 0
      %831 = vmatmul.mubr.bf16.gmra.mrb[0].mxu0 %v713
      %v832 = vpop.f32.mrb[0].mxu0
      %v833 = vadd.f32 %v541, %v832
      %v834 = vpop.f32.mrb[0].mxu0
      %v835 = vpop.f32.mrb[0].mxu0
      %v836 = vadd.f32 %v544, %v835
      %v837 = vpop.f32.mrb[0].mxu0
      %838 = vmatprep.mubr.bf16.mxu0 0
      %839 = vmatmul.mubr.bf16.gmra.mrb[0].mxu0 %v716
      %v840 = vpop.f32.mrb[0].mxu0
      %v841 = vadd.f32 %v549, %v840
      %v842 = vpop.f32.mrb[0].mxu0
      %v843 = vpop.f32.mrb[0].mxu0
      %v844 = vadd.f32 %v552, %v843
      %v845 = vpop.f32.mrb[0].mxu0
      %846 = vmatprep.mubr.bf16.mxu0 0
      %847 = vmatmul.mubr.bf16.gmra.mrb[0].mxu0 %v719
      %v848 = vpop.f32.mrb[0].mxu0
      %v849 = vadd.f32 %v557, %v848
      %v850 = vpop.f32.mrb[0].mxu0
      %v851 = vpop.f32.mrb[0].mxu0
      %v852 = vadd.f32 %v560, %v851
      %v853 = vpop.f32.mrb[0].mxu0
      %854 = vmatprep.mubr.bf16.mxu0 0
      %855 = vmatmul.mubr.bf16.gmra.mrb[0].mxu0 %v722
      %v856 = vpop.f32.mrb[0].mxu0
      %v857 = vadd.f32 %v565, %v856
      %v858 = vpop.f32.mrb[0].mxu0
      %v859 = vpop.f32.mrb[0].mxu0
      %v860 = vadd.f32 %v568, %v859
      %v861 = vpop.f32.mrb[0].mxu0
      %862 = vmatprep.mubr.bf16.mxu0 0
      %863 = vmatmul.mubr.bf16.gmra.mrb[0].mxu0 %v725
      %v864 = vpop.f32.mrb[0].mxu0
      %v865 = vadd.f32 %v573, %v864
      %v866 = vpop.f32.mrb[0].mxu0
      %v867 = vpop.f32.mrb[0].mxu0
      %v868 = vadd.f32 %v576, %v867
      %v869 = vpop.f32.mrb[0].mxu0
      %870 = vmatprep.mubr.bf16.mxu0 0
      %871 = vmatmul.mubr.bf16.gmra.mrb[0].mxu0 %v728
      %v872 = vpop.f32.mrb[0].mxu0
      %v873 = vadd.f32 %v581, %v872
      %v874 = vpop.f32.mrb[0].mxu0
      %v875 = vpop.f32.mrb[0].mxu0
      %v876 = vadd.f32 %v584, %v875
      %v877 = vpop.f32.mrb[0].mxu0
      %878 = vmatprep.mubr.bf16.mxu0 0
      %879 = vmatmul.mubr.bf16.gmra.mrb[0].mxu0 %v731
      %v880 = vpop.f32.mrb[0].mxu0
      %v881 = vadd.f32 %v589, %v880
      %v882 = vpop.f32.mrb[0].mxu0
      %v883 = vpop.f32.mrb[0].mxu0
      %v884 = vadd.f32 %v592, %v883
      %v885 = vpop.f32.mrb[0].mxu0
      %886 = vmatprep.mubr.bf16.mxu0 0
      %887 = vmatmul.mubr.bf16.gmra.mrb[0].mxu0 %v734
      %v888 = vpop.f32.mrb[0].mxu0
      %v889 = vadd.f32 %v597, %v888
      %v890 = vpop.f32.mrb[0].mxu0
      %v891 = vpop.f32.mrb[0].mxu0
      %v892 = vadd.f32 %v600, %v891
      %v893 = vpop.f32.mrb[0].mxu0
      %894 = vmatprep.mubr.bf16.mxu0 0
      %895 = vmatmul.mubr.bf16.gmra.mrb[0].mxu0 %v737
      %v896 = vpop.f32.mrb[0].mxu0
      %v897 = vadd.f32 %v605, %v896
      %v898 = vpop.f32.mrb[0].mxu0
      %v899 = vpop.f32.mrb[0].mxu0
      %v900 = vadd.f32 %v608, %v899
      %v901 = vpop.f32.mrb[0].mxu0
      %902 = vdwg.mxu0
      %v903 = vld [vmem:[%s4] sm:$0x1]
      %v905 = vlaneseq
      %v906 = vshrl.u32 %v905, 7
      %v907 = vsub.s32 0, %v906
      %v908 = vrot.slane %v903, %v907
      %v910 = vadd.f32 %v777, %v908
      %v911 = vadd.f32 %v780, %v908
      %v912 = vadd.f32 %v785, %v908
      %v913 = vadd.f32 %v788, %v908
      %v914 = vadd.f32 %v793, %v908
      %v915 = vadd.f32 %v796, %v908
      %v916 = vadd.f32 %v801, %v908
      %v917 = vadd.f32 %v804, %v908
      %v918 = vadd.f32 %v809, %v908
      %v919 = vadd.f32 %v812, %v908
      %v920 = vadd.f32 %v817, %v908
      %v921 = vadd.f32 %v820, %v908
      %v922 = vadd.f32 %v825, %v908
      %v923 = vadd.f32 %v828, %v908
      %v924 = vadd.f32 %v833, %v908
      %v925 = vadd.f32 %v836, %v908
      %v926 = vadd.f32 %v841, %v908
      %v927 = vadd.f32 %v844, %v908
      %v928 = vadd.f32 %v849, %v908
      %v929 = vadd.f32 %v852, %v908
      %v930 = vadd.f32 %v857, %v908
      %v931 = vadd.f32 %v860, %v908
      %v932 = vadd.f32 %v865, %v908
      %v933 = vadd.f32 %v868, %v908
      %v934 = vadd.f32 %v873, %v908
      %v935 = vadd.f32 %v876, %v908
      %v936 = vadd.f32 %v881, %v908
      %v937 = vadd.f32 %v884, %v908
      %v938 = vadd.f32 %v889, %v908
      %v939 = vadd.f32 %v892, %v908
      %v940 = vadd.f32 %v897, %v908
      %v941 = vadd.f32 %v900, %v908
      %v942 = vand.u32 2147483647, %v910
      %v943 = vand.u32 2147483647, %v911
      %v944 = vand.u32 2147483647, %v912
      %v945 = vand.u32 2147483647, %v913
      %v946 = vand.u32 2147483647, %v914
      %v947 = vand.u32 2147483647, %v915
      %v948 = vand.u32 2147483647, %v916
      %v949 = vand.u32 2147483647, %v917
      %v950 = vand.u32 2147483647, %v918
      %v951 = vand.u32 2147483647, %v919
      %v952 = vand.u32 2147483647, %v920
      %v953 = vand.u32 2147483647, %v921
      %v954 = vand.u32 2147483647, %v922
      %v955 = vand.u32 2147483647, %v923
      %v956 = vand.u32 2147483647, %v924
      %v957 = vand.u32 2147483647, %v925
      %v958 = vand.u32 2147483647, %v926
      %v959 = vand.u32 2147483647, %v927
      %v960 = vand.u32 2147483647, %v928
      %v961 = vand.u32 2147483647, %v929
      %v962 = vand.u32 2147483647, %v930
      %v963 = vand.u32 2147483647, %v931
      %v964 = vand.u32 2147483647, %v932
      %v965 = vand.u32 2147483647, %v933
      %v966 = vand.u32 2147483647, %v934
      %v967 = vand.u32 2147483647, %v935
      %v968 = vand.u32 2147483647, %v936
      %v969 = vand.u32 2147483647, %v937
      %v970 = vand.u32 2147483647, %v938
      %v971 = vand.u32 2147483647, %v939
      %v972 = vand.u32 2147483647, %v940
      %v973 = vand.u32 2147483647, %v941
      %v974 = vsub.f32 0.0, %v942
      %v975 = vsub.f32 0.0, %v943
      %v976 = vsub.f32 0.0, %v944
      %v977 = vsub.f32 0.0, %v945
      %v978 = vsub.f32 0.0, %v946
      %v979 = vsub.f32 0.0, %v947
      %v980 = vsub.f32 0.0, %v948
      %v981 = vsub.f32 0.0, %v949
      %v982 = vsub.f32 0.0, %v950
      %v983 = vsub.f32 0.0, %v951
      %v984 = vsub.f32 0.0, %v952
      %v985 = vsub.f32 0.0, %v953
      %v986 = vsub.f32 0.0, %v954
      %v987 = vsub.f32 0.0, %v955
      %v988 = vsub.f32 0.0, %v956
      %v989 = vsub.f32 0.0, %v957
      %v990 = vsub.f32 0.0, %v958
      %v991 = vsub.f32 0.0, %v959
      %v992 = vsub.f32 0.0, %v960
      %v993 = vsub.f32 0.0, %v961
      %v994 = vsub.f32 0.0, %v962
      %v995 = vsub.f32 0.0, %v963
      %v996 = vsub.f32 0.0, %v964
      %v997 = vsub.f32 0.0, %v965
      %v998 = vsub.f32 0.0, %v966
      %v999 = vsub.f32 0.0, %v967
      %v1000 = vsub.f32 0.0, %v968
      %v1001 = vsub.f32 0.0, %v969
      %v1002 = vsub.f32 0.0, %v970
      %v1003 = vsub.f32 0.0, %v971
      %v1004 = vsub.f32 0.0, %v972
      %v1005 = vsub.f32 0.0, %v973
      %v1006 = vmul.f32 %v974, 1.442695
      %v1007 = vpow.pop %v1006
      %v1008 = vmul.f32 %v975, 1.442695
      %v1009 = vpow.pop %v1008
      %v1010 = vmul.f32 %v976, 1.442695
      %v1011 = vpow.pop %v1010
      %v1012 = vmul.f32 %v977, 1.442695
      %v1013 = vpow.pop %v1012
      %v1014 = vmul.f32 %v978, 1.442695
      %v1015 = vpow.pop %v1014
      %v1016 = vmul.f32 %v979, 1.442695
      %v1017 = vpow.pop %v1016
      %v1018 = vmul.f32 %v980, 1.442695
      %v1019 = vpow.pop %v1018
      %v1020 = vmul.f32 %v981, 1.442695
      %v1021 = vpow.pop %v1020
      %v1022 = vmul.f32 %v982, 1.442695
      %v1023 = vpow.pop %v1022
      %v1024 = vmul.f32 %v983, 1.442695
      %v1025 = vpow.pop %v1024
      %v1026 = vmul.f32 %v984, 1.442695
      %v1027 = vpow.pop %v1026
      %v1028 = vmul.f32 %v985, 1.442695
      %v1029 = vpow.pop %v1028
      %v1030 = vmul.f32 %v986, 1.442695
      %v1031 = vpow.pop %v1030
      %v1032 = vmul.f32 %v987, 1.442695
      %v1033 = vpow.pop %v1032
      %v1034 = vmul.f32 %v988, 1.442695
      %v1035 = vpow.pop %v1034
      %v1036 = vmul.f32 %v989, 1.442695
      %v1037 = vpow.pop %v1036
      %v1038 = vmul.f32 %v990, 1.442695
      %v1039 = vpow.pop %v1038
      %v1040 = vmul.f32 %v991, 1.442695
      %v1041 = vpow.pop %v1040
      %v1042 = vmul.f32 %v992, 1.442695
      %v1043 = vpow.pop %v1042
      %v1044 = vmul.f32 %v993, 1.442695
      %v1045 = vpow.pop %v1044
      %v1046 = vmul.f32 %v994, 1.442695
      %v1047 = vpow.pop %v1046
      %v1048 = vmul.f32 %v995, 1.442695
      %v1049 = vpow.pop %v1048
      %v1050 = vmul.f32 %v996, 1.442695
      %v1051 = vpow.pop %v1050
      %v1052 = vmul.f32 %v997, 1.442695
      %v1053 = vpow.pop %v1052
      %v1054 = vmul.f32 %v998, 1.442695
      %v1055 = vpow.pop %v1054
      %v1056 = vmul.f32 %v999, 1.442695
      %v1057 = vpow.pop %v1056
      %v1058 = vmul.f32 %v1000, 1.442695
      %v1059 = vpow.pop %v1058
      %v1060 = vmul.f32 %v1001, 1.442695
      %v1061 = vpow.pop %v1060
      %v1062 = vmul.f32 %v1002, 1.442695
      %v1063 = vpow.pop %v1062
      %v1064 = vmul.f32 %v1003, 1.442695
      %v1065 = vpow.pop %v1064
      %v1066 = vmul.f32 %v1004, 1.442695
      %v1067 = vpow.pop %v1066
      %v1068 = vmul.f32 %v1005, 1.442695
      %v1069 = vpow.pop %v1068
      %v1070 = vadd.f32 %v1007, 1.0
      %v1071 = vadd.f32 %v1009, 1.0
      %v1072 = vadd.f32 %v1011, 1.0
      %v1073 = vadd.f32 %v1013, 1.0
      %v1074 = vadd.f32 %v1015, 1.0
      %v1075 = vadd.f32 %v1017, 1.0
      %v1076 = vadd.f32 %v1019, 1.0
      %v1077 = vadd.f32 %v1021, 1.0
      %v1078 = vadd.f32 %v1023, 1.0
      %v1079 = vadd.f32 %v1025, 1.0
      %v1080 = vadd.f32 %v1027, 1.0
      %v1081 = vadd.f32 %v1029, 1.0
      %v1082 = vadd.f32 %v1031, 1.0
      %v1083 = vadd.f32 %v1033, 1.0
      %v1084 = vadd.f32 %v1035, 1.0
      %v1085 = vadd.f32 %v1037, 1.0
      %v1086 = vadd.f32 %v1039, 1.0
      %v1087 = vadd.f32 %v1041, 1.0
      %v1088 = vadd.f32 %v1043, 1.0
      %v1089 = vadd.f32 %v1045, 1.0
      %v1090 = vadd.f32 %v1047, 1.0
      %v1091 = vadd.f32 %v1049, 1.0
      %v1092 = vadd.f32 %v1051, 1.0
      %v1093 = vadd.f32 %v1053, 1.0
      %v1094 = vadd.f32 %v1055, 1.0
      %v1095 = vadd.f32 %v1057, 1.0
      %v1096 = vadd.f32 %v1059, 1.0
      %v1097 = vadd.f32 %v1061, 1.0
      %v1098 = vadd.f32 %v1063, 1.0
      %v1099 = vadd.f32 %v1065, 1.0
      %v1100 = vadd.f32 %v1067, 1.0
      %v1101 = vadd.f32 %v1069, 1.0
      %v1102 = vrcp.pop %v1070
      %v1103 = vrcp.pop %v1071
      %v1104 = vrcp.pop %v1072
      %v1105 = vrcp.pop %v1073
      %v1106 = vrcp.pop %v1074
      %v1107 = vrcp.pop %v1075
      %v1108 = vrcp.pop %v1076
      %v1109 = vrcp.pop %v1077
      %v1110 = vrcp.pop %v1078
      %v1111 = vrcp.pop %v1079
      %v1112 = vrcp.pop %v1080
      %v1113 = vrcp.pop %v1081
      %v1114 = vrcp.pop %v1082
      %v1115 = vrcp.pop %v1083
      %v1116 = vrcp.pop %v1084
      %v1117 = vrcp.pop %v1085
      %v1118 = vrcp.pop %v1086
      %v1119 = vrcp.pop %v1087
      %v1120 = vrcp.pop %v1088
      %v1121 = vrcp.pop %v1089
      %v1122 = vrcp.pop %v1090
      %v1123 = vrcp.pop %v1091
      %v1124 = vrcp.pop %v1092
      %v1125 = vrcp.pop %v1093
      %v1126 = vrcp.pop %v1094
      %v1127 = vrcp.pop %v1095
      %v1128 = vrcp.pop %v1096
      %v1129 = vrcp.pop %v1097
      %v1130 = vrcp.pop %v1098
      %v1131 = vrcp.pop %v1099
      %v1132 = vrcp.pop %v1100
      %v1133 = vrcp.pop %v1101
      %vm1134 = vcmp.ge.f32.partialorder %v910, 0.0
      %vm1135 = vcmp.ge.f32.partialorder %v911, 0.0
      %vm1136 = vcmp.ge.f32.partialorder %v912, 0.0
      %vm1137 = vcmp.ge.f32.partialorder %v913, 0.0
      %vm1138 = vcmp.ge.f32.partialorder %v914, 0.0
      %vm1139 = vcmp.ge.f32.partialorder %v915, 0.0
      %vm1140 = vcmp.ge.f32.partialorder %v916, 0.0
      %vm1141 = vcmp.ge.f32.partialorder %v917, 0.0
      %vm1142 = vcmp.ge.f32.partialorder %v918, 0.0
      %vm1143 = vcmp.ge.f32.partialorder %v919, 0.0
      %vm1144 = vcmp.ge.f32.partialorder %v920, 0.0
      %vm1145 = vcmp.ge.f32.partialorder %v921, 0.0
      %vm1146 = vcmp.ge.f32.partialorder %v922, 0.0
      %vm1147 = vcmp.ge.f32.partialorder %v923, 0.0
      %vm1148 = vcmp.ge.f32.partialorder %v924, 0.0
      %vm1149 = vcmp.ge.f32.partialorder %v925, 0.0
      %vm1150 = vcmp.ge.f32.partialorder %v926, 0.0
      %vm1151 = vcmp.ge.f32.partialorder %v927, 0.0
      %vm1152 = vcmp.ge.f32.partialorder %v928, 0.0
      %vm1153 = vcmp.ge.f32.partialorder %v929, 0.0
      %vm1154 = vcmp.ge.f32.partialorder %v930, 0.0
      %vm1155 = vcmp.ge.f32.partialorder %v931, 0.0
      %vm1156 = vcmp.ge.f32.partialorder %v932, 0.0
      %vm1157 = vcmp.ge.f32.partialorder %v933, 0.0
      %vm1158 = vcmp.ge.f32.partialorder %v934, 0.0
      %vm1159 = vcmp.ge.f32.partialorder %v935, 0.0
      %vm1160 = vcmp.ge.f32.partialorder %v936, 0.0
      %vm1161 = vcmp.ge.f32.partialorder %v937, 0.0
      %vm1162 = vcmp.ge.f32.partialorder %v938, 0.0
      %vm1163 = vcmp.ge.f32.partialorder %v939, 0.0
      %vm1164 = vcmp.ge.f32.partialorder %v940, 0.0
      %vm1165 = vcmp.ge.f32.partialorder %v941, 0.0
      %v1166 = vmul.f32 %v1007, %v1102
      %v1167 = vmul.f32 %v1009, %v1103
      %v1168 = vmul.f32 %v1011, %v1104
      %v1169 = vmul.f32 %v1013, %v1105
      %v1170 = vmul.f32 %v1015, %v1106
      %v1171 = vmul.f32 %v1017, %v1107
      %v1172 = vmul.f32 %v1019, %v1108
      %v1173 = vmul.f32 %v1021, %v1109
      %v1174 = vmul.f32 %v1023, %v1110
      %v1175 = vmul.f32 %v1025, %v1111
      %v1176 = vmul.f32 %v1027, %v1112
      %v1177 = vmul.f32 %v1029, %v1113
      %v1178 = vmul.f32 %v1031, %v1114
      %v1179 = vmul.f32 %v1033, %v1115
      %v1180 = vmul.f32 %v1035, %v1116
      %v1181 = vmul.f32 %v1037, %v1117
      %v1182 = vmul.f32 %v1039, %v1118
      %v1183 = vmul.f32 %v1041, %v1119
      %v1184 = vmul.f32 %v1043, %v1120
      %v1185 = vmul.f32 %v1045, %v1121
      %v1186 = vmul.f32 %v1047, %v1122
      %v1187 = vmul.f32 %v1049, %v1123
      %v1188 = vmul.f32 %v1051, %v1124
      %v1189 = vmul.f32 %v1053, %v1125
      %v1190 = vmul.f32 %v1055, %v1126
      %v1191 = vmul.f32 %v1057, %v1127
      %v1192 = vmul.f32 %v1059, %v1128
      %v1193 = vmul.f32 %v1061, %v1129
      %v1194 = vmul.f32 %v1063, %v1130
      %v1195 = vmul.f32 %v1065, %v1131
      %v1196 = vmul.f32 %v1067, %v1132
      %v1197 = vmul.f32 %v1069, %v1133
      %v1198 = vsel %vm1134, %v1102, %v1166
      %v1199 = vsel %vm1135, %v1103, %v1167
      %v1200 = vsel %vm1136, %v1104, %v1168
      %v1201 = vsel %vm1137, %v1105, %v1169
      %v1202 = vsel %vm1138, %v1106, %v1170
      %v1203 = vsel %vm1139, %v1107, %v1171
      %v1204 = vsel %vm1140, %v1108, %v1172
      %v1205 = vsel %vm1141, %v1109, %v1173
      %v1206 = vsel %vm1142, %v1110, %v1174
      %v1207 = vsel %vm1143, %v1111, %v1175
      %v1208 = vsel %vm1144, %v1112, %v1176
      %v1209 = vsel %vm1145, %v1113, %v1177
      %v1210 = vsel %vm1146, %v1114, %v1178
      %v1211 = vsel %vm1147, %v1115, %v1179
      %v1212 = vsel %vm1148, %v1116, %v1180
      %v1213 = vsel %vm1149, %v1117, %v1181
      %v1214 = vsel %vm1150, %v1118, %v1182
      %v1215 = vsel %vm1151, %v1119, %v1183
      %v1216 = vsel %vm1152, %v1120, %v1184
      %v1217 = vsel %vm1153, %v1121, %v1185
      %v1218 = vsel %vm1154, %v1122, %v1186
      %v1219 = vsel %vm1155, %v1123, %v1187
      %v1220 = vsel %vm1156, %v1124, %v1188
      %v1221 = vsel %vm1157, %v1125, %v1189
      %v1222 = vsel %vm1158, %v1126, %v1190
      %v1223 = vsel %vm1159, %v1127, %v1191
      %v1224 = vsel %vm1160, %v1128, %v1192
      %v1225 = vsel %vm1161, %v1129, %v1193
      %v1226 = vsel %vm1162, %v1130, %v1194
      %v1227 = vsel %vm1163, %v1131, %v1195
      %v1228 = vsel %vm1164, %v1132, %v1196
      %v1229 = vsel %vm1165, %v1133, %v1197
      %v1230 = vmul.f32 %v910, %v1198
      %v1231 = vmul.f32 %v911, %v1199
      %v1232 = vmul.f32 %v912, %v1200
      %v1233 = vmul.f32 %v913, %v1201
      %v1234 = vmul.f32 %v914, %v1202
      %v1235 = vmul.f32 %v915, %v1203
      %v1236 = vmul.f32 %v916, %v1204
      %v1237 = vmul.f32 %v917, %v1205
      %v1238 = vmul.f32 %v918, %v1206
      %v1239 = vmul.f32 %v919, %v1207
      %v1240 = vmul.f32 %v920, %v1208
      %v1241 = vmul.f32 %v921, %v1209
      %v1242 = vmul.f32 %v922, %v1210
      %v1243 = vmul.f32 %v923, %v1211
      %v1244 = vmul.f32 %v924, %v1212
      %v1245 = vmul.f32 %v925, %v1213
      %v1246 = vmul.f32 %v926, %v1214
      %v1247 = vmul.f32 %v927, %v1215
      %v1248 = vmul.f32 %v928, %v1216
      %v1249 = vmul.f32 %v929, %v1217
      %v1250 = vmul.f32 %v930, %v1218
      %v1251 = vmul.f32 %v931, %v1219
      %v1252 = vmul.f32 %v932, %v1220
      %v1253 = vmul.f32 %v933, %v1221
      %v1254 = vmul.f32 %v934, %v1222
      %v1255 = vmul.f32 %v935, %v1223
      %v1256 = vmul.f32 %v936, %v1224
      %v1257 = vmul.f32 %v937, %v1225
      %v1258 = vmul.f32 %v938, %v1226
      %v1259 = vmul.f32 %v939, %v1227
      %v1260 = vmul.f32 %v940, %v1228
      %v1261 = vmul.f32 %v941, %v1229
      %vm1262 = vcmask 64512
      %1263 = vst.msk [vmem:[%s248] sm:$0xff] %vm1262, %v1230
      %1264 = vst.msk [vmem:[%s248 + $0x8] sm:$0xff] %vm1262, %v1231
      %1265 = vst.msk [vmem:[%s248 + $0x10] sm:$0xff] %vm1262, %v1232
      %1266 = vst.msk [vmem:[%s248 + $0x18] sm:$0xff] %vm1262, %v1233
      %1267 = vst.msk [vmem:[%s248 + $0x20] sm:$0xff] %vm1262, %v1234
      %1268 = vst.msk [vmem:[%s248 + $0x28] sm:$0xff] %vm1262, %v1235
      %1269 = vst.msk [vmem:[%s248 + $0x30] sm:$0xff] %vm1262, %v1236
      %1270 = vst.msk [vmem:[%s248 + $0x38] sm:$0xff] %vm1262, %v1237
      %1271 = vst.msk [vmem:[%s248 + $0x40] sm:$0xff] %vm1262, %v1238
      %1272 = vst.msk [vmem:[%s248 + $0x48] sm:$0xff] %vm1262, %v1239
      %1273 = vst.msk [vmem:[%s248 + $0x50] sm:$0xff] %vm1262, %v1240
      %1274 = vst.msk [vmem:[%s248 + $0x58] sm:$0xff] %vm1262, %v1241
      %1275 = vst.msk [vmem:[%s248 + $0x60] sm:$0xff] %vm1262, %v1242
      %1276 = vst.msk [vmem:[%s248 + $0x68] sm:$0xff] %vm1262, %v1243
      %1277 = vst.msk [vmem:[%s248 + $0x70] sm:$0xff] %vm1262, %v1244
      %1278 = vst.msk [vmem:[%s248 + $0x78] sm:$0xff] %vm1262, %v1245
      %1279 = vst.msk [vmem:[%s248 + $0x80] sm:$0xff] %vm1262, %v1246
      %1280 = vst.msk [vmem:[%s248 + $0x88] sm:$0xff] %vm1262, %v1247
      %1281 = vst.msk [vmem:[%s248 + $0x90] sm:$0xff] %vm1262, %v1248
      %1282 = vst.msk [vmem:[%s248 + $0x98] sm:$0xff] %vm1262, %v1249
      %1283 = vst.msk [vmem:[%s248 + $0xa0] sm:$0xff] %vm1262, %v1250
      %1284 = vst.msk [vmem:[%s248 + $0xa8] sm:$0xff] %vm1262, %v1251
      %1285 = vst.msk [vmem:[%s248 + $0xb0] sm:$0xff] %vm1262, %v1252
      %1286 = vst.msk [vmem:[%s248 + $0xb8] sm:$0xff] %vm1262, %v1253
      %1287 = vst.msk [vmem:[%s248 + $0xc0] sm:$0xff] %vm1262, %v1254
      %1288 = vst.msk [vmem:[%s248 + $0xc8] sm:$0xff] %vm1262, %v1255
      %1289 = vst.msk [vmem:[%s248 + $0xd0] sm:$0xff] %vm1262, %v1256
      %1290 = vst.msk [vmem:[%s248 + $0xd8] sm:$0xff] %vm1262, %v1257
      %1291 = vst.msk [vmem:[%s248 + $0xe0] sm:$0xff] %vm1262, %v1258
      %1292 = vst.msk [vmem:[%s248 + $0xe8] sm:$0xff] %vm1262, %v1259
      %1293 = vst.msk [vmem:[%s248 + $0xf0] sm:$0xff] %vm1262, %v1260
      %1294 = vst.msk [vmem:[%s248 + $0xf8] sm:$0xff] %vm1262, %v1261
      %s1295 = smul.u32 32, %s16
      %p1296 = scmp.lt.s32.totalorder %s1295, 63
      %s1297 = scalar_select %p1296, %s1295, 63
      %s1298 = smul.addr %s1297, 8
      %s1299 = scalar_lea.vmem %s5, %s1298
      // Predicated region
      $region41: #{csp_layer_forward.7} parent=39 // pred_check
        %p1300 = pneg %p149
      $region42: #{csp_layer_forward.7} parent=39 // pred_check_branch
        %1302 = sbr.rel (%p1300) target = $region44
      $region43: #{csp_layer_forward.7} parent=39 // pred_region
        %s1303 = smul.u32 32, %s16
      $region44: #{csp_layer_forward.7} parent=39 // pred_fallthru
        _
    $region40: #{csp_layer_forward.7} parent=5 // pred_fallthru
      _
    %p1304 = scmp.le.s32.totalorder 2, %s11
    // Predicated region
    $region45: #{csp_layer_forward.7} parent=5 // pred_check
      %p1305 = pneg %p1304
    $region46: #{csp_layer_forward.7} parent=5 // pred_check_branch
      %1307 = sbr.rel (%p1305) target = $region48
    $region47: #{csp_layer_forward.7} parent=5 // pred_region
      %s1308 = ssub.s32 %s11, 2
      // Predicated region
      $region49: #{csp_layer_forward.7} parent=47 // pred_check
        %p1309 = pneg %p155
      $region50: #{csp_layer_forward.7} parent=47 // pred_check_branch
        %1311 = sbr.rel (%p1309) target = $region52
      $region51: #{csp_layer_forward.7} parent=47 // pred_region
        %s1312 = smul.u32 32, %s17
        %p1313 = scmp.lt.s32.totalorder %s1312, 63
        %s1314 = scalar_select %p1313, %s1312, 63
        %s1315 = smul.addr %s1314, 8
        %s1316 = scalar_lea.vmem %s5, %s1315
      $region52: #{csp_layer_forward.7} parent=47 // pred_fallthru
        _
    $region48: #{csp_layer_forward.7} parent=5 // pred_fallthru
      _
  $region6: #{csp_layer_forward.7} parent=0 // loop_footer
    %s15 = sadd.s32 1, %s11
  $region7: #{csp_layer_forward.7} parent=0 // loop_footer_branch
    %10 = sbr.rel target = $region3
  $region8: #{csp_layer_forward.7} parent=0 // loop_exit
    _

// kernel: csp_layer_forward.6
$region0: #{csp_layer_forward.6}
  #allocation0 [shape = 'u32[]', space=smem, size = 0x4, offset = 0x4, fixed_abs, tag = 'smem constant byte address 0x4 - core index']
  #allocation1 [shape = 'u32[144,128]{1,0:T(1,128)}', space=vmem, size = 0x12000, scoped, tag = 'internal scratch']
  %s0 = inlined_call_operand.vmem [shape: bf16[2,288,12], index: 0, kind: input, shape index: {}]
  %s1 = inlined_call_operand.vmem [shape: bf16[3,12,4], index: 1, kind: input, shape index: {}]
  %s2 = inlined_call_operand.vmem [shape: f32[1,4], index: 2, kind: input, shape index: {}]
  %s3 = inlined_call_operand.vmem [shape: bf16[2,256,4], index: 3, kind: input, shape index: {}]
  %s4 = inlined_call_operand.vmem [shape: bf16[2,256,4], index: 4, kind: output, shape index: {}]
  %s5 = sld [smem:[#allocation0]]
  $region49: #{csp_layer_forward.6} parent=0
    _
  %s7 = ssub.s32 1, %s5
  %s8 = scalar_select 0, %s7, %s5
  loop: start=0, step=1, limit=4
  $region2: #{csp_layer_forward.6} parent=0 // loop_pre_header
    _
  $region3: #{csp_layer_forward.6} parent=0 // loop_header
    %s10 = sphi 0, %s14
    %p11 = scmp.ge.s32.totalorder %s10, 4
    %s20 = sphi 0, %s22
    %s23 = sphi 0, %s20
    %s24 = sphi 0, %s23
    %s40 = sphi 0, %s24
    %s44 = sphi 0, %s44
    %s46 = sphi 0, %s44
    %s47 = sphi 0, %s46
    %s61 = sphi 0, %s47
    %s65 = sphi 0, %s65
    %s67 = sphi 0, %s65
    %s68 = sphi 0, %s67
    %s82 = sphi 0, %s68
    %s88 = sphi 0, %s90
    %s91 = sphi 0, %s88
    %s92 = sphi 0, %s91
    %s108 = sphi 0, %s92
    %s114 = sphi 0, %s116
    %s117 = sphi 0, %s114
    %s118 = sphi 0, %s117
    %s134 = sphi 0, %s118
  $region4: #{csp_layer_forward.6} parent=0 // loop_header_branch
    %13 = sbr.rel (%p11) target = $region8
  $region5: #{csp_layer_forward.6} parent=0 // loop_body
    %s15 = ssub.s32 %s10, 1
    %s16 = ssub.s32 %s10, 2
    %s17 = sadd.s32 %s10, 1
    %s18 = ssub.s32 %s10, %s17
    %p19 = scmp.eq.s32.totalorder %s18, 0
    %s21 = sadd.s32 %s20, 1
    %s22 = scalar_select %p19, %s20, %s21
    %p25 = pneg %p19
    %p26 = scmp.eq.s32.totalorder %s10, 1
    %p27 = por %p25, %p26
    %p28 = scmp.ne.s32.totalorder %s20, %s23
    %p29 = scmp.eq.s32.totalorder %s10, 0
    %p30 = por %p28, %p29
    %p31 = scmp.ne.s32.totalorder %s20, %s23
    %p32 = scmp.eq.s32.totalorder %s15, 1
    %p33 = por %p31, %p32
    %p34 = scmp.ne.s32.totalorder %s23, %s24
    %p35 = scmp.eq.s32.totalorder %s15, 0
    %p36 = por %p34, %p35
    %p37 = scmp.ne.s32.totalorder %s23, %s24
    %p38 = scmp.eq.s32.totalorder %s16, 1
    %p39 = por %p37, %p38
    %p41 = scmp.ne.s32.totalorder %s24, %s40
    %p42 = scmp.eq.s32.totalorder %s16, 0
    %p43 = por %p41, %p42
    %s45 = sadd.s32 %s44, 1
    %p48 = scmp.eq.s32.totalorder %s10, 1
    %p49 = scmp.ne.s32.totalorder %s44, %s46
    %p50 = scmp.eq.s32.totalorder %s10, 0
    %p51 = por %p49, %p50
    %p52 = scmp.ne.s32.totalorder %s44, %s46
    %p53 = scmp.eq.s32.totalorder %s15, 1
    %p54 = por %p52, %p53
    %p55 = scmp.ne.s32.totalorder %s46, %s47
    %p56 = scmp.eq.s32.totalorder %s15, 0
    %p57 = por %p55, %p56
    %p58 = scmp.ne.s32.totalorder %s46, %s47
    %p59 = scmp.eq.s32.totalorder %s16, 1
    %p60 = por %p58, %p59
    %p62 = scmp.ne.s32.totalorder %s47, %s61
    %p63 = scmp.eq.s32.totalorder %s16, 0
    %p64 = por %p62, %p63
    %s66 = sadd.s32 %s65, 1
    %p69 = scmp.eq.s32.totalorder %s10, 1
    %p70 = scmp.ne.s32.totalorder %s65, %s67
    %p71 = scmp.eq.s32.totalorder %s10, 0
    %p72 = por %p70, %p71
    %p73 = scmp.ne.s32.totalorder %s65, %s67
    %p74 = scmp.eq.s32.totalorder %s15, 1
    %p75 = por %p73, %p74
    %p76 = scmp.ne.s32.totalorder %s67, %s68
    %p77 = scmp.eq.s32.totalorder %s15, 0
    %p78 = por %p76, %p77
    %p79 = scmp.ne.s32.totalorder %s67, %s68
    %p80 = scmp.eq.s32.totalorder %s16, 1
    %p81 = por %p79, %p80
    %p83 = scmp.ne.s32.totalorder %s68, %s82
    %p84 = scmp.eq.s32.totalorder %s16, 0
    %p85 = por %p83, %p84
    %s86 = ssub.s32 %s10, %s17
    %p87 = scmp.eq.s32.totalorder %s86, 0
    %s89 = sadd.s32 %s88, 1
    %s90 = scalar_select %p87, %s88, %s89
    %p93 = pneg %p87
    %p94 = scmp.eq.s32.totalorder %s10, 1
    %p95 = por %p93, %p94
    %p96 = scmp.ne.s32.totalorder %s88, %s91
    %p97 = scmp.eq.s32.totalorder %s10, 0
    %p98 = por %p96, %p97
    %p99 = scmp.ne.s32.totalorder %s88, %s91
    %p100 = scmp.eq.s32.totalorder %s15, 1
    %p101 = por %p99, %p100
    %p102 = scmp.ne.s32.totalorder %s91, %s92
    %p103 = scmp.eq.s32.totalorder %s15, 0
    %p104 = por %p102, %p103
    %p105 = scmp.ne.s32.totalorder %s91, %s92
    %p106 = scmp.eq.s32.totalorder %s16, 1
    %p107 = por %p105, %p106
    %p109 = scmp.ne.s32.totalorder %s92, %s108
    %p110 = scmp.eq.s32.totalorder %s16, 0
    %p111 = por %p109, %p110
    %s112 = ssub.s32 %s10, %s17
    %p113 = scmp.eq.s32.totalorder %s112, 0
    %s115 = sadd.s32 %s114, 1
    %s116 = scalar_select %p113, %s114, %s115
    %p119 = pneg %p113
    %p120 = scmp.eq.s32.totalorder %s10, 1
    %p121 = por %p119, %p120
    %p122 = scmp.ne.s32.totalorder %s114, %s117
    %p123 = scmp.eq.s32.totalorder %s10, 0
    %p124 = por %p122, %p123
    %p125 = scmp.ne.s32.totalorder %s114, %s117
    %p126 = scmp.eq.s32.totalorder %s15, 1
    %p127 = por %p125, %p126
    %p128 = scmp.ne.s32.totalorder %s117, %s118
    %p129 = scmp.eq.s32.totalorder %s15, 0
    %p130 = por %p128, %p129
    %p131 = scmp.ne.s32.totalorder %s117, %s118
    %p132 = scmp.eq.s32.totalorder %s16, 1
    %p133 = por %p131, %p132
    %p135 = scmp.ne.s32.totalorder %s118, %s134
    %p136 = scmp.eq.s32.totalorder %s16, 0
    %p137 = por %p135, %p136
    %p138 = scmp.le.s32.totalorder 1, %s10
    %p139 = scmp.lt.s32.totalorder %s10, 3
    %p140 = pnand %p138, %p139
    %p141 = pneg %p140
    // Predicated region
    $region9: #{csp_layer_forward.6} parent=5 // pred_check
      _
    $region10: #{csp_layer_forward.6} parent=5 // pred_check_branch
      %143 = sbr.rel (%p140) target = $region12
    $region11: #{csp_layer_forward.6} parent=5 // pred_region
      %s144 = ssub.s32 %s10, 1
      // Predicated region
      $region13: #{csp_layer_forward.6} parent=11 // pred_check
        %p145 = pneg %p57
      $region14: #{csp_layer_forward.6} parent=11 // pred_check_branch
        %147 = sbr.rel (%p145) target = $region16
      $region15: #{csp_layer_forward.6} parent=11 // pred_region
        _
      $region16: #{csp_layer_forward.6} parent=11 // pred_fallthru
        _
      // Predicated region
      $region17: #{csp_layer_forward.6} parent=11 // pred_check
        %p148 = pneg %p78
      $region18: #{csp_layer_forward.6} parent=11 // pred_check_branch
        %150 = sbr.rel (%p148) target = $region20
      $region19: #{csp_layer_forward.6} parent=11 // pred_region
        _
      $region20: #{csp_layer_forward.6} parent=11 // pred_fallthru
        _
    $region12: #{csp_layer_forward.6} parent=5 // pred_fallthru
      _
    %p151 = scmp.lt.s32.totalorder %s10, 2
    // Predicated region
    $region21: #{csp_layer_forward.6} parent=5 // pred_check
      %p152 = pneg %p151
    $region22: #{csp_layer_forward.6} parent=5 // pred_check_branch
      %154 = sbr.rel (%p152) target = $region24
    $region23: #{csp_layer_forward.6} parent=5 // pred_region
      // Predicated region
      $region25: #{csp_layer_forward.6} parent=23 // pred_check
        %p155 = pneg %p30
      $region26: #{csp_layer_forward.6} parent=23 // pred_check_branch
        %157 = sbr.rel (%p155) target = $region28
      $region27: #{csp_layer_forward.6} parent=23 // pred_region
        %p158 = scmp.lt.s32.totalorder %s10, 1
        %s159 = scalar_select %p158, %s10, 1
        %s160 = smul.addr %s159, 36
        %s161 = smul.addr %s160, 4
        %s162 = scalar_lea.vmem %s0, %s161
      $region28: #{csp_layer_forward.6} parent=23 // pred_fallthru
        _
      // Predicated region
      $region29: #{csp_layer_forward.6} parent=23 // pred_check
        %p163 = pneg %p98
      $region30: #{csp_layer_forward.6} parent=23 // pred_check_branch
        %165 = sbr.rel (%p163) target = $region32
      $region31: #{csp_layer_forward.6} parent=23 // pred_region
        %p166 = scmp.lt.s32.totalorder %s10, 1
        %s167 = scalar_select %p166, %s10, 1
        %s168 = smul.addr %s167, 32
        %s169 = smul.addr %s168, 4
        %s170 = scalar_lea.vmem %s3, %s169
      $region32: #{csp_layer_forward.6} parent=23 // pred_fallthru
        _
    $region24: #{csp_layer_forward.6} parent=5 // pred_fallthru
      _
    %p171 = scmp.le.s32.totalorder 1, %s10
    %p172 = scmp.lt.s32.totalorder %s10, 3
    %p173 = pnand %p171, %p172
    %p174 = pneg %p173
    // Predicated region
    $region33: #{csp_layer_forward.6} parent=5 // pred_check
      _
    $region34: #{csp_layer_forward.6} parent=5 // pred_check_branch
      %176 = sbr.rel (%p173) target = $region36
    $region35: #{csp_layer_forward.6} parent=5 // pred_region
      %s177 = ssub.s32 %s10, 1
      %p178 = scmp.lt.s32.totalorder %s15, 1
      %s179 = scalar_select %p178, %s15, 1
      %s180 = smul.addr %s179, 36
      %s181 = smul.addr %s180, 4
      %s182 = scalar_lea.vmem %s0, %s181
      %p183 = pneg %p36
      %p184 = pneg %p33
      %p185 = pneg %p57
      %p186 = pneg %p54
      %p187 = pneg %p78
      %p188 = pneg %p75
      %p189 = scmp.lt.s32.totalorder %s15, 1
      %s190 = scalar_select %p189, %s15, 1
      %s191 = smul.addr %s190, 32
      %s192 = smul.addr %s191, 4
      %s193 = scalar_lea.vmem %s3, %s192
      %p194 = pneg %p104
      %p195 = pneg %p101
      %p196 = pneg %p130
      %p197 = pneg %p127
      %p198 = scmp.lt.s32.totalorder %s15, 1
      %s199 = scalar_select %p198, %s15, 1
      %s200 = smul.addr %s199, 32
      %s201 = smul.addr %s200, 4
      %s202 = scalar_lea.vmem %s4, %s201
      %p203 = scmp.lt.s32.totalorder %s15, 1
      %s204 = scalar_select %p203, %s15, 1
      %s205 = smul.addr %s204, 36
      %s206 = smul.addr %s205, 4
      %s207 = scalar_lea.vmem %s0, %s206
      %p208 = scmp.lt.s32.totalorder %s15, 1
      %s209 = scalar_select %p208, %s15, 1
      %s210 = smul.addr %s209, 32
      %s211 = smul.addr %s210, 4
      %s212 = scalar_lea.vmem %s3, %s211
      %p213 = scmp.lt.s32.totalorder %s15, 1
      %s214 = scalar_select %p213, %s15, 1
      %s215 = smul.addr %s214, 32
      %s216 = smul.addr %s215, 4
      %s217 = scalar_lea.vmem %s4, %s216
      %v219 = vld [vmem:[%s207] sm:$0xf]
      %v220 = vld [vmem:[%s207 + $0x4] sm:$0xf]
      %v221 = vld [vmem:[%s207 + $0x8] sm:$0xf]
      %v222 = vld [vmem:[%s207 + $0xc] sm:$0xf]
      %v223 = vld [vmem:[%s207 + $0x10] sm:$0xf]
      %v224 = vld [vmem:[%s207 + $0x14] sm:$0xf]
      %v225 = vld [vmem:[%s207 + $0x18] sm:$0xf]
      %v226 = vld [vmem:[%s207 + $0x1c] sm:$0xf]
      %v227 = vld [vmem:[%s207 + $0x20] sm:$0xf]
      %v228 = vld [vmem:[%s207 + $0x24] sm:$0xf]
      %v229 = vld [vmem:[%s207 + $0x28] sm:$0xf]
      %v230 = vld [vmem:[%s207 + $0x2c] sm:$0xf]
      %v231 = vld [vmem:[%s207 + $0x30] sm:$0xf]
      %v232 = vld [vmem:[%s207 + $0x34] sm:$0xf]
      %v233 = vld [vmem:[%s207 + $0x38] sm:$0xf]
      %v234 = vld [vmem:[%s207 + $0x3c] sm:$0xf]
      %v235 = vld [vmem:[%s207 + $0x40] sm:$0xf]
      %v236 = vld [vmem:[%s207 + $0x44] sm:$0xf]
      %v237 = vld [vmem:[%s207 + $0x48] sm:$0xf]
      %v238 = vld [vmem:[%s207 + $0x4c] sm:$0xf]
      %v239 = vld [vmem:[%s207 + $0x50] sm:$0xf]
      %v240 = vld [vmem:[%s207 + $0x54] sm:$0xf]
      %v241 = vld [vmem:[%s207 + $0x58] sm:$0xf]
      %v242 = vld [vmem:[%s207 + $0x5c] sm:$0xf]
      %v243 = vld [vmem:[%s207 + $0x60] sm:$0xf]
      %v244 = vld [vmem:[%s207 + $0x64] sm:$0xf]
      %v245 = vld [vmem:[%s207 + $0x68] sm:$0xf]
      %v246 = vld [vmem:[%s207 + $0x6c] sm:$0xf]
      %v247 = vld [vmem:[%s207 + $0x70] sm:$0xf]
      %v248 = vld [vmem:[%s207 + $0x74] sm:$0xf]
      %v249 = vld [vmem:[%s207 + $0x78] sm:$0xf]
      %v250 = vld [vmem:[%s207 + $0x7c] sm:$0xf]
      %v251 = vld [vmem:[%s1] sm:$0xf]
      %v252 = vld [vmem:[%s1 + $0x4] sm:$0x3]
      %v253 = vld [vmem:[%s207 + $0x80] sm:$0xf]
      %v254 = vld [vmem:[%s207 + $0x84] sm:$0xf]
      %s255 = scalar_lea.vmem %s1, 8
      %v256 = vld [vmem:[%s255] sm:$0xf]
      %v257 = vld [vmem:[%s255 + $0x4] sm:$0x3]
      %v290 = vunpack.c.l.b16 %v221
      %v291 = vunpack.c.l.b16 %v222
      %v292 = vunpack.c.l.b16 %v223
      %v293 = vunpack.c.l.b16 %v224
      %v294 = vunpack.c.l.b16 %v225
      %v295 = vunpack.c.l.b16 %v226
      %v296 = vunpack.c.l.b16 %v227
      %v297 = vunpack.c.l.b16 %v228
      %v298 = vunpack.c.l.b16 %v229
      %v299 = vunpack.c.l.b16 %v230
      %v300 = vunpack.c.l.b16 %v231
      %v301 = vunpack.c.l.b16 %v232
      %v302 = vunpack.c.l.b16 %v233
      %v303 = vunpack.c.l.b16 %v234
      %v304 = vunpack.c.l.b16 %v235
      %v305 = vunpack.c.l.b16 %v236
      %v306 = vunpack.c.l.b16 %v237
      %v307 = vunpack.c.l.b16 %v238
      %v308 = vunpack.c.l.b16 %v239
      %v309 = vunpack.c.l.b16 %v240
      %v310 = vunpack.c.l.b16 %v241
      %v311 = vunpack.c.l.b16 %v242
      %v312 = vunpack.c.l.b16 %v243
      %v313 = vunpack.c.l.b16 %v244
      %v314 = vunpack.c.l.b16 %v245
      %v315 = vunpack.c.l.b16 %v246
      %v316 = vunpack.c.l.b16 %v247
      %v317 = vunpack.c.l.b16 %v248
      %v318 = vunpack.c.l.b16 %v249
      %v319 = vunpack.c.l.b16 %v250
      %v320 = vunpack.c.l.b16 %v253
      %v321 = vunpack.c.l.b16 %v254
      %v322 = vpack.c.b16 %v291, %v290
      %v323 = vpack.c.b16 %v293, %v292
      %v324 = vpack.c.b16 %v295, %v294
      %v325 = vpack.c.b16 %v297, %v296
      %v326 = vpack.c.b16 %v299, %v298
      %v327 = vpack.c.b16 %v301, %v300
      %v328 = vpack.c.b16 %v303, %v302
      %v329 = vpack.c.b16 %v305, %v304
      %v330 = vpack.c.b16 %v307, %v306
      %v331 = vpack.c.b16 %v309, %v308
      %v332 = vpack.c.b16 %v311, %v310
      %v333 = vpack.c.b16 %v313, %v312
      %v334 = vpack.c.b16 %v315, %v314
      %v335 = vpack.c.b16 %v317, %v316
      %v336 = vpack.c.b16 %v319, %v318
      %v337 = vpack.c.b16 %v321, %v320
      %v340 = vunpack.c.l.b16 %v256
      %v341 = vunpack.c.l.b16 %v257
      %v342 = vpack.c.b16 %v341, %v340
      %vm343 = vcmask 97280
      %v345 = vsel %vm343, %v322, 0
      %v348 = vsel %vm343, %v323, 0
      %v351 = vsel %vm343, %v324, 0
      %v354 = vsel %vm343, %v325, 0
      %v357 = vsel %vm343, %v326, 0
      %v360 = vsel %vm343, %v327, 0
      %v363 = vsel %vm343, %v328, 0
      %v366 = vsel %vm343, %v329, 0
      %v369 = vsel %vm343, %v330, 0
      %v372 = vsel %vm343, %v331, 0
      %v375 = vsel %vm343, %v332, 0
      %v378 = vsel %vm343, %v333, 0
      %v381 = vsel %vm343, %v334, 0
      %v384 = vsel %vm343, %v335, 0
      %v387 = vsel %vm343, %v336, 0
      %v390 = vsel %vm343, %v337, 0
      %vm392 = vcmask 1045504
      %v394 = vsel %vm392, %v342, 0
      %396 = vmatprep.subr.bf16.mxu0 0
      %397 = vmatpush1.bf16.msra.mxu0 %v394
      %398 = vmatprep.subr.bf16.mxu0 0
      %399 = vmatpush1.bf16.msra.mxu0 0
      %400 = vmatprep.subr.bf16.mxu0 0
      %401 = vmatpush1.bf16.msra.mxu0 0
      %402 = vmatprep.subr.bf16.mxu0 0
      %403 = vmatpush1.bf16.msra.mxu0 0
      %404 = vmatprep.subr.bf16.mxu0 0
      %405 = vmatpush1.bf16.msra.mxu0 0
      %406 = vmatprep.subr.bf16.mxu0 0
      %407 = vmatpush1.bf16.msra.mxu0 0
      %408 = vmatprep.subr.bf16.mxu0 0
      %409 = vmatpush1.bf16.msra.mxu0 0
      %410 = vmatprep.subr.bf16.mxu0 0
      %411 = vmatpush1.bf16.msra.mxu0 0
      %412 = vmatprep.subr.bf16.mxu0 0
      %413 = vmatpush1.bf16.msra.mxu0 0
      %414 = vmatprep.subr.bf16.mxu0 0
      %415 = vmatpush1.bf16.msra.mxu0 0
      %416 = vmatprep.subr.bf16.mxu0 0
      %417 = vmatpush1.bf16.msra.mxu0 0
      %418 = vmatprep.subr.bf16.mxu0 0
      %419 = vmatpush1.bf16.msra.mxu0 0
      %420 = vmatprep.subr.bf16.mxu0 0
      %421 = vmatpush1.bf16.msra.mxu0 0
      %422 = vmatprep.subr.bf16.mxu0 0
      %423 = vmatpush1.bf16.msra.mxu0 0
      %424 = vmatprep.subr.bf16.mxu0 0
      %425 = vmatpush1.bf16.msra.mxu0 0
      %426 = vmatprep.subr.bf16.mxu0 0
      %427 = vmatpush1.bf16.msra.mxu0 0
      %428 = vmatprep.mubr.bf16.mxu0 0
      %429 = vmatmul.mubr.bf16.gmra.mrb[0].mxu0 %v345
      %v430 = vpop.f32.mrb[0].mxu0
      %v431 = vadd.f32 0.0, %v430
      %v432 = vpop.f32.mrb[0].mxu0
      %v433 = vpop.f32.mrb[0].mxu0
      %v434 = vadd.f32 0.0, %v433
      %v435 = vpop.f32.mrb[0].mxu0
      %436 = vmatprep.mubr.bf16.mxu0 0
      %437 = vmatmul.mubr.bf16.gmra.mrb[0].mxu0 %v348
      %v438 = vpop.f32.mrb[0].mxu0
      %v439 = vadd.f32 0.0, %v438
      %v440 = vpop.f32.mrb[0].mxu0
      %v441 = vpop.f32.mrb[0].mxu0
      %v442 = vadd.f32 0.0, %v441
      %v443 = vpop.f32.mrb[0].mxu0
      %444 = vmatprep.mubr.bf16.mxu0 0
      %445 = vmatmul.mubr.bf16.gmra.mrb[0].mxu0 %v351
      %v446 = vpop.f32.mrb[0].mxu0
      %v447 = vadd.f32 0.0, %v446
      %v448 = vpop.f32.mrb[0].mxu0
      %v449 = vpop.f32.mrb[0].mxu0
      %v450 = vadd.f32 0.0, %v449
      %v451 = vpop.f32.mrb[0].mxu0
      %452 = vmatprep.mubr.bf16.mxu0 0
      %453 = vmatmul.mubr.bf16.gmra.mrb[0].mxu0 %v354
      %v454 = vpop.f32.mrb[0].mxu0
      %v455 = vadd.f32 0.0, %v454
      %v456 = vpop.f32.mrb[0].mxu0
      %v457 = vpop.f32.mrb[0].mxu0
      %v458 = vadd.f32 0.0, %v457
      %v459 = vpop.f32.mrb[0].mxu0
      %460 = vmatprep.mubr.bf16.mxu0 0
      %461 = vmatmul.mubr.bf16.gmra.mrb[0].mxu0 %v357
      %v462 = vpop.f32.mrb[0].mxu0
      %v463 = vadd.f32 0.0, %v462
      %v464 = vpop.f32.mrb[0].mxu0
      %v465 = vpop.f32.mrb[0].mxu0
      %v466 = vadd.f32 0.0, %v465
      %v467 = vpop.f32.mrb[0].mxu0
      %468 = vmatprep.mubr.bf16.mxu0 0
      %469 = vmatmul.mubr.bf16.gmra.mrb[0].mxu0 %v360
      %v470 = vpop.f32.mrb[0].mxu0
      %v471 = vadd.f32 0.0, %v470
      %v472 = vpop.f32.mrb[0].mxu0
      %v473 = vpop.f32.mrb[0].mxu0
      %v474 = vadd.f32 0.0, %v473
      %v475 = vpop.f32.mrb[0].mxu0
      %476 = vmatprep.mubr.bf16.mxu0 0
      %477 = vmatmul.mubr.bf16.gmra.mrb[0].mxu0 %v363
      %v478 = vpop.f32.mrb[0].mxu0
      %v479 = vadd.f32 0.0, %v478
      %v480 = vpop.f32.mrb[0].mxu0
      %v481 = vpop.f32.mrb[0].mxu0
      %v482 = vadd.f32 0.0, %v481
      %v483 = vpop.f32.mrb[0].mxu0
      %484 = vmatprep.mubr.bf16.mxu0 0
      %485 = vmatmul.mubr.bf16.gmra.mrb[0].mxu0 %v366
      %v486 = vpop.f32.mrb[0].mxu0
      %v487 = vadd.f32 0.0, %v486
      %v488 = vpop.f32.mrb[0].mxu0
      %v489 = vpop.f32.mrb[0].mxu0
      %v490 = vadd.f32 0.0, %v489
      %v491 = vpop.f32.mrb[0].mxu0
      %492 = vmatprep.mubr.bf16.mxu0 0
      %493 = vmatmul.mubr.bf16.gmra.mrb[0].mxu0 %v369
      %v494 = vpop.f32.mrb[0].mxu0
      %v495 = vadd.f32 0.0, %v494
      %v496 = vpop.f32.mrb[0].mxu0
      %v497 = vpop.f32.mrb[0].mxu0
      %v498 = vadd.f32 0.0, %v497
      %v499 = vpop.f32.mrb[0].mxu0
      %500 = vmatprep.mubr.bf16.mxu0 0
      %501 = vmatmul.mubr.bf16.gmra.mrb[0].mxu0 %v372
      %v502 = vpop.f32.mrb[0].mxu0
      %v503 = vadd.f32 0.0, %v502
      %v504 = vpop.f32.mrb[0].mxu0
      %v505 = vpop.f32.mrb[0].mxu0
      %v506 = vadd.f32 0.0, %v505
      %v507 = vpop.f32.mrb[0].mxu0
      %508 = vmatprep.mubr.bf16.mxu0 0
      %509 = vmatmul.mubr.bf16.gmra.mrb[0].mxu0 %v375
      %v510 = vpop.f32.mrb[0].mxu0
      %v511 = vadd.f32 0.0, %v510
      %v512 = vpop.f32.mrb[0].mxu0
      %v513 = vpop.f32.mrb[0].mxu0
      %v514 = vadd.f32 0.0, %v513
      %v515 = vpop.f32.mrb[0].mxu0
      %516 = vmatprep.mubr.bf16.mxu0 0
      %517 = vmatmul.mubr.bf16.gmra.mrb[0].mxu0 %v378
      %v518 = vpop.f32.mrb[0].mxu0
      %v519 = vadd.f32 0.0, %v518
      %v520 = vpop.f32.mrb[0].mxu0
      %v521 = vpop.f32.mrb[0].mxu0
      %v522 = vadd.f32 0.0, %v521
      %v523 = vpop.f32.mrb[0].mxu0
      %524 = vmatprep.mubr.bf16.mxu0 0
      %525 = vmatmul.mubr.bf16.gmra.mrb[0].mxu0 %v381
      %v526 = vpop.f32.mrb[0].mxu0
      %v527 = vadd.f32 0.0, %v526
      %v528 = vpop.f32.mrb[0].mxu0
      %v529 = vpop.f32.mrb[0].mxu0
      %v530 = vadd.f32 0.0, %v529
      %v531 = vpop.f32.mrb[0].mxu0
      %532 = vmatprep.mubr.bf16.mxu0 0
      %533 = vmatmul.mubr.bf16.gmra.mrb[0].mxu0 %v384
      %v534 = vpop.f32.mrb[0].mxu0
      %v535 = vadd.f32 0.0, %v534
      %v536 = vpop.f32.mrb[0].mxu0
      %v537 = vpop.f32.mrb[0].mxu0
      %v538 = vadd.f32 0.0, %v537
      %v539 = vpop.f32.mrb[0].mxu0
      %540 = vmatprep.mubr.bf16.mxu0 0
      %541 = vmatmul.mubr.bf16.gmra.mrb[0].mxu0 %v387
      %v542 = vpop.f32.mrb[0].mxu0
      %v543 = vadd.f32 0.0, %v542
      %v544 = vpop.f32.mrb[0].mxu0
      %v545 = vpop.f32.mrb[0].mxu0
      %v546 = vadd.f32 0.0, %v545
      %v547 = vpop.f32.mrb[0].mxu0
      %548 = vmatprep.mubr.bf16.mxu0 0
      %549 = vmatmul.mubr.bf16.gmra.mrb[0].mxu0 %v390
      %v550 = vpop.f32.mrb[0].mxu0
      %v551 = vadd.f32 0.0, %v550
      %v552 = vpop.f32.mrb[0].mxu0
      %v553 = vpop.f32.mrb[0].mxu0
      %v554 = vadd.f32 0.0, %v553
      %v555 = vpop.f32.mrb[0].mxu0
      %556 = vdwg.mxu0
      %v559 = vunpack.c.l.b16 %v219
      %v560 = vunpack.c.l.b16 %v220
      %v561 = vpack.c.b16 %v560, %v559
      %v564 = vunpack.c.l.b16 %v251
      %v565 = vunpack.c.l.b16 %v252
      %v566 = vpack.c.b16 %v565, %v564
      %v568 = vsel %vm343, %v561, 0
      %v571 = vsel %vm392, %v566, 0
      %573 = vmatprep.subr.bf16.mxu0 0
      %574 = vmatpush1.bf16.msra.mxu0 %v571
      %575 = vmatprep.subr.bf16.mxu0 0
      %576 = vmatpush1.bf16.msra.mxu0 0
      %577 = vmatprep.subr.bf16.mxu0 0
      %578 = vmatpush1.bf16.msra.mxu0 0
      %579 = vmatprep.subr.bf16.mxu0 0
      %580 = vmatpush1.bf16.msra.mxu0 0
      %581 = vmatprep.subr.bf16.mxu0 0
      %582 = vmatpush1.bf16.msra.mxu0 0
      %583 = vmatprep.subr.bf16.mxu0 0
      %584 = vmatpush1.bf16.msra.mxu0 0
      %585 = vmatprep.subr.bf16.mxu0 0
      %586 = vmatpush1.bf16.msra.mxu0 0
      %587 = vmatprep.subr.bf16.mxu0 0
      %588 = vmatpush1.bf16.msra.mxu0 0
      %589 = vmatprep.subr.bf16.mxu0 0
      %590 = vmatpush1.bf16.msra.mxu0 0
      %591 = vmatprep.subr.bf16.mxu0 0
      %592 = vmatpush1.bf16.msra.mxu0 0
      %593 = vmatprep.subr.bf16.mxu0 0
      %594 = vmatpush1.bf16.msra.mxu0 0
      %595 = vmatprep.subr.bf16.mxu0 0
      %596 = vmatpush1.bf16.msra.mxu0 0
      %597 = vmatprep.subr.bf16.mxu0 0
      %598 = vmatpush1.bf16.msra.mxu0 0
      %599 = vmatprep.subr.bf16.mxu0 0
      %600 = vmatpush1.bf16.msra.mxu0 0
      %601 = vmatprep.subr.bf16.mxu0 0
      %602 = vmatpush1.bf16.msra.mxu0 0
      %603 = vmatprep.subr.bf16.mxu0 0
      %604 = vmatpush1.bf16.msra.mxu0 0
      %605 = vmatprep.mubr.bf16.mxu0 0
      %606 = vmatmul.mubr.bf16.gmra.mrb[0].mxu0 %v568
      %v607 = vpop.f32.mrb[0].mxu0
      %v608 = vadd.f32 %v431, %v607
      %v609 = vpop.f32.mrb[0].mxu0
      %v610 = vpop.f32.mrb[0].mxu0
      %v611 = vadd.f32 %v434, %v610
      %v612 = vpop.f32.mrb[0].mxu0
      %613 = vmatprep.mubr.bf16.mxu0 0
      %614 = vmatmul.mubr.bf16.gmra.mrb[0].mxu0 %v345
      %v615 = vpop.f32.mrb[0].mxu0
      %v616 = vadd.f32 %v439, %v615
      %v617 = vpop.f32.mrb[0].mxu0
      %v618 = vpop.f32.mrb[0].mxu0
      %v619 = vadd.f32 %v442, %v618
      %v620 = vpop.f32.mrb[0].mxu0
      %621 = vmatprep.mubr.bf16.mxu0 0
      %622 = vmatmul.mubr.bf16.gmra.mrb[0].mxu0 %v348
      %v623 = vpop.f32.mrb[0].mxu0
      %v624 = vadd.f32 %v447, %v623
      %v625 = vpop.f32.mrb[0].mxu0
      %v626 = vpop.f32.mrb[0].mxu0
      %v627 = vadd.f32 %v450, %v626
      %v628 = vpop.f32.mrb[0].mxu0
      %629 = vmatprep.mubr.bf16.mxu0 0
      %630 = vmatmul.mubr.bf16.gmra.mrb[0].mxu0 %v351
      %v631 = vpop.f32.mrb[0].mxu0
      %v632 = vadd.f32 %v455, %v631
      %v633 = vpop.f32.mrb[0].mxu0
      %v634 = vpop.f32.mrb[0].mxu0
      %v635 = vadd.f32 %v458, %v634
      %v636 = vpop.f32.mrb[0].mxu0
      %637 = vmatprep.mubr.bf16.mxu0 0
      %638 = vmatmul.mubr.bf16.gmra.mrb[0].mxu0 %v354
      %v639 = vpop.f32.mrb[0].mxu0
      %v640 = vadd.f32 %v463, %v639
      %v641 = vpop.f32.mrb[0].mxu0
      %v642 = vpop.f32.mrb[0].mxu0
      %v643 = vadd.f32 %v466, %v642
      %v644 = vpop.f32.mrb[0].mxu0
      %645 = vmatprep.mubr.bf16.mxu0 0
      %646 = vmatmul.mubr.bf16.gmra.mrb[0].mxu0 %v357
      %v647 = vpop.f32.mrb[0].mxu0
      %v648 = vadd.f32 %v471, %v647
      %v649 = vpop.f32.mrb[0].mxu0
      %v650 = vpop.f32.mrb[0].mxu0
      %v651 = vadd.f32 %v474, %v650
      %v652 = vpop.f32.mrb[0].mxu0
      %653 = vmatprep.mubr.bf16.mxu0 0
      %654 = vmatmul.mubr.bf16.gmra.mrb[0].mxu0 %v360
      %v655 = vpop.f32.mrb[0].mxu0
      %v656 = vadd.f32 %v479, %v655
      %v657 = vpop.f32.mrb[0].mxu0
      %v658 = vpop.f32.mrb[0].mxu0
      %v659 = vadd.f32 %v482, %v658
      %v660 = vpop.f32.mrb[0].mxu0
      %661 = vmatprep.mubr.bf16.mxu0 0
      %662 = vmatmul.mubr.bf16.gmra.mrb[0].mxu0 %v363
      %v663 = vpop.f32.mrb[0].mxu0
      %v664 = vadd.f32 %v487, %v663
      %v665 = vpop.f32.mrb[0].mxu0
      %v666 = vpop.f32.mrb[0].mxu0
      %v667 = vadd.f32 %v490, %v666
      %v668 = vpop.f32.mrb[0].mxu0
      %669 = vmatprep.mubr.bf16.mxu0 0
      %670 = vmatmul.mubr.bf16.gmra.mrb[0].mxu0 %v366
      %v671 = vpop.f32.mrb[0].mxu0
      %v672 = vadd.f32 %v495, %v671
      %v673 = vpop.f32.mrb[0].mxu0
      %v674 = vpop.f32.mrb[0].mxu0
      %v675 = vadd.f32 %v498, %v674
      %v676 = vpop.f32.mrb[0].mxu0
      %677 = vmatprep.mubr.bf16.mxu0 0
      %678 = vmatmul.mubr.bf16.gmra.mrb[0].mxu0 %v369
      %v679 = vpop.f32.mrb[0].mxu0
      %v680 = vadd.f32 %v503, %v679
      %v681 = vpop.f32.mrb[0].mxu0
      %v682 = vpop.f32.mrb[0].mxu0
      %v683 = vadd.f32 %v506, %v682
      %v684 = vpop.f32.mrb[0].mxu0
      %685 = vmatprep.mubr.bf16.mxu0 0
      %686 = vmatmul.mubr.bf16.gmra.mrb[0].mxu0 %v372
      %v687 = vpop.f32.mrb[0].mxu0
      %v688 = vadd.f32 %v511, %v687
      %v689 = vpop.f32.mrb[0].mxu0
      %v690 = vpop.f32.mrb[0].mxu0
      %v691 = vadd.f32 %v514, %v690
      %v692 = vpop.f32.mrb[0].mxu0
      %693 = vmatprep.mubr.bf16.mxu0 0
      %694 = vmatmul.mubr.bf16.gmra.mrb[0].mxu0 %v375
      %v695 = vpop.f32.mrb[0].mxu0
      %v696 = vadd.f32 %v519, %v695
      %v697 = vpop.f32.mrb[0].mxu0
      %v698 = vpop.f32.mrb[0].mxu0
      %v699 = vadd.f32 %v522, %v698
      %v700 = vpop.f32.mrb[0].mxu0
      %701 = vmatprep.mubr.bf16.mxu0 0
      %702 = vmatmul.mubr.bf16.gmra.mrb[0].mxu0 %v378
      %v703 = vpop.f32.mrb[0].mxu0
      %v704 = vadd.f32 %v527, %v703
      %v705 = vpop.f32.mrb[0].mxu0
      %v706 = vpop.f32.mrb[0].mxu0
      %v707 = vadd.f32 %v530, %v706
      %v708 = vpop.f32.mrb[0].mxu0
      %709 = vmatprep.mubr.bf16.mxu0 0
      %710 = vmatmul.mubr.bf16.gmra.mrb[0].mxu0 %v381
      %v711 = vpop.f32.mrb[0].mxu0
      %v712 = vadd.f32 %v535, %v711
      %v713 = vpop.f32.mrb[0].mxu0
      %v714 = vpop.f32.mrb[0].mxu0
      %v715 = vadd.f32 %v538, %v714
      %v716 = vpop.f32.mrb[0].mxu0
      %717 = vmatprep.mubr.bf16.mxu0 0
      %718 = vmatmul.mubr.bf16.gmra.mrb[0].mxu0 %v384
      %v719 = vpop.f32.mrb[0].mxu0
      %v720 = vadd.f32 %v543, %v719
      %v721 = vpop.f32.mrb[0].mxu0
      %v722 = vpop.f32.mrb[0].mxu0
      %v723 = vadd.f32 %v546, %v722
      %v724 = vpop.f32.mrb[0].mxu0
      %725 = vmatprep.mubr.bf16.mxu0 0
      %726 = vmatmul.mubr.bf16.gmra.mrb[0].mxu0 %v387
      %v727 = vpop.f32.mrb[0].mxu0
      %v728 = vadd.f32 %v551, %v727
      %v729 = vpop.f32.mrb[0].mxu0
      %v730 = vpop.f32.mrb[0].mxu0
      %v731 = vadd.f32 %v554, %v730
      %v732 = vpop.f32.mrb[0].mxu0
      %733 = vdwg.mxu0
      %v734 = vld [vmem:[%s207 + $0x10] sm:$0xf]
      %v735 = vld [vmem:[%s207 + $0x14] sm:$0xf]
      %v736 = vld [vmem:[%s207 + $0x18] sm:$0xf]
      %v737 = vld [vmem:[%s207 + $0x1c] sm:$0xf]
      %v738 = vld [vmem:[%s207 + $0x20] sm:$0xf]
      %v739 = vld [vmem:[%s207 + $0x24] sm:$0xf]
      %v740 = vld [vmem:[%s207 + $0x28] sm:$0xf]
      %v741 = vld [vmem:[%s207 + $0x2c] sm:$0xf]
      %v742 = vld [vmem:[%s207 + $0x30] sm:$0xf]
      %v743 = vld [vmem:[%s207 + $0x34] sm:$0xf]
      %v744 = vld [vmem:[%s207 + $0x38] sm:$0xf]
      %v745 = vld [vmem:[%s207 + $0x3c] sm:$0xf]
      %v746 = vld [vmem:[%s207 + $0x40] sm:$0xf]
      %v747 = vld [vmem:[%s207 + $0x44] sm:$0xf]
      %v748 = vld [vmem:[%s207 + $0x48] sm:$0xf]
      %v749 = vld [vmem:[%s207 + $0x4c] sm:$0xf]
      %v750 = vld [vmem:[%s207 + $0x50] sm:$0xf]
      %v751 = vld [vmem:[%s207 + $0x54] sm:$0xf]
      %v752 = vld [vmem:[%s207 + $0x58] sm:$0xf]
      %v753 = vld [vmem:[%s207 + $0x5c] sm:$0xf]
      %v754 = vld [vmem:[%s207 + $0x60] sm:$0xf]
      %v755 = vld [vmem:[%s207 + $0x64] sm:$0xf]
      %v756 = vld [vmem:[%s207 + $0x68] sm:$0xf]
      %v757 = vld [vmem:[%s207 + $0x6c] sm:$0xf]
      %v758 = vld [vmem:[%s207 + $0x70] sm:$0xf]
      %v759 = vld [vmem:[%s207 + $0x74] sm:$0xf]
      %v760 = vld [vmem:[%s207 + $0x78] sm:$0xf]
      %v761 = vld [vmem:[%s207 + $0x7c] sm:$0xf]
      %v762 = vld [vmem:[%s207 + $0x80] sm:$0xf]
      %v763 = vld [vmem:[%s207 + $0x84] sm:$0xf]
      %v764 = vld [vmem:[%s207 + $0x88] sm:$0xf]
      %v765 = vld [vmem:[%s207 + $0x8c] sm:$0xf]
      %s766 = scalar_lea.vmem %s1, 16
      %v767 = vld [vmem:[%s766] sm:$0xf]
      %v768 = vld [vmem:[%s766 + $0x4] sm:$0x3]
      %v801 = vunpack.c.l.b16 %v734
      %v802 = vunpack.c.l.b16 %v735
      %v803 = vunpack.c.l.b16 %v736
      %v804 = vunpack.c.l.b16 %v737
      %v805 = vunpack.c.l.b16 %v738
      %v806 = vunpack.c.l.b16 %v739
      %v807 = vunpack.c.l.b16 %v740
      %v808 = vunpack.c.l.b16 %v741
      %v809 = vunpack.c.l.b16 %v742
      %v810 = vunpack.c.l.b16 %v743
      %v811 = vunpack.c.l.b16 %v744
      %v812 = vunpack.c.l.b16 %v745
      %v813 = vunpack.c.l.b16 %v746
      %v814 = vunpack.c.l.b16 %v747
      %v815 = vunpack.c.l.b16 %v748
      %v816 = vunpack.c.l.b16 %v749
      %v817 = vunpack.c.l.b16 %v750
      %v818 = vunpack.c.l.b16 %v751
      %v819 = vunpack.c.l.b16 %v752
      %v820 = vunpack.c.l.b16 %v753
      %v821 = vunpack.c.l.b16 %v754
      %v822 = vunpack.c.l.b16 %v755
      %v823 = vunpack.c.l.b16 %v756
      %v824 = vunpack.c.l.b16 %v757
      %v825 = vunpack.c.l.b16 %v758
      %v826 = vunpack.c.l.b16 %v759
      %v827 = vunpack.c.l.b16 %v760
      %v828 = vunpack.c.l.b16 %v761
      %v829 = vunpack.c.l.b16 %v762
      %v830 = vunpack.c.l.b16 %v763
      %v831 = vunpack.c.l.b16 %v764
      %v832 = vunpack.c.l.b16 %v765
      %v833 = vpack.c.b16 %v802, %v801
      %v834 = vpack.c.b16 %v804, %v803
      %v835 = vpack.c.b16 %v806, %v805
      %v836 = vpack.c.b16 %v808, %v807
      %v837 = vpack.c.b16 %v810, %v809
      %v838 = vpack.c.b16 %v812, %v811
      %v839 = vpack.c.b16 %v814, %v813
      %v840 = vpack.c.b16 %v816, %v815
      %v841 = vpack.c.b16 %v818, %v817
      %v842 = vpack.c.b16 %v820, %v819
      %v843 = vpack.c.b16 %v822, %v821
      %v844 = vpack.c.b16 %v824, %v823
      %v845 = vpack.c.b16 %v826, %v825
      %v846 = vpack.c.b16 %v828, %v827
      %v847 = vpack.c.b16 %v830, %v829
      %v848 = vpack.c.b16 %v832, %v831
      %v851 = vunpack.c.l.b16 %v767
      %v852 = vunpack.c.l.b16 %v768
      %v853 = vpack.c.b16 %v852, %v851
      %v855 = vsel %vm343, %v833, 0
      %v858 = vsel %vm343, %v834, 0
      %v861 = vsel %vm343, %v835, 0
      %v864 = vsel %vm343, %v836, 0
      %v867 = vsel %vm343, %v837, 0
      %v870 = vsel %vm343, %v838, 0
      %v873 = vsel %vm343, %v839, 0
      %v876 = vsel %vm343, %v840, 0
      %v879 = vsel %vm343, %v841, 0
      %v882 = vsel %vm343, %v842, 0
      %v885 = vsel %vm343, %v843, 0
      %v888 = vsel %vm343, %v844, 0
      %v891 = vsel %vm343, %v845, 0
      %v894 = vsel %vm343, %v846, 0
      %v897 = vsel %vm343, %v847, 0
      %v900 = vsel %vm343, %v848, 0
      %v903 = vsel %vm392, %v853, 0
      %905 = vmatprep.subr.bf16.mxu0 0
      %906 = vmatpush1.bf16.msra.mxu0 %v903
      %907 = vmatprep.subr.bf16.mxu0 0
      %908 = vmatpush1.bf16.msra.mxu0 0
      %909 = vmatprep.subr.bf16.mxu0 0
      %910 = vmatpush1.bf16.msra.mxu0 0
      %911 = vmatprep.subr.bf16.mxu0 0
      %912 = vmatpush1.bf16.msra.mxu0 0
      %913 = vmatprep.subr.bf16.mxu0 0
      %914 = vmatpush1.bf16.msra.mxu0 0
      %915 = vmatprep.subr.bf16.mxu0 0
      %916 = vmatpush1.bf16.msra.mxu0 0
      %917 = vmatprep.subr.bf16.mxu0 0
      %918 = vmatpush1.bf16.msra.mxu0 0
      %919 = vmatprep.subr.bf16.mxu0 0
      %920 = vmatpush1.bf16.msra.mxu0 0
      %921 = vmatprep.subr.bf16.mxu0 0
      %922 = vmatpush1.bf16.msra.mxu0 0
      %923 = vmatprep.subr.bf16.mxu0 0
      %924 = vmatpush1.bf16.msra.mxu0 0
      %925 = vmatprep.subr.bf16.mxu0 0
      %926 = vmatpush1.bf16.msra.mxu0 0
      %927 = vmatprep.subr.bf16.mxu0 0
      %928 = vmatpush1.bf16.msra.mxu0 0
      %929 = vmatprep.subr.bf16.mxu0 0
      %930 = vmatpush1.bf16.msra.mxu0 0
      %931 = vmatprep.subr.bf16.mxu0 0
      %932 = vmatpush1.bf16.msra.mxu0 0
      %933 = vmatprep.subr.bf16.mxu0 0
      %934 = vmatpush1.bf16.msra.mxu0 0
      %935 = vmatprep.subr.bf16.mxu0 0
      %936 = vmatpush1.bf16.msra.mxu0 0
      %937 = vmatprep.mubr.bf16.mxu0 0
      %938 = vmatmul.mubr.bf16.gmra.mrb[0].mxu0 %v855
      %v939 = vpop.f32.mrb[0].mxu0
      %v940 = vadd.f32 0.0, %v939
      %v941 = vpop.f32.mrb[0].mxu0
      %v942 = vpop.f32.mrb[0].mxu0
      %v943 = vadd.f32 0.0, %v942
      %v944 = vpop.f32.mrb[0].mxu0
      %945 = vmatprep.mubr.bf16.mxu0 0
      %946 = vmatmul.mubr.bf16.gmra.mrb[0].mxu0 %v858
      %v947 = vpop.f32.mrb[0].mxu0
      %v948 = vadd.f32 0.0, %v947
      %v949 = vpop.f32.mrb[0].mxu0
      %v950 = vpop.f32.mrb[0].mxu0
      %v951 = vadd.f32 0.0, %v950
      %v952 = vpop.f32.mrb[0].mxu0
      %953 = vmatprep.mubr.bf16.mxu0 0
      %954 = vmatmul.mubr.bf16.gmra.mrb[0].mxu0 %v861
      %v955 = vpop.f32.mrb[0].mxu0
      %v956 = vadd.f32 0.0, %v955
      %v957 = vpop.f32.mrb[0].mxu0
      %v958 = vpop.f32.mrb[0].mxu0
      %v959 = vadd.f32 0.0, %v958
      %v960 = vpop.f32.mrb[0].mxu0
      %961 = vmatprep.mubr.bf16.mxu0 0
      %962 = vmatmul.mubr.bf16.gmra.mrb[0].mxu0 %v864
      %v963 = vpop.f32.mrb[0].mxu0
      %v964 = vadd.f32 0.0, %v963
      %v965 = vpop.f32.mrb[0].mxu0
      %v966 = vpop.f32.mrb[0].mxu0
      %v967 = vadd.f32 0.0, %v966
      %v968 = vpop.f32.mrb[0].mxu0
      %969 = vmatprep.mubr.bf16.mxu0 0
      %970 = vmatmul.mubr.bf16.gmra.mrb[0].mxu0 %v867
      %v971 = vpop.f32.mrb[0].mxu0
      %v972 = vadd.f32 0.0, %v971
      %v973 = vpop.f32.mrb[0].mxu0
      %v974 = vpop.f32.mrb[0].mxu0
      %v975 = vadd.f32 0.0, %v974
      %v976 = vpop.f32.mrb[0].mxu0
      %977 = vmatprep.mubr.bf16.mxu0 0
      %978 = vmatmul.mubr.bf16.gmra.mrb[0].mxu0 %v870
      %v979 = vpop.f32.mrb[0].mxu0
      %v980 = vadd.f32 0.0, %v979
      %v981 = vpop.f32.mrb[0].mxu0
      %v982 = vpop.f32.mrb[0].mxu0
      %v983 = vadd.f32 0.0, %v982
      %v984 = vpop.f32.mrb[0].mxu0
      %985 = vmatprep.mubr.bf16.mxu0 0
      %986 = vmatmul.mubr.bf16.gmra.mrb[0].mxu0 %v873
      %v987 = vpop.f32.mrb[0].mxu0
      %v988 = vadd.f32 0.0, %v987
      %v989 = vpop.f32.mrb[0].mxu0
      %v990 = vpop.f32.mrb[0].mxu0
      %v991 = vadd.f32 0.0, %v990
      %v992 = vpop.f32.mrb[0].mxu0
      %993 = vmatprep.mubr.bf16.mxu0 0
      %994 = vmatmul.mubr.bf16.gmra.mrb[0].mxu0 %v876
      %v995 = vpop.f32.mrb[0].mxu0
      %v996 = vadd.f32 0.0, %v995
      %v997 = vpop.f32.mrb[0].mxu0
      %v998 = vpop.f32.mrb[0].mxu0
      %v999 = vadd.f32 0.0, %v998
      %v1000 = vpop.f32.mrb[0].mxu0
      %1001 = vmatprep.mubr.bf16.mxu0 0
      %1002 = vmatmul.mubr.bf16.gmra.mrb[0].mxu0 %v879
      %v1003 = vpop.f32.mrb[0].mxu0
      %v1004 = vadd.f32 0.0, %v1003
      %v1005 = vpop.f32.mrb[0].mxu0
      %v1006 = vpop.f32.mrb[0].mxu0
      %v1007 = vadd.f32 0.0, %v1006
      %v1008 = vpop.f32.mrb[0].mxu0
      %1009 = vmatprep.mubr.bf16.mxu0 0
      %1010 = vmatmul.mubr.bf16.gmra.mrb[0].mxu0 %v882
      %v1011 = vpop.f32.mrb[0].mxu0
      %v1012 = vadd.f32 0.0, %v1011
      %v1013 = vpop.f32.mrb[0].mxu0
      %v1014 = vpop.f32.mrb[0].mxu0
      %v1015 = vadd.f32 0.0, %v1014
      %v1016 = vpop.f32.mrb[0].mxu0
      %1017 = vmatprep.mubr.bf16.mxu0 0
      %1018 = vmatmul.mubr.bf16.gmra.mrb[0].mxu0 %v885
      %v1019 = vpop.f32.mrb[0].mxu0
      %v1020 = vadd.f32 0.0, %v1019
      %v1021 = vpop.f32.mrb[0].mxu0
      %v1022 = vpop.f32.mrb[0].mxu0
      %v1023 = vadd.f32 0.0, %v1022
      %v1024 = vpop.f32.mrb[0].mxu0
      %1025 = vmatprep.mubr.bf16.mxu0 0
      %1026 = vmatmul.mubr.bf16.gmra.mrb[0].mxu0 %v888
      %v1027 = vpop.f32.mrb[0].mxu0
      %v1028 = vadd.f32 0.0, %v1027
      %v1029 = vpop.f32.mrb[0].mxu0
      %v1030 = vpop.f32.mrb[0].mxu0
      %v1031 = vadd.f32 0.0, %v1030
      %v1032 = vpop.f32.mrb[0].mxu0
      %1033 = vmatprep.mubr.bf16.mxu0 0
      %1034 = vmatmul.mubr.bf16.gmra.mrb[0].mxu0 %v891
      %v1035 = vpop.f32.mrb[0].mxu0
      %v1036 = vadd.f32 0.0, %v1035
      %v1037 = vpop.f32.mrb[0].mxu0
      %v1038 = vpop.f32.mrb[0].mxu0
      %v1039 = vadd.f32 0.0, %v1038
      %v1040 = vpop.f32.mrb[0].mxu0
      %1041 = vmatprep.mubr.bf16.mxu0 0
      %1042 = vmatmul.mubr.bf16.gmra.mrb[0].mxu0 %v894
      %v1043 = vpop.f32.mrb[0].mxu0
      %v1044 = vadd.f32 0.0, %v1043
      %v1045 = vpop.f32.mrb[0].mxu0
      %v1046 = vpop.f32.mrb[0].mxu0
      %v1047 = vadd.f32 0.0, %v1046
      %v1048 = vpop.f32.mrb[0].mxu0
      %1049 = vmatprep.mubr.bf16.mxu0 0
      %1050 = vmatmul.mubr.bf16.gmra.mrb[0].mxu0 %v897
      %v1051 = vpop.f32.mrb[0].mxu0
      %v1052 = vadd.f32 0.0, %v1051
      %v1053 = vpop.f32.mrb[0].mxu0
      %v1054 = vpop.f32.mrb[0].mxu0
      %v1055 = vadd.f32 0.0, %v1054
      %v1056 = vpop.f32.mrb[0].mxu0
      %1057 = vmatprep.mubr.bf16.mxu0 0
      %1058 = vmatmul.mubr.bf16.gmra.mrb[0].mxu0 %v900
      %v1059 = vpop.f32.mrb[0].mxu0
      %v1060 = vadd.f32 0.0, %v1059
      %v1061 = vpop.f32.mrb[0].mxu0
      %v1062 = vpop.f32.mrb[0].mxu0
      %v1063 = vadd.f32 0.0, %v1062
      %v1064 = vpop.f32.mrb[0].mxu0
      %1065 = vdwg.mxu0
      %v1066 = vadd.f32 %v608, %v940
      %v1067 = vadd.f32 %v611, %v943
      %v1068 = vadd.f32 %v616, %v948
      %v1069 = vadd.f32 %v619, %v951
      %v1070 = vadd.f32 %v624, %v956
      %v1071 = vadd.f32 %v627, %v959
      %v1072 = vadd.f32 %v632, %v964
      %v1073 = vadd.f32 %v635, %v967
      %v1074 = vadd.f32 %v640, %v972
      %v1075 = vadd.f32 %v643, %v975
      %v1076 = vadd.f32 %v648, %v980
      %v1077 = vadd.f32 %v651, %v983
      %v1078 = vadd.f32 %v656, %v988
      %v1079 = vadd.f32 %v659, %v991
      %v1080 = vadd.f32 %v664, %v996
      %v1081 = vadd.f32 %v667, %v999
      %v1082 = vadd.f32 %v672, %v1004
      %v1083 = vadd.f32 %v675, %v1007
      %v1084 = vadd.f32 %v680, %v1012
      %v1085 = vadd.f32 %v683, %v1015
      %v1086 = vadd.f32 %v688, %v1020
      %v1087 = vadd.f32 %v691, %v1023
      %v1088 = vadd.f32 %v696, %v1028
      %v1089 = vadd.f32 %v699, %v1031
      %v1090 = vadd.f32 %v704, %v1036
      %v1091 = vadd.f32 %v707, %v1039
      %v1092 = vadd.f32 %v712, %v1044
      %v1093 = vadd.f32 %v715, %v1047
      %v1094 = vadd.f32 %v720, %v1052
      %v1095 = vadd.f32 %v723, %v1055
      %v1096 = vadd.f32 %v728, %v1060
      %v1097 = vadd.f32 %v731, %v1063
      %v1098 = vld [vmem:[%s2] sm:$0x1]
      %v1100 = vlaneseq
      %v1101 = vshrl.u32 %v1100, 7
      %v1102 = vsub.s32 0, %v1101
      %v1103 = vrot.slane %v1098, %v1102
      %v1105 = vadd.f32 %v1066, %v1103
      %v1106 = vadd.f32 %v1067, %v1103
      %v1107 = vadd.f32 %v1068, %v1103
      %v1108 = vadd.f32 %v1069, %v1103
      %v1109 = vadd.f32 %v1070, %v1103
      %v1110 = vadd.f32 %v1071, %v1103
      %v1111 = vadd.f32 %v1072, %v1103
      %v1112 = vadd.f32 %v1073, %v1103
      %v1113 = vadd.f32 %v1074, %v1103
      %v1114 = vadd.f32 %v1075, %v1103
      %v1115 = vadd.f32 %v1076, %v1103
      %v1116 = vadd.f32 %v1077, %v1103
      %v1117 = vadd.f32 %v1078, %v1103
      %v1118 = vadd.f32 %v1079, %v1103
      %v1119 = vadd.f32 %v1080, %v1103
      %v1120 = vadd.f32 %v1081, %v1103
      %v1121 = vadd.f32 %v1082, %v1103
      %v1122 = vadd.f32 %v1083, %v1103
      %v1123 = vadd.f32 %v1084, %v1103
      %v1124 = vadd.f32 %v1085, %v1103
      %v1125 = vadd.f32 %v1086, %v1103
      %v1126 = vadd.f32 %v1087, %v1103
      %v1127 = vadd.f32 %v1088, %v1103
      %v1128 = vadd.f32 %v1089, %v1103
      %v1129 = vadd.f32 %v1090, %v1103
      %v1130 = vadd.f32 %v1091, %v1103
      %v1131 = vadd.f32 %v1092, %v1103
      %v1132 = vadd.f32 %v1093, %v1103
      %v1133 = vadd.f32 %v1094, %v1103
      %v1134 = vadd.f32 %v1095, %v1103
      %v1135 = vadd.f32 %v1096, %v1103
      %v1136 = vadd.f32 %v1097, %v1103
      %v1137 = vand.u32 2147483647, %v1105
      %v1138 = vand.u32 2147483647, %v1106
      %v1139 = vand.u32 2147483647, %v1107
      %v1140 = vand.u32 2147483647, %v1108
      %v1141 = vand.u32 2147483647, %v1109
      %v1142 = vand.u32 2147483647, %v1110
      %v1143 = vand.u32 2147483647, %v1111
      %v1144 = vand.u32 2147483647, %v1112
      %v1145 = vand.u32 2147483647, %v1113
      %v1146 = vand.u32 2147483647, %v1114
      %v1147 = vand.u32 2147483647, %v1115
      %v1148 = vand.u32 2147483647, %v1116
      %v1149 = vand.u32 2147483647, %v1117
      %v1150 = vand.u32 2147483647, %v1118
      %v1151 = vand.u32 2147483647, %v1119
      %v1152 = vand.u32 2147483647, %v1120
      %v1153 = vand.u32 2147483647, %v1121
      %v1154 = vand.u32 2147483647, %v1122
      %v1155 = vand.u32 2147483647, %v1123
      %v1156 = vand.u32 2147483647, %v1124
      %v1157 = vand.u32 2147483647, %v1125
      %v1158 = vand.u32 2147483647, %v1126
      %v1159 = vand.u32 2147483647, %v1127
      %v1160 = vand.u32 2147483647, %v1128
      %v1161 = vand.u32 2147483647, %v1129
      %v1162 = vand.u32 2147483647, %v1130
      %v1163 = vand.u32 2147483647, %v1131
      %v1164 = vand.u32 2147483647, %v1132
      %v1165 = vand.u32 2147483647, %v1133
      %v1166 = vand.u32 2147483647, %v1134
      %v1167 = vand.u32 2147483647, %v1135
      %v1168 = vand.u32 2147483647, %v1136
      %v1169 = vsub.f32 0.0, %v1137
      %v1170 = vsub.f32 0.0, %v1138
      %v1171 = vsub.f32 0.0, %v1139
      %v1172 = vsub.f32 0.0, %v1140
      %v1173 = vsub.f32 0.0, %v1141
      %v1174 = vsub.f32 0.0, %v1142
      %v1175 = vsub.f32 0.0, %v1143
      %v1176 = vsub.f32 0.0, %v1144
      %v1177 = vsub.f32 0.0, %v1145
      %v1178 = vsub.f32 0.0, %v1146
      %v1179 = vsub.f32 0.0, %v1147
      %v1180 = vsub.f32 0.0, %v1148
      %v1181 = vsub.f32 0.0, %v1149
      %v1182 = vsub.f32 0.0, %v1150
      %v1183 = vsub.f32 0.0, %v1151
      %v1184 = vsub.f32 0.0, %v1152
      %v1185 = vsub.f32 0.0, %v1153
      %v1186 = vsub.f32 0.0, %v1154
      %v1187 = vsub.f32 0.0, %v1155
      %v1188 = vsub.f32 0.0, %v1156
      %v1189 = vsub.f32 0.0, %v1157
      %v1190 = vsub.f32 0.0, %v1158
      %v1191 = vsub.f32 0.0, %v1159
      %v1192 = vsub.f32 0.0, %v1160
      %v1193 = vsub.f32 0.0, %v1161
      %v1194 = vsub.f32 0.0, %v1162
      %v1195 = vsub.f32 0.0, %v1163
      %v1196 = vsub.f32 0.0, %v1164
      %v1197 = vsub.f32 0.0, %v1165
      %v1198 = vsub.f32 0.0, %v1166
      %v1199 = vsub.f32 0.0, %v1167
      %v1200 = vsub.f32 0.0, %v1168
      %v1201 = vmul.f32 %v1169, 1.442695
      %v1202 = vpow.pop %v1201
      %v1203 = vmul.f32 %v1170, 1.442695
      %v1204 = vpow.pop %v1203
      %v1205 = vmul.f32 %v1171, 1.442695
      %v1206 = vpow.pop %v1205
      %v1207 = vmul.f32 %v1172, 1.442695
      %v1208 = vpow.pop %v1207
      %v1209 = vmul.f32 %v1173, 1.442695
      %v1210 = vpow.pop %v1209
      %v1211 = vmul.f32 %v1174, 1.442695
      %v1212 = vpow.pop %v1211
      %v1213 = vmul.f32 %v1175, 1.442695
      %v1214 = vpow.pop %v1213
      %v1215 = vmul.f32 %v1176, 1.442695
      %v1216 = vpow.pop %v1215
      %v1217 = vmul.f32 %v1177, 1.442695
      %v1218 = vpow.pop %v1217
      %v1219 = vmul.f32 %v1178, 1.442695
      %v1220 = vpow.pop %v1219
      %v1221 = vmul.f32 %v1179, 1.442695
      %v1222 = vpow.pop %v1221
      %v1223 = vmul.f32 %v1180, 1.442695
      %v1224 = vpow.pop %v1223
      %v1225 = vmul.f32 %v1181, 1.442695
      %v1226 = vpow.pop %v1225
      %v1227 = vmul.f32 %v1182, 1.442695
      %v1228 = vpow.pop %v1227
      %v1229 = vmul.f32 %v1183, 1.442695
      %v1230 = vpow.pop %v1229
      %v1231 = vmul.f32 %v1184, 1.442695
      %v1232 = vpow.pop %v1231
      %v1233 = vmul.f32 %v1185, 1.442695
      %v1234 = vpow.pop %v1233
      %v1235 = vmul.f32 %v1186, 1.442695
      %v1236 = vpow.pop %v1235
      %v1237 = vmul.f32 %v1187, 1.442695
      %v1238 = vpow.pop %v1237
      %v1239 = vmul.f32 %v1188, 1.442695
      %v1240 = vpow.pop %v1239
      %v1241 = vmul.f32 %v1189, 1.442695
      %v1242 = vpow.pop %v1241
      %v1243 = vmul.f32 %v1190, 1.442695
      %v1244 = vpow.pop %v1243
      %v1245 = vmul.f32 %v1191, 1.442695
      %v1246 = vpow.pop %v1245
      %v1247 = vmul.f32 %v1192, 1.442695
      %v1248 = vpow.pop %v1247
      %v1249 = vmul.f32 %v1193, 1.442695
      %v1250 = vpow.pop %v1249
      %v1251 = vmul.f32 %v1194, 1.442695
      %v1252 = vpow.pop %v1251
      %v1253 = vmul.f32 %v1195, 1.442695
      %v1254 = vpow.pop %v1253
      %v1255 = vmul.f32 %v1196, 1.442695
      %v1256 = vpow.pop %v1255
      %v1257 = vmul.f32 %v1197, 1.442695
      %v1258 = vpow.pop %v1257
      %v1259 = vmul.f32 %v1198, 1.442695
      %v1260 = vpow.pop %v1259
      %v1261 = vmul.f32 %v1199, 1.442695
      %v1262 = vpow.pop %v1261
      %v1263 = vmul.f32 %v1200, 1.442695
      %v1264 = vpow.pop %v1263
      %v1265 = vadd.f32 %v1202, 1.0
      %v1266 = vadd.f32 %v1204, 1.0
      %v1267 = vadd.f32 %v1206, 1.0
      %v1268 = vadd.f32 %v1208, 1.0
      %v1269 = vadd.f32 %v1210, 1.0
      %v1270 = vadd.f32 %v1212, 1.0
      %v1271 = vadd.f32 %v1214, 1.0
      %v1272 = vadd.f32 %v1216, 1.0
      %v1273 = vadd.f32 %v1218, 1.0
      %v1274 = vadd.f32 %v1220, 1.0
      %v1275 = vadd.f32 %v1222, 1.0
      %v1276 = vadd.f32 %v1224, 1.0
      %v1277 = vadd.f32 %v1226, 1.0
      %v1278 = vadd.f32 %v1228, 1.0
      %v1279 = vadd.f32 %v1230, 1.0
      %v1280 = vadd.f32 %v1232, 1.0
      %v1281 = vadd.f32 %v1234, 1.0
      %v1282 = vadd.f32 %v1236, 1.0
      %v1283 = vadd.f32 %v1238, 1.0
      %v1284 = vadd.f32 %v1240, 1.0
      %v1285 = vadd.f32 %v1242, 1.0
      %v1286 = vadd.f32 %v1244, 1.0
      %v1287 = vadd.f32 %v1246, 1.0
      %v1288 = vadd.f32 %v1248, 1.0
      %v1289 = vadd.f32 %v1250, 1.0
      %v1290 = vadd.f32 %v1252, 1.0
      %v1291 = vadd.f32 %v1254, 1.0
      %v1292 = vadd.f32 %v1256, 1.0
      %v1293 = vadd.f32 %v1258, 1.0
      %v1294 = vadd.f32 %v1260, 1.0
      %v1295 = vadd.f32 %v1262, 1.0
      %v1296 = vadd.f32 %v1264, 1.0
      %v1297 = vrcp.pop %v1265
      %v1298 = vrcp.pop %v1266
      %v1299 = vrcp.pop %v1267
      %v1300 = vrcp.pop %v1268
      %v1301 = vrcp.pop %v1269
      %v1302 = vrcp.pop %v1270
      %v1303 = vrcp.pop %v1271
      %v1304 = vrcp.pop %v1272
      %v1305 = vrcp.pop %v1273
      %v1306 = vrcp.pop %v1274
      %v1307 = vrcp.pop %v1275
      %v1308 = vrcp.pop %v1276
      %v1309 = vrcp.pop %v1277
      %v1310 = vrcp.pop %v1278
      %v1311 = vrcp.pop %v1279
      %v1312 = vrcp.pop %v1280
      %v1313 = vrcp.pop %v1281
      %v1314 = vrcp.pop %v1282
      %v1315 = vrcp.pop %v1283
      %v1316 = vrcp.pop %v1284
      %v1317 = vrcp.pop %v1285
      %v1318 = vrcp.pop %v1286
      %v1319 = vrcp.pop %v1287
      %v1320 = vrcp.pop %v1288
      %v1321 = vrcp.pop %v1289
      %v1322 = vrcp.pop %v1290
      %v1323 = vrcp.pop %v1291
      %v1324 = vrcp.pop %v1292
      %v1325 = vrcp.pop %v1293
      %v1326 = vrcp.pop %v1294
      %v1327 = vrcp.pop %v1295
      %v1328 = vrcp.pop %v1296
      %vm1329 = vcmp.ge.f32.partialorder %v1105, 0.0
      %vm1330 = vcmp.ge.f32.partialorder %v1106, 0.0
      %vm1331 = vcmp.ge.f32.partialorder %v1107, 0.0
      %vm1332 = vcmp.ge.f32.partialorder %v1108, 0.0
      %vm1333 = vcmp.ge.f32.partialorder %v1109, 0.0
      %vm1334 = vcmp.ge.f32.partialorder %v1110, 0.0
      %vm1335 = vcmp.ge.f32.partialorder %v1111, 0.0
      %vm1336 = vcmp.ge.f32.partialorder %v1112, 0.0
      %vm1337 = vcmp.ge.f32.partialorder %v1113, 0.0
      %vm1338 = vcmp.ge.f32.partialorder %v1114, 0.0
      %vm1339 = vcmp.ge.f32.partialorder %v1115, 0.0
      %vm1340 = vcmp.ge.f32.partialorder %v1116, 0.0
      %vm1341 = vcmp.ge.f32.partialorder %v1117, 0.0
      %vm1342 = vcmp.ge.f32.partialorder %v1118, 0.0
      %vm1343 = vcmp.ge.f32.partialorder %v1119, 0.0
      %vm1344 = vcmp.ge.f32.partialorder %v1120, 0.0
      %vm1345 = vcmp.ge.f32.partialorder %v1121, 0.0
      %vm1346 = vcmp.ge.f32.partialorder %v1122, 0.0
      %vm1347 = vcmp.ge.f32.partialorder %v1123, 0.0
      %vm1348 = vcmp.ge.f32.partialorder %v1124, 0.0
      %vm1349 = vcmp.ge.f32.partialorder %v1125, 0.0
      %vm1350 = vcmp.ge.f32.partialorder %v1126, 0.0
      %vm1351 = vcmp.ge.f32.partialorder %v1127, 0.0
      %vm1352 = vcmp.ge.f32.partialorder %v1128, 0.0
      %vm1353 = vcmp.ge.f32.partialorder %v1129, 0.0
      %vm1354 = vcmp.ge.f32.partialorder %v1130, 0.0
      %vm1355 = vcmp.ge.f32.partialorder %v1131, 0.0
      %vm1356 = vcmp.ge.f32.partialorder %v1132, 0.0
      %vm1357 = vcmp.ge.f32.partialorder %v1133, 0.0
      %vm1358 = vcmp.ge.f32.partialorder %v1134, 0.0
      %vm1359 = vcmp.ge.f32.partialorder %v1135, 0.0
      %vm1360 = vcmp.ge.f32.partialorder %v1136, 0.0
      %v1361 = vmul.f32 %v1202, %v1297
      %v1362 = vmul.f32 %v1204, %v1298
      %v1363 = vmul.f32 %v1206, %v1299
      %v1364 = vmul.f32 %v1208, %v1300
      %v1365 = vmul.f32 %v1210, %v1301
      %v1366 = vmul.f32 %v1212, %v1302
      %v1367 = vmul.f32 %v1214, %v1303
      %v1368 = vmul.f32 %v1216, %v1304
      %v1369 = vmul.f32 %v1218, %v1305
      %v1370 = vmul.f32 %v1220, %v1306
      %v1371 = vmul.f32 %v1222, %v1307
      %v1372 = vmul.f32 %v1224, %v1308
      %v1373 = vmul.f32 %v1226, %v1309
      %v1374 = vmul.f32 %v1228, %v1310
      %v1375 = vmul.f32 %v1230, %v1311
      %v1376 = vmul.f32 %v1232, %v1312
      %v1377 = vmul.f32 %v1234, %v1313
      %v1378 = vmul.f32 %v1236, %v1314
      %v1379 = vmul.f32 %v1238, %v1315
      %v1380 = vmul.f32 %v1240, %v1316
      %v1381 = vmul.f32 %v1242, %v1317
      %v1382 = vmul.f32 %v1244, %v1318
      %v1383 = vmul.f32 %v1246, %v1319
      %v1384 = vmul.f32 %v1248, %v1320
      %v1385 = vmul.f32 %v1250, %v1321
      %v1386 = vmul.f32 %v1252, %v1322
      %v1387 = vmul.f32 %v1254, %v1323
      %v1388 = vmul.f32 %v1256, %v1324
      %v1389 = vmul.f32 %v1258, %v1325
      %v1390 = vmul.f32 %v1260, %v1326
      %v1391 = vmul.f32 %v1262, %v1327
      %v1392 = vmul.f32 %v1264, %v1328
      %v1393 = vsel %vm1329, %v1297, %v1361
      %v1394 = vsel %vm1330, %v1298, %v1362
      %v1395 = vsel %vm1331, %v1299, %v1363
      %v1396 = vsel %vm1332, %v1300, %v1364
      %v1397 = vsel %vm1333, %v1301, %v1365
      %v1398 = vsel %vm1334, %v1302, %v1366
      %v1399 = vsel %vm1335, %v1303, %v1367
      %v1400 = vsel %vm1336, %v1304, %v1368
      %v1401 = vsel %vm1337, %v1305, %v1369
      %v1402 = vsel %vm1338, %v1306, %v1370
      %v1403 = vsel %vm1339, %v1307, %v1371
      %v1404 = vsel %vm1340, %v1308, %v1372
      %v1405 = vsel %vm1341, %v1309, %v1373
      %v1406 = vsel %vm1342, %v1310, %v1374
      %v1407 = vsel %vm1343, %v1311, %v1375
      %v1408 = vsel %vm1344, %v1312, %v1376
      %v1409 = vsel %vm1345, %v1313, %v1377
      %v1410 = vsel %vm1346, %v1314, %v1378
      %v1411 = vsel %vm1347, %v1315, %v1379
      %v1412 = vsel %vm1348, %v1316, %v1380
      %v1413 = vsel %vm1349, %v1317, %v1381
      %v1414 = vsel %vm1350, %v1318, %v1382
      %v1415 = vsel %vm1351, %v1319, %v1383
      %v1416 = vsel %vm1352, %v1320, %v1384
      %v1417 = vsel %vm1353, %v1321, %v1385
      %v1418 = vsel %vm1354, %v1322, %v1386
      %v1419 = vsel %vm1355, %v1323, %v1387
      %v1420 = vsel %vm1356, %v1324, %v1388
      %v1421 = vsel %vm1357, %v1325, %v1389
      %v1422 = vsel %vm1358, %v1326, %v1390
      %v1423 = vsel %vm1359, %v1327, %v1391
      %v1424 = vsel %vm1360, %v1328, %v1392
      %v1425 = vmul.f32 %v1105, %v1393
      %v1426 = vmul.f32 %v1106, %v1394
      %v1427 = vmul.f32 %v1107, %v1395
      %v1428 = vmul.f32 %v1108, %v1396
      %v1429 = vmul.f32 %v1109, %v1397
      %v1430 = vmul.f32 %v1110, %v1398
      %v1431 = vmul.f32 %v1111, %v1399
      %v1432 = vmul.f32 %v1112, %v1400
      %v1433 = vmul.f32 %v1113, %v1401
      %v1434 = vmul.f32 %v1114, %v1402
      %v1435 = vmul.f32 %v1115, %v1403
      %v1436 = vmul.f32 %v1116, %v1404
      %v1437 = vmul.f32 %v1117, %v1405
      %v1438 = vmul.f32 %v1118, %v1406
      %v1439 = vmul.f32 %v1119, %v1407
      %v1440 = vmul.f32 %v1120, %v1408
      %v1441 = vmul.f32 %v1121, %v1409
      %v1442 = vmul.f32 %v1122, %v1410
      %v1443 = vmul.f32 %v1123, %v1411
      %v1444 = vmul.f32 %v1124, %v1412
      %v1445 = vmul.f32 %v1125, %v1413
      %v1446 = vmul.f32 %v1126, %v1414
      %v1447 = vmul.f32 %v1127, %v1415
      %v1448 = vmul.f32 %v1128, %v1416
      %v1449 = vmul.f32 %v1129, %v1417
      %v1450 = vmul.f32 %v1130, %v1418
      %v1451 = vmul.f32 %v1131, %v1419
      %v1452 = vmul.f32 %v1132, %v1420
      %v1453 = vmul.f32 %v1133, %v1421
      %v1454 = vmul.f32 %v1134, %v1422
      %v1455 = vmul.f32 %v1135, %v1423
      %v1456 = vmul.f32 %v1136, %v1424
      %v1457 = vld [vmem:[%s212] sm:$0xf]
      %v1458 = vld [vmem:[%s212 + $0x4] sm:$0xf]
      %v1459 = vld [vmem:[%s212 + $0x8] sm:$0xf]
      %v1460 = vld [vmem:[%s212 + $0xc] sm:$0xf]
      %v1461 = vld [vmem:[%s212 + $0x10] sm:$0xf]
      %v1462 = vld [vmem:[%s212 + $0x14] sm:$0xf]
      %v1463 = vld [vmem:[%s212 + $0x18] sm:$0xf]
      %v1464 = vld [vmem:[%s212 + $0x1c] sm:$0xf]
      %v1465 = vld [vmem:[%s212 + $0x20] sm:$0xf]
      %v1466 = vld [vmem:[%s212 + $0x24] sm:$0xf]
      %v1467 = vld [vmem:[%s212 + $0x28] sm:$0xf]
      %v1468 = vld [vmem:[%s212 + $0x2c] sm:$0xf]
      %v1469 = vld [vmem:[%s212 + $0x30] sm:$0xf]
      %v1470 = vld [vmem:[%s212 + $0x34] sm:$0xf]
      %v1471 = vld [vmem:[%s212 + $0x38] sm:$0xf]
      %v1472 = vld [vmem:[%s212 + $0x3c] sm:$0xf]
      %v1473 = vld [vmem:[%s212 + $0x40] sm:$0xf]
      %v1474 = vld [vmem:[%s212 + $0x44] sm:$0xf]
      %v1475 = vld [vmem:[%s212 + $0x48] sm:$0xf]
      %v1476 = vld [vmem:[%s212 + $0x4c] sm:$0xf]
      %v1477 = vld [vmem:[%s212 + $0x50] sm:$0xf]
      %v1478 = vld [vmem:[%s212 + $0x54] sm:$0xf]
      %v1479 = vld [vmem:[%s212 + $0x58] sm:$0xf]
      %v1480 = vld [vmem:[%s212 + $0x5c] sm:$0xf]
      %v1481 = vld [vmem:[%s212 + $0x60] sm:$0xf]
      %v1482 = vld [vmem:[%s212 + $0x64] sm:$0xf]
      %v1483 = vld [vmem:[%s212 + $0x68] sm:$0xf]
      %v1484 = vld [vmem:[%s212 + $0x6c] sm:$0xf]
      %v1485 = vld [vmem:[%s212 + $0x70] sm:$0xf]
      %v1486 = vld [vmem:[%s212 + $0x74] sm:$0xf]
      %v1487 = vld [vmem:[%s212 + $0x78] sm:$0xf]
      %v1488 = vld [vmem:[%s212 + $0x7c] sm:$0xf]
      %v1489 = vunpack.c.l.bf16 %v1457
      %v1490 = vunpack.c.l.bf16 %v1458
      %v1491 = vunpack.c.l.bf16 %v1459
      %v1492 = vunpack.c.l.bf16 %v1460
      %v1493 = vunpack.c.l.bf16 %v1461
      %v1494 = vunpack.c.l.bf16 %v1462
      %v1495 = vunpack.c.l.bf16 %v1463
      %v1496 = vunpack.c.l.bf16 %v1464
      %v1497 = vunpack.c.l.bf16 %v1465
      %v1498 = vunpack.c.l.bf16 %v1466
      %v1499 = vunpack.c.l.bf16 %v1467
      %v1500 = vunpack.c.l.bf16 %v1468
      %v1501 = vunpack.c.l.bf16 %v1469
      %v1502 = vunpack.c.l.bf16 %v1470
      %v1503 = vunpack.c.l.bf16 %v1471
      %v1504 = vunpack.c.l.bf16 %v1472
      %v1505 = vunpack.c.l.bf16 %v1473
      %v1506 = vunpack.c.l.bf16 %v1474
      %v1507 = vunpack.c.l.bf16 %v1475
      %v1508 = vunpack.c.l.bf16 %v1476
      %v1509 = vunpack.c.l.bf16 %v1477
      %v1510 = vunpack.c.l.bf16 %v1478
      %v1511 = vunpack.c.l.bf16 %v1479
      %v1512 = vunpack.c.l.bf16 %v1480
      %v1513 = vunpack.c.l.bf16 %v1481
      %v1514 = vunpack.c.l.bf16 %v1482
      %v1515 = vunpack.c.l.bf16 %v1483
      %v1516 = vunpack.c.l.bf16 %v1484
      %v1517 = vunpack.c.l.bf16 %v1485
      %v1518 = vunpack.c.l.bf16 %v1486
      %v1519 = vunpack.c.l.bf16 %v1487
      %v1520 = vunpack.c.l.bf16 %v1488
      %v1521 = vadd.f32 %v1425, %v1489
      %v1522 = vadd.f32 %v1426, %v1490
      %v1523 = vadd.f32 %v1427, %v1491
      %v1524 = vadd.f32 %v1428, %v1492
      %v1525 = vadd.f32 %v1429, %v1493
      %v1526 = vadd.f32 %v1430, %v1494
      %v1527 = vadd.f32 %v1431, %v1495
      %v1528 = vadd.f32 %v1432, %v1496
      %v1529 = vadd.f32 %v1433, %v1497
      %v1530 = vadd.f32 %v1434, %v1498
      %v1531 = vadd.f32 %v1435, %v1499
      %v1532 = vadd.f32 %v1436, %v1500
      %v1533 = vadd.f32 %v1437, %v1501
      %v1534 = vadd.f32 %v1438, %v1502
      %v1535 = vadd.f32 %v1439, %v1503
      %v1536 = vadd.f32 %v1440, %v1504
      %v1537 = vadd.f32 %v1441, %v1505
      %v1538 = vadd.f32 %v1442, %v1506
      %v1539 = vadd.f32 %v1443, %v1507
      %v1540 = vadd.f32 %v1444, %v1508
      %v1541 = vadd.f32 %v1445, %v1509
      %v1542 = vadd.f32 %v1446, %v1510
      %v1543 = vadd.f32 %v1447, %v1511
      %v1544 = vadd.f32 %v1448, %v1512
      %v1545 = vadd.f32 %v1449, %v1513
      %v1546 = vadd.f32 %v1450, %v1514
      %v1547 = vadd.f32 %v1451, %v1515
      %v1548 = vadd.f32 %v1452, %v1516
      %v1549 = vadd.f32 %v1453, %v1517
      %v1550 = vadd.f32 %v1454, %v1518
      %v1551 = vadd.f32 %v1455, %v1519
      %v1552 = vadd.f32 %v1456, %v1520
      %v1553 = vpack.c.bf16 %v1522, %v1521
      %v1554 = vpack.c.bf16 %v1524, %v1523
      %v1555 = vpack.c.bf16 %v1526, %v1525
      %v1556 = vpack.c.bf16 %v1528, %v1527
      %v1557 = vpack.c.bf16 %v1530, %v1529
      %v1558 = vpack.c.bf16 %v1532, %v1531
      %v1559 = vpack.c.bf16 %v1534, %v1533
      %v1560 = vpack.c.bf16 %v1536, %v1535
      %v1561 = vpack.c.bf16 %v1538, %v1537
      %v1562 = vpack.c.bf16 %v1540, %v1539
      %v1563 = vpack.c.bf16 %v1542, %v1541
      %v1564 = vpack.c.bf16 %v1544, %v1543
      %v1565 = vpack.c.bf16 %v1546, %v1545
      %v1566 = vpack.c.bf16 %v1548, %v1547
      %v1567 = vpack.c.bf16 %v1550, %v1549
      %v1568 = vpack.c.bf16 %v1552, %v1551
      %v1585 = vunpack.c.l.b16 %v1553
      %v1586 = vunpack.c.h.b16 %v1553
      %v1587 = vunpack.c.l.b16 %v1554
      %v1588 = vunpack.c.h.b16 %v1554
      %v1589 = vunpack.c.l.b16 %v1555
      %v1590 = vunpack.c.h.b16 %v1555
      %v1591 = vunpack.c.l.b16 %v1556
      %v1592 = vunpack.c.h.b16 %v1556
      %v1593 = vunpack.c.l.b16 %v1557
      %v1594 = vunpack.c.h.b16 %v1557
      %v1595 = vunpack.c.l.b16 %v1558
      %v1596 = vunpack.c.h.b16 %v1558
      %v1597 = vunpack.c.l.b16 %v1559
      %v1598 = vunpack.c.h.b16 %v1559
      %v1599 = vunpack.c.l.b16 %v1560
      %v1600 = vunpack.c.h.b16 %v1560
      %v1601 = vunpack.c.l.b16 %v1561
      %v1602 = vunpack.c.h.b16 %v1561
      %v1603 = vunpack.c.l.b16 %v1562
      %v1604 = vunpack.c.h.b16 %v1562
      %v1605 = vunpack.c.l.b16 %v1563
      %v1606 = vunpack.c.h.b16 %v1563
      %v1607 = vunpack.c.l.b16 %v1564
      %v1608 = vunpack.c.h.b16 %v1564
      %v1609 = vunpack.c.l.b16 %v1565
      %v1610 = vunpack.c.h.b16 %v1565
      %v1611 = vunpack.c.l.b16 %v1566
      %v1612 = vunpack.c.h.b16 %v1566
      %v1613 = vunpack.c.l.b16 %v1567
      %v1614 = vunpack.c.h.b16 %v1567
      %v1615 = vunpack.c.l.b16 %v1568
      %v1616 = vunpack.c.h.b16 %v1568
      %v1617 = vpack.c.b16 %v1585, %v1585
      %v1618 = vpack.c.b16 %v1586, %v1586
      %v1619 = vpack.c.b16 %v1587, %v1587
      %v1620 = vpack.c.b16 %v1588, %v1588
      %v1621 = vpack.c.b16 %v1589, %v1589
      %v1622 = vpack.c.b16 %v1590, %v1590
      %v1623 = vpack.c.b16 %v1591, %v1591
      %v1624 = vpack.c.b16 %v1592, %v1592
      %v1625 = vpack.c.b16 %v1593, %v1593
      %v1626 = vpack.c.b16 %v1594, %v1594
      %v1627 = vpack.c.b16 %v1595, %v1595
      %v1628 = vpack.c.b16 %v1596, %v1596
      %v1629 = vpack.c.b16 %v1597, %v1597
      %v1630 = vpack.c.b16 %v1598, %v1598
      %v1631 = vpack.c.b16 %v1599, %v1599
      %v1632 = vpack.c.b16 %v1600, %v1600
      %v1633 = vpack.c.b16 %v1601, %v1601
      %v1634 = vpack.c.b16 %v1602, %v1602
      %v1635 = vpack.c.b16 %v1603, %v1603
      %v1636 = vpack.c.b16 %v1604, %v1604
      %v1637 = vpack.c.b16 %v1605, %v1605
      %v1638 = vpack.c.b16 %v1606, %v1606
      %v1639 = vpack.c.b16 %v1607, %v1607
      %v1640 = vpack.c.b16 %v1608, %v1608
      %v1641 = vpack.c.b16 %v1609, %v1609
      %v1642 = vpack.c.b16 %v1610, %v1610
      %v1643 = vpack.c.b16 %v1611, %v1611
      %v1644 = vpack.c.b16 %v1612, %v1612
      %v1645 = vpack.c.b16 %v1613, %v1613
      %v1646 = vpack.c.b16 %v1614, %v1614
      %v1647 = vpack.c.b16 %v1615, %v1615
      %v1648 = vpack.c.b16 %v1616, %v1616
      %vm1681 = vcmask 27648
      %1682 = vst.msk [vmem:[%s217] sm:$0xf] %vm1681, %v1617
      %1683 = vst.msk [vmem:[%s217 + $0x4] sm:$0xf] %vm1681, %v1618
      %1684 = vst.msk [vmem:[%s217 + $0x8] sm:$0xf] %vm1681, %v1619
      %1685 = vst.msk [vmem:[%s217 + $0xc] sm:$0xf] %vm1681, %v1620
      %1686 = vst.msk [vmem:[%s217 + $0x10] sm:$0xf] %vm1681, %v1621
      %1687 = vst.msk [vmem:[%s217 + $0x14] sm:$0xf] %vm1681, %v1622
      %1688 = vst.msk [vmem:[%s217 + $0x18] sm:$0xf] %vm1681, %v1623
      %1689 = vst.msk [vmem:[%s217 + $0x1c] sm:$0xf] %vm1681, %v1624
      %1690 = vst.msk [vmem:[%s217 + $0x20] sm:$0xf] %vm1681, %v1625
      %1691 = vst.msk [vmem:[%s217 + $0x24] sm:$0xf] %vm1681, %v1626
      %1692 = vst.msk [vmem:[%s217 + $0x28] sm:$0xf] %vm1681, %v1627
      %1693 = vst.msk [vmem:[%s217 + $0x2c] sm:$0xf] %vm1681, %v1628
      %1694 = vst.msk [vmem:[%s217 + $0x30] sm:$0xf] %vm1681, %v1629
      %1695 = vst.msk [vmem:[%s217 + $0x34] sm:$0xf] %vm1681, %v1630
      %1696 = vst.msk [vmem:[%s217 + $0x38] sm:$0xf] %vm1681, %v1631
      %1697 = vst.msk [vmem:[%s217 + $0x3c] sm:$0xf] %vm1681, %v1632
      %1698 = vst.msk [vmem:[%s217 + $0x40] sm:$0xf] %vm1681, %v1633
      %1699 = vst.msk [vmem:[%s217 + $0x44] sm:$0xf] %vm1681, %v1634
      %1700 = vst.msk [vmem:[%s217 + $0x48] sm:$0xf] %vm1681, %v1635
      %1701 = vst.msk [vmem:[%s217 + $0x4c] sm:$0xf] %vm1681, %v1636
      %1702 = vst.msk [vmem:[%s217 + $0x50] sm:$0xf] %vm1681, %v1637
      %1703 = vst.msk [vmem:[%s217 + $0x54] sm:$0xf] %vm1681, %v1638
      %1704 = vst.msk [vmem:[%s217 + $0x58] sm:$0xf] %vm1681, %v1639
      %1705 = vst.msk [vmem:[%s217 + $0x5c] sm:$0xf] %vm1681, %v1640
      %1706 = vst.msk [vmem:[%s217 + $0x60] sm:$0xf] %vm1681, %v1641
      %1707 = vst.msk [vmem:[%s217 + $0x64] sm:$0xf] %vm1681, %v1642
      %1708 = vst.msk [vmem:[%s217 + $0x68] sm:$0xf] %vm1681, %v1643
      %1709 = vst.msk [vmem:[%s217 + $0x6c] sm:$0xf] %vm1681, %v1644
      %1710 = vst.msk [vmem:[%s217 + $0x70] sm:$0xf] %vm1681, %v1645
      %1711 = vst.msk [vmem:[%s217 + $0x74] sm:$0xf] %vm1681, %v1646
      %1712 = vst.msk [vmem:[%s217 + $0x78] sm:$0xf] %vm1681, %v1647
      %1713 = vst.msk [vmem:[%s217 + $0x7c] sm:$0xf] %vm1681, %v1648
      %p1714 = scmp.lt.s32.totalorder %s15, 1
      %s1715 = scalar_select %p1714, %s15, 1
      %s1716 = smul.addr %s1715, 32
      %s1717 = smul.addr %s1716, 4
      %s1718 = scalar_lea.vmem %s4, %s1717
      // Predicated region
      $region37: #{csp_layer_forward.6} parent=35 // pred_check
        %p1719 = pneg %p127
      $region38: #{csp_layer_forward.6} parent=35 // pred_check_branch
        %1721 = sbr.rel (%p1719) target = $region40
      $region39: #{csp_layer_forward.6} parent=35 // pred_region
        _
      $region40: #{csp_layer_forward.6} parent=35 // pred_fallthru
        _
    $region36: #{csp_layer_forward.6} parent=5 // pred_fallthru
      _
    %p1722 = scmp.le.s32.totalorder 2, %s10
    // Predicated region
    $region41: #{csp_layer_forward.6} parent=5 // pred_check
      %p1723 = pneg %p1722
    $region42: #{csp_layer_forward.6} parent=5 // pred_check_branch
      %1725 = sbr.rel (%p1723) target = $region44
    $region43: #{csp_layer_forward.6} parent=5 // pred_region
      %s1726 = ssub.s32 %s10, 2
      // Predicated region
      $region45: #{csp_layer_forward.6} parent=43 // pred_check
        %p1727 = pneg %p133
      $region46: #{csp_layer_forward.6} parent=43 // pred_check_branch
        %1729 = sbr.rel (%p1727) target = $region48
      $region47: #{csp_layer_forward.6} parent=43 // pred_region
        %p1730 = scmp.lt.s32.totalorder %s16, 1
        %s1731 = scalar_select %p1730, %s16, 1
        %s1732 = smul.addr %s1731, 32
        %s1733 = smul.addr %s1732, 4
        %s1734 = scalar_lea.vmem %s4, %s1733
      $region48: #{csp_layer_forward.6} parent=43 // pred_fallthru
        _
    $region44: #{csp_layer_forward.6} parent=5 // pred_fallthru
      _
  $region6: #{csp_layer_forward.6} parent=0 // loop_footer
    %s14 = sadd.s32 1, %s10
  $region7: #{csp_layer_forward.6} parent=0 // loop_footer_branch
    %9 = sbr.rel target = $region3
  $region8: #{csp_layer_forward.6} parent=0 // loop_exit
    _

</llo_original>
